<compile_context>
chip_gen: v7x
topology: tpu7x:2x2x1
jax: 0.10.0
libtpu: 0.0.40
codegen_flags: <defaults>
</compile_context>

<pallas_src>
import functools
import math

import jax
import jax.numpy as jnp
from jax.experimental import pallas as pl
from jax.experimental.pallas import tpu as pltpu

EPS = 1e-6
NUM_HEADS = 8
NEG_INF = -1e9


def _layernorm(z, gamma, beta, d):
    """MCAN LayerNorm: gamma * (z - mean) / (unbiased_std + eps) + beta."""
    mean = jnp.mean(z, axis=-1, keepdims=True)
    var = jnp.sum((z - mean) ** 2, axis=-1, keepdims=True) / (d - 1)
    inv = 1.0 / (jnp.sqrt(var) + EPS)            # exact reciprocal (per review)
    return gamma * (z - mean) * inv + beta


def _sa_kernel(xq_ref, xkv_ref, mask_ref,
               wq_ref, bq_ref, wkv_ref, bkv_ref, wm_ref, bm_ref,
               g1_ref, be1_ref, wf1_ref, bf1_ref, wf2_ref, bf2_ref,
               g2_ref, be2_ref,
               o_ref, *, num_heads):
    TB, Tq, D = xq_ref.shape
    S = xkv_ref.shape[0] // TB
    H = num_heads
    dh = D // H

    # ---- load blocks: flattened row slabs for the dense matmuls -------------
    if TB > 1:
        xq = jnp.concatenate([xq_ref[b] for b in range(TB)], axis=0)   # (TB*Tq, D)
    else:
        xq = xq_ref[0]                                                  # (Tq, D)
    xkv = xkv_ref[...]                                                  # (TB*S, D)

    xqb = xq.astype(jnp.bfloat16)
    xkvb = xkv.astype(jnp.bfloat16)

    # ---- dense projections on the slabs (MXU, f32 accumulation) -------------
    # 1/sqrt(dh) is pre-folded into wq / bq in the wrapper (scale Q, not scores).
    q = jnp.dot(xqb, wq_ref[...], preferred_element_type=jnp.float32) + bq_ref[...]
    q = q.astype(jnp.bfloat16)                                          # (TB*Tq, D)
    kv = jnp.dot(xkvb, wkv_ref[...], preferred_element_type=jnp.float32) + bkv_ref[...]
    kv = kv.astype(jnp.bfloat16)                                        # (TB*S, 2D)

    # ---- per-batch multi-head attention --------------------------------------
    # TODO(synk): head split via pltpu.einshape could replace the lane-slice
    #             stack below; kept as the measured-working form.
    att_rows = []
    for b in range(TB):
        qb = q[b * Tq:(b + 1) * Tq, :]                                  # (Tq, D)
        kvb = kv[b * S:(b + 1) * S, :]                                  # (S, 2D)

        qh = jnp.stack([qb[:, h * dh:(h + 1) * dh] for h in range(H)], axis=0)
        kh = jnp.stack([kvb[:, h * dh:(h + 1) * dh] for h in range(H)], axis=0)
        vh = jnp.stack([kvb[:, D + h * dh:D + (h + 1) * dh] for h in range(H)], axis=0)

        s = jnp.einsum('hqd,hkd->hqk', qh, kh,
                       preferred_element_type=jnp.float32)              # (H, Tq, S)
        mask_b = mask_ref[b] > 0.5                                      # (1, S) bool
        s = jnp.where(mask_b, NEG_INF, s)                               # masked_fill
        s = s - jnp.max(s, axis=-1, keepdims=True)                      # stable softmax
        p = jnp.exp(s)
        p = p * pl.reciprocal(jnp.sum(p, axis=-1, keepdims=True), approx=True)
        oh = jnp.einsum('hqk,hkd->hqd', p.astype(jnp.bfloat16), vh,
                        preferred_element_type=jnp.float32)             # (H, Tq, dh)
        ohb = oh.astype(jnp.bfloat16)

        # Merge projection folded in: att = sum_h oh_h @ wm[h*dh:(h+1)*dh, :].
        # No lane concat; MXU accumulates the per-head partials.
        att_b = jnp.dot(ohb[0], wm_ref[0:dh, :], preferred_element_type=jnp.float32)
        for h in range(1, H):
            att_b = att_b + jnp.dot(ohb[h], wm_ref[h * dh:(h + 1) * dh, :],
                                    preferred_element_type=jnp.float32)
        att_rows.append(att_b)

    att = jnp.concatenate(att_rows, axis=0) if TB > 1 else att_rows[0]  # (TB*Tq, D)
    att = att + bm_ref[...]

    # ---- residual + LayerNorm 1 ----------------------------------------------
    y1 = _layernorm(xq + att, g1_ref[...], be1_ref[...], D)

    # ---- FFN: Linear(D,4D) -> ReLU -> (dropout=id) -> Linear(4D,D) -----------
    h1 = jnp.dot(y1.astype(jnp.bfloat16), wf1_ref[...],
                 preferred_element_type=jnp.float32) + bf1_ref[...]
    h1 = jnp.maximum(h1, 0.0)
    ff = jnp.dot(h1.astype(jnp.bfloat16), wf2_ref[...],
                 preferred_element_type=jnp.float32) + bf2_ref[...]

    # ---- residual + LayerNorm 2 ----------------------------------------------
    y2 = _layernorm(y1 + ff, g2_ref[...], be2_ref[...], D)

    # ---- write the (TB, Tq, D) output tile ------------------------------------
    for b in range(TB):
        o_ref[b] = y2[b * Tq:(b + 1) * Tq, :]


def _pick_tile(n, cap):
    """Largest divisor of n that is <= cap (at least 1)."""
    t = 1
    for c in range(1, n + 1):
        if n % c == 0 and c <= cap:
            t = c
    return t


def sa_forward(x, mask, params, *, num_heads=NUM_HEADS):
    B, S, D = x.shape
    dh = D // num_heads

    # Tiling: TB batch rows per step (amortize step overhead / fill MXU rows),
    # Tq query rows per step (bounds the (H,Tq,S) f32 score tensor for big S).
    if S <= 256:
        TB = _pick_tile(B, max(1, 256 // S))
        Tq = S
    else:
        TB = 1
        Tq = _pick_tile(S, 256)

    scale = 1.0 / math.sqrt(dh)
    wq = (params["wq"] * scale).astype(jnp.bfloat16)      # scale folded into Q proj
    bq = params["bq"] * scale
    wkv = jnp.concatenate([params["wk"], params["wv"]], axis=1).astype(jnp.bfloat16)
    bkv = jnp.concatenate([params["bk"], params["bv"]], axis=1)

    weights = [
        wq, bq, wkv, bkv,
        params["wm"].astype(jnp.bfloat16), params["bm"],
        params["g1"], params["be1"],
        params["wf1"].astype(jnp.bfloat16), params["bf1"],
        params["wf2"].astype(jnp.bfloat16), params["bf2"],
        params["g2"], params["be2"],
    ]

    def weight_spec(p):
        nd = p.ndim
        # Constant block index across the grid -> single-buffer to halve VMEM.
        return pl.BlockSpec(p.shape, lambda b, qi: (0,) * nd,
                            pipeline_mode=pl.Buffered(1))

    x_kv = x.reshape(B * S, D)         # pre-flattened slab for the K/V projection
    mask3 = mask.reshape(B, 1, S)      # full-extent last two dims in its block

    kernel = functools.partial(_sa_kernel, num_heads=num_heads)

    return pl.pallas_call(
        kernel,
        out_shape=jax.ShapeDtypeStruct((B, S, D), jnp.float32),
        grid_spec=pltpu.PrefetchScalarGridSpec(
            num_scalar_prefetch=0,
            grid=(B // TB, S // Tq),
            in_specs=[
                pl.BlockSpec((TB, Tq, D), lambda b, qi: (b, qi, 0)),  # x (query tile)
                pl.BlockSpec((TB * S, D), lambda b, qi: (b, 0)),      # x (full S, K/V)
                pl.BlockSpec((TB, 1, S), lambda b, qi: (b, 0, 0)),    # mask
            ] + [weight_spec(w) for w in weights],
            out_specs=pl.BlockSpec((TB, Tq, D), lambda b, qi: (b, qi, 0)),
        ),
        compiler_params=pltpu.CompilerParams(
            dimension_semantics=("parallel", "parallel"),
        ),
    )(x, x_kv, mask3, *weights)


def sa_reference(x, mask, p):
    """Pure-JAX f32 reference mirroring the PyTorch forward (eval mode)."""
    B, S, D = x.shape
    dh = D // NUM_HEADS

    def ln(z, g, b):
        mean = jnp.mean(z, axis=-1, keepdims=True)
        std = jnp.sqrt(jnp.sum((z - mean) ** 2, axis=-1, keepdims=True) / (D - 1))
        return g * (z - mean) / (std + EPS) + b

    q = x @ p["wq"] + p["bq"]
    k = x @ p["wk"] + p["bk"]
    v = x @ p["wv"] + p["bv"]
    qh = q.reshape(B, S, NUM_HEADS, dh).transpose(0, 2, 1, 3)
    kh = k.reshape(B, S, NUM_HEADS, dh).transpose(0, 2, 1, 3)
    vh = v.reshape(B, S, NUM_HEADS, dh).transpose(0, 2, 1, 3)
    sc = jnp.einsum("bhqd,bhkd->bhqk", qh, kh) / math.sqrt(dh)
    sc = jnp.where(mask[:, None, None, :] > 0.5, -1e9, sc)
    att = jax.nn.softmax(sc, axis=-1)
    out = jnp.einsum("bhqk,bhkd->bhqd", att, vh).transpose(0, 2, 1, 3).reshape(B, S, D)
    out = out @ p["wm"] + p["bm"]
    y1 = ln(x + out, p["g1"], p["be1"])
    ff = jnp.maximum(y1 @ p["wf1"] + p["bf1"], 0.0) @ p["wf2"] + p["bf2"]
    return ln(y1 + ff, p["g2"], p["be2"])


def init_params(key, D):
    Dm = 4 * D
    ks = jax.random.split(key, 8)
    s = 0.1
    params = {
        "wq": jax.random.normal(ks[0], (D, D), jnp.float32) * s,
        "bq": jax.random.normal(ks[1], (1, D), jnp.float32) * s,
        "wk": jax.random.normal(ks[2], (D, D), jnp.float32) * s,
        "bk": jax.random.normal(ks[3], (1, D), jnp.float32) * s,
        "wv": jax.random.normal(ks[4], (D, D), jnp.float32) * s,
        "bv": jax.random.normal(ks[5], (1, D), jnp.float32) * s,
        "wm": jax.random.normal(ks[6], (D, D), jnp.float32) * s,
        "bm": jax.random.normal(ks[7], (1, D), jnp.float32) * s,
        "g1": jnp.ones((1, D), jnp.float32),
        "be1": jnp.zeros((1, D), jnp.float32),
        "wf1": jax.random.normal(jax.random.fold_in(key, 100), (D, Dm), jnp.float32) * s,
        "bf1": jax.random.normal(jax.random.fold_in(key, 101), (1, Dm), jnp.float32) * s,
        "wf2": jax.random.normal(jax.random.fold_in(key, 102), (Dm, D), jnp.float32) * s,
        "bf2": jax.random.normal(jax.random.fold_in(key, 103), (1, D), jnp.float32) * s,
        "g2": jnp.ones((1, D), jnp.float32),
        "be2": jnp.zeros((1, D), jnp.float32),
    }
    return params


if __name__ == "__main__":
    # Lane-dense hidden size (D multiple of 128); dh = D / 8 = 16 as in the model.
    B, S, D = 2, 16, 128
    key = jax.random.PRNGKey(0)
    kx, kp = jax.random.split(key, 2)

    x = jax.random.normal(kx, (B, S, D), jnp.float32)
    # mask: last two key positions of batch 1 masked (1.0 == masked, like bool True)
    mask = jnp.zeros((B, S), jnp.float32).at[1, -2:].set(1.0)
    params = init_params(kp, D)

    out = sa_forward(x, mask, params)
    jax.block_until_ready(out)

    ref = sa_reference(x, mask, params)
    assert out.shape == (B, S, D)
    err = float(jnp.max(jnp.abs(out - ref)))
    # bf16 matmul weights dominate the residual error; LN reciprocals are exact now.
    assert jnp.allclose(out, ref, atol=3e-2, rtol=3e-2), f"max err {err}"
    print("KERNEL_OK")
</pallas_src>

<mosaic_0001>
module attributes {stable_mosaic.version = 11 : i64} {
  func.func @_sa_kernel(%arg0: i32, %arg1: i32, %arg2: memref<2x16x128xf32, #tpu.memory_space<vmem>>, %arg3: memref<32x128xf32, #tpu.memory_space<vmem>>, %arg4: memref<2x1x16xf32, #tpu.memory_space<vmem>>, %arg5: memref<128x128xbf16, #tpu.memory_space<vmem>>, %arg6: memref<1x128xf32, #tpu.memory_space<vmem>>, %arg7: memref<128x256xbf16, #tpu.memory_space<vmem>>, %arg8: memref<1x256xf32, #tpu.memory_space<vmem>>, %arg9: memref<128x128xbf16, #tpu.memory_space<vmem>>, %arg10: memref<1x128xf32, #tpu.memory_space<vmem>>, %arg11: memref<1x128xf32, #tpu.memory_space<vmem>>, %arg12: memref<1x128xf32, #tpu.memory_space<vmem>>, %arg13: memref<128x512xbf16, #tpu.memory_space<vmem>>, %arg14: memref<1x512xf32, #tpu.memory_space<vmem>>, %arg15: memref<512x128xbf16, #tpu.memory_space<vmem>>, %arg16: memref<1x128xf32, #tpu.memory_space<vmem>>, %arg17: memref<1x128xf32, #tpu.memory_space<vmem>>, %arg18: memref<1x128xf32, #tpu.memory_space<vmem>>, %arg19: memref<2x16x128xf32, #tpu.memory_space<vmem>>) attributes {dimension_semantics = [#tpu.dimension_semantics<parallel>, #tpu.dimension_semantics<parallel>], iteration_bounds = array<i64: 1, 1>, scalar_prefetch = 0 : i64, scratch_operands = 0 : i64, tpu.core_type = #tpu.core_type<tc>, window_params = [{transform_indices = @transform_0, window_bounds = array<i64: 2, 16, 128>}, {transform_indices = @transform_1, window_bounds = array<i64: 32, 128>}, {transform_indices = @transform_2, window_bounds = array<i64: 2, 1, 16>}, {pipeline_mode = #tpu.pipeline_mode<synchronous>, transform_indices = @transform_3, window_bounds = array<i64: 128, 128>}, {pipeline_mode = #tpu.pipeline_mode<synchronous>, transform_indices = @transform_4, window_bounds = array<i64: 1, 128>}, {pipeline_mode = #tpu.pipeline_mode<synchronous>, transform_indices = @transform_5, window_bounds = array<i64: 128, 256>}, {pipeline_mode = #tpu.pipeline_mode<synchronous>, transform_indices = @transform_6, window_bounds = array<i64: 1, 256>}, {pipeline_mode = #tpu.pipeline_mode<synchronous>, transform_indices = @transform_7, window_bounds = array<i64: 128, 128>}, {pipeline_mode = #tpu.pipeline_mode<synchronous>, transform_indices = @transform_8, window_bounds = array<i64: 1, 128>}, {pipeline_mode = #tpu.pipeline_mode<synchronous>, transform_indices = @transform_9, window_bounds = array<i64: 1, 128>}, {pipeline_mode = #tpu.pipeline_mode<synchronous>, transform_indices = @transform_10, window_bounds = array<i64: 1, 128>}, {pipeline_mode = #tpu.pipeline_mode<synchronous>, transform_indices = @transform_11, window_bounds = array<i64: 128, 512>}, {pipeline_mode = #tpu.pipeline_mode<synchronous>, transform_indices = @transform_12, window_bounds = array<i64: 1, 512>}, {pipeline_mode = #tpu.pipeline_mode<synchronous>, transform_indices = @transform_13, window_bounds = array<i64: 512, 128>}, {pipeline_mode = #tpu.pipeline_mode<synchronous>, transform_indices = @transform_14, window_bounds = array<i64: 1, 128>}, {pipeline_mode = #tpu.pipeline_mode<synchronous>, transform_indices = @transform_15, window_bounds = array<i64: 1, 128>}, {pipeline_mode = #tpu.pipeline_mode<synchronous>, transform_indices = @transform_16, window_bounds = array<i64: 1, 128>}, {transform_indices = @transform_17, window_bounds = array<i64: 2, 16, 128>}]} {
    %c0 = arith.constant 0 : index
    %c0_0 = arith.constant 0 : index
    %c0_1 = arith.constant 0 : index
    %0 = vector.load %arg2[%c0, %c0_0, %c0_1] : memref<2x16x128xf32, #tpu.memory_space<vmem>>, vector<1x16x128xf32>
    %1 = vector.shape_cast %0 : vector<1x16x128xf32> to vector<16x128xf32>
    %c1 = arith.constant 1 : index
    %c0_2 = arith.constant 0 : index
    %c0_3 = arith.constant 0 : index
    %2 = vector.load %arg2[%c1, %c0_2, %c0_3] : memref<2x16x128xf32, #tpu.memory_space<vmem>>, vector<1x16x128xf32>
    %3 = vector.shape_cast %2 : vector<1x16x128xf32> to vector<16x128xf32>
    %4 = tpu.concatenate %1, %3 in 0 : vector<16x128xf32>, vector<16x128xf32> -> vector<32x128xf32>
    %c0_4 = arith.constant 0 : index
    %c0_5 = arith.constant 0 : index
    %5 = vector.load %arg3[%c0_4, %c0_5] : memref<32x128xf32, #tpu.memory_space<vmem>>, vector<32x128xf32>
    %6 = arith.truncf %4 : vector<32x128xf32> to vector<32x128xbf16>
    %7 = arith.truncf %5 : vector<32x128xf32> to vector<32x128xbf16>
    %c0_6 = arith.constant 0 : index
    %c0_7 = arith.constant 0 : index
    %8 = vector.load %arg5[%c0_6, %c0_7] : memref<128x128xbf16, #tpu.memory_space<vmem>>, vector<128x128xbf16>
    %cst = arith.constant dense<0.000000e+00> : vector<32x128xf32>
    %9 = tpu.matmul %6, %8, %cst {dimension_numbers = #tpu.dot_dimension_numbers<[1], [0], [0], [1], [0, 0, 1, 1], [], []>} : vector<32x128xbf16>, vector<128x128xbf16>, vector<32x128xf32> -> vector<32x128xf32>
    %c0_8 = arith.constant 0 : index
    %c0_9 = arith.constant 0 : index
    %10 = vector.load %arg6[%c0_8, %c0_9] : memref<1x128xf32, #tpu.memory_space<vmem>>, vector<1x128xf32>
    %11 = vector.broadcast %10 : vector<1x128xf32> to vector<32x128xf32>
    %12 = arith.addf %9, %11 : vector<32x128xf32>
    %13 = arith.truncf %12 : vector<32x128xf32> to vector<32x128xbf16>
    %c0_10 = arith.constant 0 : index
    %c0_11 = arith.constant 0 : index
    %14 = vector.load %arg7[%c0_10, %c0_11] : memref<128x256xbf16, #tpu.memory_space<vmem>>, vector<128x256xbf16>
    %cst_12 = arith.constant dense<0.000000e+00> : vector<32x256xf32>
    %15 = tpu.matmul %7, %14, %cst_12 {dimension_numbers = #tpu.dot_dimension_numbers<[1], [0], [0], [1], [0, 0, 1, 1], [], []>} : vector<32x128xbf16>, vector<128x256xbf16>, vector<32x256xf32> -> vector<32x256xf32>
    %c0_13 = arith.constant 0 : index
    %c0_14 = arith.constant 0 : index
    %16 = vector.load %arg8[%c0_13, %c0_14] : memref<1x256xf32, #tpu.memory_space<vmem>>, vector<1x256xf32>
    %17 = vector.broadcast %16 : vector<1x256xf32> to vector<32x256xf32>
    %18 = arith.addf %15, %17 : vector<32x256xf32>
    %19 = arith.truncf %18 : vector<32x256xf32> to vector<32x256xbf16>
    %20 = vector.extract_strided_slice %13 {offsets = [0, 0], sizes = [16, 128], strides = [1, 1]} : vector<32x128xbf16> to vector<16x128xbf16>
    %21 = vector.extract_strided_slice %19 {offsets = [0, 0], sizes = [16, 256], strides = [1, 1]} : vector<32x256xbf16> to vector<16x256xbf16>
    %22 = vector.extract_strided_slice %20 {offsets = [0, 0], sizes = [16, 16], strides = [1, 1]} : vector<16x128xbf16> to vector<16x16xbf16>
    %23 = vector.extract_strided_slice %20 {offsets = [0, 16], sizes = [16, 16], strides = [1, 1]} : vector<16x128xbf16> to vector<16x16xbf16>
    %24 = vector.extract_strided_slice %20 {offsets = [0, 32], sizes = [16, 16], strides = [1, 1]} : vector<16x128xbf16> to vector<16x16xbf16>
    %25 = vector.extract_strided_slice %20 {offsets = [0, 48], sizes = [16, 16], strides = [1, 1]} : vector<16x128xbf16> to vector<16x16xbf16>
    %26 = vector.extract_strided_slice %20 {offsets = [0, 64], sizes = [16, 16], strides = [1, 1]} : vector<16x128xbf16> to vector<16x16xbf16>
    %27 = vector.extract_strided_slice %20 {offsets = [0, 80], sizes = [16, 16], strides = [1, 1]} : vector<16x128xbf16> to vector<16x16xbf16>
    %28 = vector.extract_strided_slice %20 {offsets = [0, 96], sizes = [16, 16], strides = [1, 1]} : vector<16x128xbf16> to vector<16x16xbf16>
    %29 = vector.extract_strided_slice %20 {offsets = [0, 112], sizes = [16, 16], strides = [1, 1]} : vector<16x128xbf16> to vector<16x16xbf16>
    %30 = vector.shape_cast %22 : vector<16x16xbf16> to vector<1x16x16xbf16>
    %31 = vector.shape_cast %23 : vector<16x16xbf16> to vector<1x16x16xbf16>
    %32 = vector.shape_cast %24 : vector<16x16xbf16> to vector<1x16x16xbf16>
    %33 = vector.shape_cast %25 : vector<16x16xbf16> to vector<1x16x16xbf16>
    %34 = vector.shape_cast %26 : vector<16x16xbf16> to vector<1x16x16xbf16>
    %35 = vector.shape_cast %27 : vector<16x16xbf16> to vector<1x16x16xbf16>
    %36 = vector.shape_cast %28 : vector<16x16xbf16> to vector<1x16x16xbf16>
    %37 = vector.shape_cast %29 : vector<16x16xbf16> to vector<1x16x16xbf16>
    %38 = tpu.concatenate %30, %31, %32, %33, %34, %35, %36, %37 in 0 : vector<1x16x16xbf16>, vector<1x16x16xbf16>, vector<1x16x16xbf16>, vector<1x16x16xbf16>, vector<1x16x16xbf16>, vector<1x16x16xbf16>, vector<1x16x16xbf16>, vector<1x16x16xbf16> -> vector<8x16x16xbf16>
    %39 = vector.extract_strided_slice %21 {offsets = [0, 0], sizes = [16, 16], strides = [1, 1]} : vector<16x256xbf16> to vector<16x16xbf16>
    %40 = vector.extract_strided_slice %21 {offsets = [0, 16], sizes = [16, 16], strides = [1, 1]} : vector<16x256xbf16> to vector<16x16xbf16>
    %41 = vector.extract_strided_slice %21 {offsets = [0, 32], sizes = [16, 16], strides = [1, 1]} : vector<16x256xbf16> to vector<16x16xbf16>
    %42 = vector.extract_strided_slice %21 {offsets = [0, 48], sizes = [16, 16], strides = [1, 1]} : vector<16x256xbf16> to vector<16x16xbf16>
    %43 = vector.extract_strided_slice %21 {offsets = [0, 64], sizes = [16, 16], strides = [1, 1]} : vector<16x256xbf16> to vector<16x16xbf16>
    %44 = vector.extract_strided_slice %21 {offsets = [0, 80], sizes = [16, 16], strides = [1, 1]} : vector<16x256xbf16> to vector<16x16xbf16>
    %45 = vector.extract_strided_slice %21 {offsets = [0, 96], sizes = [16, 16], strides = [1, 1]} : vector<16x256xbf16> to vector<16x16xbf16>
    %46 = vector.extract_strided_slice %21 {offsets = [0, 112], sizes = [16, 16], strides = [1, 1]} : vector<16x256xbf16> to vector<16x16xbf16>
    %47 = vector.shape_cast %39 : vector<16x16xbf16> to vector<1x16x16xbf16>
    %48 = vector.shape_cast %40 : vector<16x16xbf16> to vector<1x16x16xbf16>
    %49 = vector.shape_cast %41 : vector<16x16xbf16> to vector<1x16x16xbf16>
    %50 = vector.shape_cast %42 : vector<16x16xbf16> to vector<1x16x16xbf16>
    %51 = vector.shape_cast %43 : vector<16x16xbf16> to vector<1x16x16xbf16>
    %52 = vector.shape_cast %44 : vector<16x16xbf16> to vector<1x16x16xbf16>
    %53 = vector.shape_cast %45 : vector<16x16xbf16> to vector<1x16x16xbf16>
    %54 = vector.shape_cast %46 : vector<16x16xbf16> to vector<1x16x16xbf16>
    %55 = tpu.concatenate %47, %48, %49, %50, %51, %52, %53, %54 in 0 : vector<1x16x16xbf16>, vector<1x16x16xbf16>, vector<1x16x16xbf16>, vector<1x16x16xbf16>, vector<1x16x16xbf16>, vector<1x16x16xbf16>, vector<1x16x16xbf16>, vector<1x16x16xbf16> -> vector<8x16x16xbf16>
    %56 = vector.extract_strided_slice %21 {offsets = [0, 128], sizes = [16, 16], strides = [1, 1]} : vector<16x256xbf16> to vector<16x16xbf16>
    %57 = vector.extract_strided_slice %21 {offsets = [0, 144], sizes = [16, 16], strides = [1, 1]} : vector<16x256xbf16> to vector<16x16xbf16>
    %58 = vector.extract_strided_slice %21 {offsets = [0, 160], sizes = [16, 16], strides = [1, 1]} : vector<16x256xbf16> to vector<16x16xbf16>
    %59 = vector.extract_strided_slice %21 {offsets = [0, 176], sizes = [16, 16], strides = [1, 1]} : vector<16x256xbf16> to vector<16x16xbf16>
    %60 = vector.extract_strided_slice %21 {offsets = [0, 192], sizes = [16, 16], strides = [1, 1]} : vector<16x256xbf16> to vector<16x16xbf16>
    %61 = vector.extract_strided_slice %21 {offsets = [0, 208], sizes = [16, 16], strides = [1, 1]} : vector<16x256xbf16> to vector<16x16xbf16>
    %62 = vector.extract_strided_slice %21 {offsets = [0, 224], sizes = [16, 16], strides = [1, 1]} : vector<16x256xbf16> to vector<16x16xbf16>
    %63 = vector.extract_strided_slice %21 {offsets = [0, 240], sizes = [16, 16], strides = [1, 1]} : vector<16x256xbf16> to vector<16x16xbf16>
    %64 = vector.shape_cast %56 : vector<16x16xbf16> to vector<1x16x16xbf16>
    %65 = vector.shape_cast %57 : vector<16x16xbf16> to vector<1x16x16xbf16>
    %66 = vector.shape_cast %58 : vector<16x16xbf16> to vector<1x16x16xbf16>
    %67 = vector.shape_cast %59 : vector<16x16xbf16> to vector<1x16x16xbf16>
    %68 = vector.shape_cast %60 : vector<16x16xbf16> to vector<1x16x16xbf16>
    %69 = vector.shape_cast %61 : vector<16x16xbf16> to vector<1x16x16xbf16>
    %70 = vector.shape_cast %62 : vector<16x16xbf16> to vector<1x16x16xbf16>
    %71 = vector.shape_cast %63 : vector<16x16xbf16> to vector<1x16x16xbf16>
    %72 = tpu.concatenate %64, %65, %66, %67, %68, %69, %70, %71 in 0 : vector<1x16x16xbf16>, vector<1x16x16xbf16>, vector<1x16x16xbf16>, vector<1x16x16xbf16>, vector<1x16x16xbf16>, vector<1x16x16xbf16>, vector<1x16x16xbf16>, vector<1x16x16xbf16> -> vector<8x16x16xbf16>
    "tpu.trace_start"() <{level = 10 : i32, message = "hqd,hkd->hqk"}> : () -> ()
    %cst_15 = arith.constant dense<0.000000e+00> : vector<8x16x16xf32>
    %73 = tpu.matmul %38, %55, %cst_15 {dimension_numbers = #tpu.dot_dimension_numbers<[2], [2], [1], [1], [0, 0, 0, 1, 1, 1], [0], [0]>} : vector<8x16x16xbf16>, vector<8x16x16xbf16>, vector<8x16x16xf32> -> vector<8x16x16xf32>
    "tpu.trace_stop"() : () -> ()
    %c0_16 = arith.constant 0 : index
    %c0_17 = arith.constant 0 : index
    %c0_18 = arith.constant 0 : index
    %74 = vector.load %arg4[%c0_16, %c0_17, %c0_18] : memref<2x1x16xf32, #tpu.memory_space<vmem>>, vector<1x1x16xf32>
    %75 = vector.shape_cast %74 : vector<1x1x16xf32> to vector<1x16xf32>
    %cst_19 = arith.constant 5.000000e-01 : f32
    %76 = vector.broadcast %cst_19 : f32 to vector<1x16xf32>
    %77 = arith.cmpf ogt, %75, %76 : vector<1x16xf32>
    %cst_20 = arith.constant -1.000000e+09 : f32
    %78 = vector.shape_cast %77 : vector<1x16xi1> to vector<1x1x16xi1>
    %79 = vector.broadcast %78 : vector<1x1x16xi1> to vector<8x16x16xi1>
    %80 = vector.broadcast %cst_20 : f32 to vector<8x16x16xf32>
    %81 = arith.select %79, %80, %73 : vector<8x16x16xi1>, vector<8x16x16xf32>
    %cst_21 = arith.constant dense<0xFF800000> : vector<8x16xf32>
    %82 = vector.multi_reduction <maximumf>, %81, %cst_21 [2] : vector<8x16x16xf32> to vector<8x16xf32>
    %83 = vector.shape_cast %82 : vector<8x16xf32> to vector<8x16x1xf32>
    %84 = vector.broadcast %83 : vector<8x16x1xf32> to vector<8x16x16xf32>
    %85 = arith.subf %81, %84 : vector<8x16x16xf32>
    %86 = math.exp %85 : vector<8x16x16xf32>
    %cst_22 = arith.constant dense<0.000000e+00> : vector<8x16xf32>
    %87 = vector.multi_reduction <add>, %86, %cst_22 [2] : vector<8x16x16xf32> to vector<8x16xf32>
    %88 = vector.shape_cast %87 : vector<8x16xf32> to vector<8x16x1xf32>
    %89 = tpu.reciprocal %88 {approx = true} : vector<8x16x1xf32> -> vector<8x16x1xf32>
    %90 = vector.broadcast %89 : vector<8x16x1xf32> to vector<8x16x16xf32>
    %91 = arith.mulf %86, %90 : vector<8x16x16xf32>
    %92 = arith.truncf %91 : vector<8x16x16xf32> to vector<8x16x16xbf16>
    "tpu.trace_start"() <{level = 10 : i32, message = "hqk,hkd->hqd"}> : () -> ()
    %cst_23 = arith.constant dense<0.000000e+00> : vector<8x16x16xf32>
    %93 = tpu.matmul %92, %72, %cst_23 {dimension_numbers = #tpu.dot_dimension_numbers<[2], [1], [1], [2], [0, 0, 0, 1, 1, 2], [0], [0]>} : vector<8x16x16xbf16>, vector<8x16x16xbf16>, vector<8x16x16xf32> -> vector<8x16x16xf32>
    "tpu.trace_stop"() : () -> ()
    %94 = arith.truncf %93 : vector<8x16x16xf32> to vector<8x16x16xbf16>
    %95 = vector.extract_strided_slice %94 {offsets = [0, 0, 0], sizes = [1, 16, 16], strides = [1, 1, 1]} : vector<8x16x16xbf16> to vector<1x16x16xbf16>
    %96 = vector.shape_cast %95 : vector<1x16x16xbf16> to vector<16x16xbf16>
    %c0_24 = arith.constant 0 : index
    %c0_25 = arith.constant 0 : index
    %97 = vector.load %arg9[%c0_24, %c0_25] : memref<128x128xbf16, #tpu.memory_space<vmem>>, vector<16x128xbf16>
    %cst_26 = arith.constant dense<0.000000e+00> : vector<16x128xf32>
    %98 = tpu.matmul %96, %97, %cst_26 {dimension_numbers = #tpu.dot_dimension_numbers<[1], [0], [0], [1], [0, 0, 1, 1], [], []>} : vector<16x16xbf16>, vector<16x128xbf16>, vector<16x128xf32> -> vector<16x128xf32>
    %99 = vector.extract_strided_slice %94 {offsets = [1, 0, 0], sizes = [1, 16, 16], strides = [1, 1, 1]} : vector<8x16x16xbf16> to vector<1x16x16xbf16>
    %100 = vector.shape_cast %99 : vector<1x16x16xbf16> to vector<16x16xbf16>
    %c16 = arith.constant 16 : index
    %c0_27 = arith.constant 0 : index
    %101 = vector.load %arg9[%c16, %c0_27] : memref<128x128xbf16, #tpu.memory_space<vmem>>, vector<16x128xbf16>
    %cst_28 = arith.constant dense<0.000000e+00> : vector<16x128xf32>
    %102 = tpu.matmul %100, %101, %cst_28 {dimension_numbers = #tpu.dot_dimension_numbers<[1], [0], [0], [1], [0, 0, 1, 1], [], []>} : vector<16x16xbf16>, vector<16x128xbf16>, vector<16x128xf32> -> vector<16x128xf32>
    %103 = arith.addf %98, %102 : vector<16x128xf32>
    %104 = vector.extract_strided_slice %94 {offsets = [2, 0, 0], sizes = [1, 16, 16], strides = [1, 1, 1]} : vector<8x16x16xbf16> to vector<1x16x16xbf16>
    %105 = vector.shape_cast %104 : vector<1x16x16xbf16> to vector<16x16xbf16>
    %c32 = arith.constant 32 : index
    %c0_29 = arith.constant 0 : index
    %106 = vector.load %arg9[%c32, %c0_29] : memref<128x128xbf16, #tpu.memory_space<vmem>>, vector<16x128xbf16>
    %cst_30 = arith.constant dense<0.000000e+00> : vector<16x128xf32>
    %107 = tpu.matmul %105, %106, %cst_30 {dimension_numbers = #tpu.dot_dimension_numbers<[1], [0], [0], [1], [0, 0, 1, 1], [], []>} : vector<16x16xbf16>, vector<16x128xbf16>, vector<16x128xf32> -> vector<16x128xf32>
    %108 = arith.addf %103, %107 : vector<16x128xf32>
    %109 = vector.extract_strided_slice %94 {offsets = [3, 0, 0], sizes = [1, 16, 16], strides = [1, 1, 1]} : vector<8x16x16xbf16> to vector<1x16x16xbf16>
    %110 = vector.shape_cast %109 : vector<1x16x16xbf16> to vector<16x16xbf16>
    %c48 = arith.constant 48 : index
    %c0_31 = arith.constant 0 : index
    %111 = vector.load %arg9[%c48, %c0_31] : memref<128x128xbf16, #tpu.memory_space<vmem>>, vector<16x128xbf16>
    %cst_32 = arith.constant dense<0.000000e+00> : vector<16x128xf32>
    %112 = tpu.matmul %110, %111, %cst_32 {dimension_numbers = #tpu.dot_dimension_numbers<[1], [0], [0], [1], [0, 0, 1, 1], [], []>} : vector<16x16xbf16>, vector<16x128xbf16>, vector<16x128xf32> -> vector<16x128xf32>
    %113 = arith.addf %108, %112 : vector<16x128xf32>
    %114 = vector.extract_strided_slice %94 {offsets = [4, 0, 0], sizes = [1, 16, 16], strides = [1, 1, 1]} : vector<8x16x16xbf16> to vector<1x16x16xbf16>
    %115 = vector.shape_cast %114 : vector<1x16x16xbf16> to vector<16x16xbf16>
    %c64 = arith.constant 64 : index
    %c0_33 = arith.constant 0 : index
    %116 = vector.load %arg9[%c64, %c0_33] : memref<128x128xbf16, #tpu.memory_space<vmem>>, vector<16x128xbf16>
    %cst_34 = arith.constant dense<0.000000e+00> : vector<16x128xf32>
    %117 = tpu.matmul %115, %116, %cst_34 {dimension_numbers = #tpu.dot_dimension_numbers<[1], [0], [0], [1], [0, 0, 1, 1], [], []>} : vector<16x16xbf16>, vector<16x128xbf16>, vector<16x128xf32> -> vector<16x128xf32>
    %118 = arith.addf %113, %117 : vector<16x128xf32>
    %119 = vector.extract_strided_slice %94 {offsets = [5, 0, 0], sizes = [1, 16, 16], strides = [1, 1, 1]} : vector<8x16x16xbf16> to vector<1x16x16xbf16>
    %120 = vector.shape_cast %119 : vector<1x16x16xbf16> to vector<16x16xbf16>
    %c80 = arith.constant 80 : index
    %c0_35 = arith.constant 0 : index
    %121 = vector.load %arg9[%c80, %c0_35] : memref<128x128xbf16, #tpu.memory_space<vmem>>, vector<16x128xbf16>
    %cst_36 = arith.constant dense<0.000000e+00> : vector<16x128xf32>
    %122 = tpu.matmul %120, %121, %cst_36 {dimension_numbers = #tpu.dot_dimension_numbers<[1], [0], [0], [1], [0, 0, 1, 1], [], []>} : vector<16x16xbf16>, vector<16x128xbf16>, vector<16x128xf32> -> vector<16x128xf32>
    %123 = arith.addf %118, %122 : vector<16x128xf32>
    %124 = vector.extract_strided_slice %94 {offsets = [6, 0, 0], sizes = [1, 16, 16], strides = [1, 1, 1]} : vector<8x16x16xbf16> to vector<1x16x16xbf16>
    %125 = vector.shape_cast %124 : vector<1x16x16xbf16> to vector<16x16xbf16>
    %c96 = arith.constant 96 : index
    %c0_37 = arith.constant 0 : index
    %126 = vector.load %arg9[%c96, %c0_37] : memref<128x128xbf16, #tpu.memory_space<vmem>>, vector<16x128xbf16>
    %cst_38 = arith.constant dense<0.000000e+00> : vector<16x128xf32>
    %127 = tpu.matmul %125, %126, %cst_38 {dimension_numbers = #tpu.dot_dimension_numbers<[1], [0], [0], [1], [0, 0, 1, 1], [], []>} : vector<16x16xbf16>, vector<16x128xbf16>, vector<16x128xf32> -> vector<16x128xf32>
    %128 = arith.addf %123, %127 : vector<16x128xf32>
    %129 = vector.extract_strided_slice %94 {offsets = [7, 0, 0], sizes = [1, 16, 16], strides = [1, 1, 1]} : vector<8x16x16xbf16> to vector<1x16x16xbf16>
    %130 = vector.shape_cast %129 : vector<1x16x16xbf16> to vector<16x16xbf16>
    %c112 = arith.constant 112 : index
    %c0_39 = arith.constant 0 : index
    %131 = vector.load %arg9[%c112, %c0_39] : memref<128x128xbf16, #tpu.memory_space<vmem>>, vector<16x128xbf16>
    %cst_40 = arith.constant dense<0.000000e+00> : vector<16x128xf32>
    %132 = tpu.matmul %130, %131, %cst_40 {dimension_numbers = #tpu.dot_dimension_numbers<[1], [0], [0], [1], [0, 0, 1, 1], [], []>} : vector<16x16xbf16>, vector<16x128xbf16>, vector<16x128xf32> -> vector<16x128xf32>
    %133 = arith.addf %128, %132 : vector<16x128xf32>
    %134 = vector.extract_strided_slice %13 {offsets = [16, 0], sizes = [16, 128], strides = [1, 1]} : vector<32x128xbf16> to vector<16x128xbf16>
    %135 = vector.extract_strided_slice %19 {offsets = [16, 0], sizes = [16, 256], strides = [1, 1]} : vector<32x256xbf16> to vector<16x256xbf16>
    %136 = vector.extract_strided_slice %134 {offsets = [0, 0], sizes = [16, 16], strides = [1, 1]} : vector<16x128xbf16> to vector<16x16xbf16>
    %137 = vector.extract_strided_slice %134 {offsets = [0, 16], sizes = [16, 16], strides = [1, 1]} : vector<16x128xbf16> to vector<16x16xbf16>
    %138 = vector.extract_strided_slice %134 {offsets = [0, 32], sizes = [16, 16], strides = [1, 1]} : vector<16x128xbf16> to vector<16x16xbf16>
    %139 = vector.extract_strided_slice %134 {offsets = [0, 48], sizes = [16, 16], strides = [1, 1]} : vector<16x128xbf16> to vector<16x16xbf16>
    %140 = vector.extract_strided_slice %134 {offsets = [0, 64], sizes = [16, 16], strides = [1, 1]} : vector<16x128xbf16> to vector<16x16xbf16>
    %141 = vector.extract_strided_slice %134 {offsets = [0, 80], sizes = [16, 16], strides = [1, 1]} : vector<16x128xbf16> to vector<16x16xbf16>
    %142 = vector.extract_strided_slice %134 {offsets = [0, 96], sizes = [16, 16], strides = [1, 1]} : vector<16x128xbf16> to vector<16x16xbf16>
    %143 = vector.extract_strided_slice %134 {offsets = [0, 112], sizes = [16, 16], strides = [1, 1]} : vector<16x128xbf16> to vector<16x16xbf16>
    %144 = vector.shape_cast %136 : vector<16x16xbf16> to vector<1x16x16xbf16>
    %145 = vector.shape_cast %137 : vector<16x16xbf16> to vector<1x16x16xbf16>
    %146 = vector.shape_cast %138 : vector<16x16xbf16> to vector<1x16x16xbf16>
    %147 = vector.shape_cast %139 : vector<16x16xbf16> to vector<1x16x16xbf16>
    %148 = vector.shape_cast %140 : vector<16x16xbf16> to vector<1x16x16xbf16>
    %149 = vector.shape_cast %141 : vector<16x16xbf16> to vector<1x16x16xbf16>
    %150 = vector.shape_cast %142 : vector<16x16xbf16> to vector<1x16x16xbf16>
    %151 = vector.shape_cast %143 : vector<16x16xbf16> to vector<1x16x16xbf16>
    %152 = tpu.concatenate %144, %145, %146, %147, %148, %149, %150, %151 in 0 : vector<1x16x16xbf16>, vector<1x16x16xbf16>, vector<1x16x16xbf16>, vector<1x16x16xbf16>, vector<1x16x16xbf16>, vector<1x16x16xbf16>, vector<1x16x16xbf16>, vector<1x16x16xbf16> -> vector<8x16x16xbf16>
    %153 = vector.extract_strided_slice %135 {offsets = [0, 0], sizes = [16, 16], strides = [1, 1]} : vector<16x256xbf16> to vector<16x16xbf16>
    %154 = vector.extract_strided_slice %135 {offsets = [0, 16], sizes = [16, 16], strides = [1, 1]} : vector<16x256xbf16> to vector<16x16xbf16>
    %155 = vector.extract_strided_slice %135 {offsets = [0, 32], sizes = [16, 16], strides = [1, 1]} : vector<16x256xbf16> to vector<16x16xbf16>
    %156 = vector.extract_strided_slice %135 {offsets = [0, 48], sizes = [16, 16], strides = [1, 1]} : vector<16x256xbf16> to vector<16x16xbf16>
    %157 = vector.extract_strided_slice %135 {offsets = [0, 64], sizes = [16, 16], strides = [1, 1]} : vector<16x256xbf16> to vector<16x16xbf16>
    %158 = vector.extract_strided_slice %135 {offsets = [0, 80], sizes = [16, 16], strides = [1, 1]} : vector<16x256xbf16> to vector<16x16xbf16>
    %159 = vector.extract_strided_slice %135 {offsets = [0, 96], sizes = [16, 16], strides = [1, 1]} : vector<16x256xbf16> to vector<16x16xbf16>
    %160 = vector.extract_strided_slice %135 {offsets = [0, 112], sizes = [16, 16], strides = [1, 1]} : vector<16x256xbf16> to vector<16x16xbf16>
    %161 = vector.shape_cast %153 : vector<16x16xbf16> to vector<1x16x16xbf16>
    %162 = vector.shape_cast %154 : vector<16x16xbf16> to vector<1x16x16xbf16>
    %163 = vector.shape_cast %155 : vector<16x16xbf16> to vector<1x16x16xbf16>
    %164 = vector.shape_cast %156 : vector<16x16xbf16> to vector<1x16x16xbf16>
    %165 = vector.shape_cast %157 : vector<16x16xbf16> to vector<1x16x16xbf16>
    %166 = vector.shape_cast %158 : vector<16x16xbf16> to vector<1x16x16xbf16>
    %167 = vector.shape_cast %159 : vector<16x16xbf16> to vector<1x16x16xbf16>
    %168 = vector.shape_cast %160 : vector<16x16xbf16> to vector<1x16x16xbf16>
    %169 = tpu.concatenate %161, %162, %163, %164, %165, %166, %167, %168 in 0 : vector<1x16x16xbf16>, vector<1x16x16xbf16>, vector<1x16x16xbf16>, vector<1x16x16xbf16>, vector<1x16x16xbf16>, vector<1x16x16xbf16>, vector<1x16x16xbf16>, vector<1x16x16xbf16> -> vector<8x16x16xbf16>
    %170 = vector.extract_strided_slice %135 {offsets = [0, 128], sizes = [16, 16], strides = [1, 1]} : vector<16x256xbf16> to vector<16x16xbf16>
    %171 = vector.extract_strided_slice %135 {offsets = [0, 144], sizes = [16, 16], strides = [1, 1]} : vector<16x256xbf16> to vector<16x16xbf16>
    %172 = vector.extract_strided_slice %135 {offsets = [0, 160], sizes = [16, 16], strides = [1, 1]} : vector<16x256xbf16> to vector<16x16xbf16>
    %173 = vector.extract_strided_slice %135 {offsets = [0, 176], sizes = [16, 16], strides = [1, 1]} : vector<16x256xbf16> to vector<16x16xbf16>
    %174 = vector.extract_strided_slice %135 {offsets = [0, 192], sizes = [16, 16], strides = [1, 1]} : vector<16x256xbf16> to vector<16x16xbf16>
    %175 = vector.extract_strided_slice %135 {offsets = [0, 208], sizes = [16, 16], strides = [1, 1]} : vector<16x256xbf16> to vector<16x16xbf16>
    %176 = vector.extract_strided_slice %135 {offsets = [0, 224], sizes = [16, 16], strides = [1, 1]} : vector<16x256xbf16> to vector<16x16xbf16>
    %177 = vector.extract_strided_slice %135 {offsets = [0, 240], sizes = [16, 16], strides = [1, 1]} : vector<16x256xbf16> to vector<16x16xbf16>
    %178 = vector.shape_cast %170 : vector<16x16xbf16> to vector<1x16x16xbf16>
    %179 = vector.shape_cast %171 : vector<16x16xbf16> to vector<1x16x16xbf16>
    %180 = vector.shape_cast %172 : vector<16x16xbf16> to vector<1x16x16xbf16>
    %181 = vector.shape_cast %173 : vector<16x16xbf16> to vector<1x16x16xbf16>
    %182 = vector.shape_cast %174 : vector<16x16xbf16> to vector<1x16x16xbf16>
    %183 = vector.shape_cast %175 : vector<16x16xbf16> to vector<1x16x16xbf16>
    %184 = vector.shape_cast %176 : vector<16x16xbf16> to vector<1x16x16xbf16>
    %185 = vector.shape_cast %177 : vector<16x16xbf16> to vector<1x16x16xbf16>
    %186 = tpu.concatenate %178, %179, %180, %181, %182, %183, %184, %185 in 0 : vector<1x16x16xbf16>, vector<1x16x16xbf16>, vector<1x16x16xbf16>, vector<1x16x16xbf16>, vector<1x16x16xbf16>, vector<1x16x16xbf16>, vector<1x16x16xbf16>, vector<1x16x16xbf16> -> vector<8x16x16xbf16>
    "tpu.trace_start"() <{level = 10 : i32, message = "hqd,hkd->hqk"}> : () -> ()
    %cst_41 = arith.constant dense<0.000000e+00> : vector<8x16x16xf32>
    %187 = tpu.matmul %152, %169, %cst_41 {dimension_numbers = #tpu.dot_dimension_numbers<[2], [2], [1], [1], [0, 0, 0, 1, 1, 1], [0], [0]>} : vector<8x16x16xbf16>, vector<8x16x16xbf16>, vector<8x16x16xf32> -> vector<8x16x16xf32>
    "tpu.trace_stop"() : () -> ()
    %c1_42 = arith.constant 1 : index
    %c0_43 = arith.constant 0 : index
    %c0_44 = arith.constant 0 : index
    %188 = vector.load %arg4[%c1_42, %c0_43, %c0_44] : memref<2x1x16xf32, #tpu.memory_space<vmem>>, vector<1x1x16xf32>
    %189 = vector.shape_cast %188 : vector<1x1x16xf32> to vector<1x16xf32>
    %cst_45 = arith.constant 5.000000e-01 : f32
    %190 = vector.broadcast %cst_45 : f32 to vector<1x16xf32>
    %191 = arith.cmpf ogt, %189, %190 : vector<1x16xf32>
    %cst_46 = arith.constant -1.000000e+09 : f32
    %192 = vector.shape_cast %191 : vector<1x16xi1> to vector<1x1x16xi1>
    %193 = vector.broadcast %192 : vector<1x1x16xi1> to vector<8x16x16xi1>
    %194 = vector.broadcast %cst_46 : f32 to vector<8x16x16xf32>
    %195 = arith.select %193, %194, %187 : vector<8x16x16xi1>, vector<8x16x16xf32>
    %cst_47 = arith.constant dense<0xFF800000> : vector<8x16xf32>
    %196 = vector.multi_reduction <maximumf>, %195, %cst_47 [2] : vector<8x16x16xf32> to vector<8x16xf32>
    %197 = vector.shape_cast %196 : vector<8x16xf32> to vector<8x16x1xf32>
    %198 = vector.broadcast %197 : vector<8x16x1xf32> to vector<8x16x16xf32>
    %199 = arith.subf %195, %198 : vector<8x16x16xf32>
    %200 = math.exp %199 : vector<8x16x16xf32>
    %cst_48 = arith.constant dense<0.000000e+00> : vector<8x16xf32>
    %201 = vector.multi_reduction <add>, %200, %cst_48 [2] : vector<8x16x16xf32> to vector<8x16xf32>
    %202 = vector.shape_cast %201 : vector<8x16xf32> to vector<8x16x1xf32>
    %203 = tpu.reciprocal %202 {approx = true} : vector<8x16x1xf32> -> vector<8x16x1xf32>
    %204 = vector.broadcast %203 : vector<8x16x1xf32> to vector<8x16x16xf32>
    %205 = arith.mulf %200, %204 : vector<8x16x16xf32>
    %206 = arith.truncf %205 : vector<8x16x16xf32> to vector<8x16x16xbf16>
    "tpu.trace_start"() <{level = 10 : i32, message = "hqk,hkd->hqd"}> : () -> ()
    %cst_49 = arith.constant dense<0.000000e+00> : vector<8x16x16xf32>
    %207 = tpu.matmul %206, %186, %cst_49 {dimension_numbers = #tpu.dot_dimension_numbers<[2], [1], [1], [2], [0, 0, 0, 1, 1, 2], [0], [0]>} : vector<8x16x16xbf16>, vector<8x16x16xbf16>, vector<8x16x16xf32> -> vector<8x16x16xf32>
    "tpu.trace_stop"() : () -> ()
    %208 = arith.truncf %207 : vector<8x16x16xf32> to vector<8x16x16xbf16>
    %209 = vector.extract_strided_slice %208 {offsets = [0, 0, 0], sizes = [1, 16, 16], strides = [1, 1, 1]} : vector<8x16x16xbf16> to vector<1x16x16xbf16>
    %210 = vector.shape_cast %209 : vector<1x16x16xbf16> to vector<16x16xbf16>
    %c0_50 = arith.constant 0 : index
    %c0_51 = arith.constant 0 : index
    %211 = vector.load %arg9[%c0_50, %c0_51] : memref<128x128xbf16, #tpu.memory_space<vmem>>, vector<16x128xbf16>
    %cst_52 = arith.constant dense<0.000000e+00> : vector<16x128xf32>
    %212 = tpu.matmul %210, %211, %cst_52 {dimension_numbers = #tpu.dot_dimension_numbers<[1], [0], [0], [1], [0, 0, 1, 1], [], []>} : vector<16x16xbf16>, vector<16x128xbf16>, vector<16x128xf32> -> vector<16x128xf32>
    %213 = vector.extract_strided_slice %208 {offsets = [1, 0, 0], sizes = [1, 16, 16], strides = [1, 1, 1]} : vector<8x16x16xbf16> to vector<1x16x16xbf16>
    %214 = vector.shape_cast %213 : vector<1x16x16xbf16> to vector<16x16xbf16>
    %c16_53 = arith.constant 16 : index
    %c0_54 = arith.constant 0 : index
    %215 = vector.load %arg9[%c16_53, %c0_54] : memref<128x128xbf16, #tpu.memory_space<vmem>>, vector<16x128xbf16>
    %cst_55 = arith.constant dense<0.000000e+00> : vector<16x128xf32>
    %216 = tpu.matmul %214, %215, %cst_55 {dimension_numbers = #tpu.dot_dimension_numbers<[1], [0], [0], [1], [0, 0, 1, 1], [], []>} : vector<16x16xbf16>, vector<16x128xbf16>, vector<16x128xf32> -> vector<16x128xf32>
    %217 = arith.addf %212, %216 : vector<16x128xf32>
    %218 = vector.extract_strided_slice %208 {offsets = [2, 0, 0], sizes = [1, 16, 16], strides = [1, 1, 1]} : vector<8x16x16xbf16> to vector<1x16x16xbf16>
    %219 = vector.shape_cast %218 : vector<1x16x16xbf16> to vector<16x16xbf16>
    %c32_56 = arith.constant 32 : index
    %c0_57 = arith.constant 0 : index
    %220 = vector.load %arg9[%c32_56, %c0_57] : memref<128x128xbf16, #tpu.memory_space<vmem>>, vector<16x128xbf16>
    %cst_58 = arith.constant dense<0.000000e+00> : vector<16x128xf32>
    %221 = tpu.matmul %219, %220, %cst_58 {dimension_numbers = #tpu.dot_dimension_numbers<[1], [0], [0], [1], [0, 0, 1, 1], [], []>} : vector<16x16xbf16>, vector<16x128xbf16>, vector<16x128xf32> -> vector<16x128xf32>
    %222 = arith.addf %217, %221 : vector<16x128xf32>
    %223 = vector.extract_strided_slice %208 {offsets = [3, 0, 0], sizes = [1, 16, 16], strides = [1, 1, 1]} : vector<8x16x16xbf16> to vector<1x16x16xbf16>
    %224 = vector.shape_cast %223 : vector<1x16x16xbf16> to vector<16x16xbf16>
    %c48_59 = arith.constant 48 : index
    %c0_60 = arith.constant 0 : index
    %225 = vector.load %arg9[%c48_59, %c0_60] : memref<128x128xbf16, #tpu.memory_space<vmem>>, vector<16x128xbf16>
    %cst_61 = arith.constant dense<0.000000e+00> : vector<16x128xf32>
    %226 = tpu.matmul %224, %225, %cst_61 {dimension_numbers = #tpu.dot_dimension_numbers<[1], [0], [0], [1], [0, 0, 1, 1], [], []>} : vector<16x16xbf16>, vector<16x128xbf16>, vector<16x128xf32> -> vector<16x128xf32>
    %227 = arith.addf %222, %226 : vector<16x128xf32>
    %228 = vector.extract_strided_slice %208 {offsets = [4, 0, 0], sizes = [1, 16, 16], strides = [1, 1, 1]} : vector<8x16x16xbf16> to vector<1x16x16xbf16>
    %229 = vector.shape_cast %228 : vector<1x16x16xbf16> to vector<16x16xbf16>
    %c64_62 = arith.constant 64 : index
    %c0_63 = arith.constant 0 : index
    %230 = vector.load %arg9[%c64_62, %c0_63] : memref<128x128xbf16, #tpu.memory_space<vmem>>, vector<16x128xbf16>
    %cst_64 = arith.constant dense<0.000000e+00> : vector<16x128xf32>
    %231 = tpu.matmul %229, %230, %cst_64 {dimension_numbers = #tpu.dot_dimension_numbers<[1], [0], [0], [1], [0, 0, 1, 1], [], []>} : vector<16x16xbf16>, vector<16x128xbf16>, vector<16x128xf32> -> vector<16x128xf32>
    %232 = arith.addf %227, %231 : vector<16x128xf32>
    %233 = vector.extract_strided_slice %208 {offsets = [5, 0, 0], sizes = [1, 16, 16], strides = [1, 1, 1]} : vector<8x16x16xbf16> to vector<1x16x16xbf16>
    %234 = vector.shape_cast %233 : vector<1x16x16xbf16> to vector<16x16xbf16>
    %c80_65 = arith.constant 80 : index
    %c0_66 = arith.constant 0 : index
    %235 = vector.load %arg9[%c80_65, %c0_66] : memref<128x128xbf16, #tpu.memory_space<vmem>>, vector<16x128xbf16>
    %cst_67 = arith.constant dense<0.000000e+00> : vector<16x128xf32>
    %236 = tpu.matmul %234, %235, %cst_67 {dimension_numbers = #tpu.dot_dimension_numbers<[1], [0], [0], [1], [0, 0, 1, 1], [], []>} : vector<16x16xbf16>, vector<16x128xbf16>, vector<16x128xf32> -> vector<16x128xf32>
    %237 = arith.addf %232, %236 : vector<16x128xf32>
    %238 = vector.extract_strided_slice %208 {offsets = [6, 0, 0], sizes = [1, 16, 16], strides = [1, 1, 1]} : vector<8x16x16xbf16> to vector<1x16x16xbf16>
    %239 = vector.shape_cast %238 : vector<1x16x16xbf16> to vector<16x16xbf16>
    %c96_68 = arith.constant 96 : index
    %c0_69 = arith.constant 0 : index
    %240 = vector.load %arg9[%c96_68, %c0_69] : memref<128x128xbf16, #tpu.memory_space<vmem>>, vector<16x128xbf16>
    %cst_70 = arith.constant dense<0.000000e+00> : vector<16x128xf32>
    %241 = tpu.matmul %239, %240, %cst_70 {dimension_numbers = #tpu.dot_dimension_numbers<[1], [0], [0], [1], [0, 0, 1, 1], [], []>} : vector<16x16xbf16>, vector<16x128xbf16>, vector<16x128xf32> -> vector<16x128xf32>
    %242 = arith.addf %237, %241 : vector<16x128xf32>
    %243 = vector.extract_strided_slice %208 {offsets = [7, 0, 0], sizes = [1, 16, 16], strides = [1, 1, 1]} : vector<8x16x16xbf16> to vector<1x16x16xbf16>
    %244 = vector.shape_cast %243 : vector<1x16x16xbf16> to vector<16x16xbf16>
    %c112_71 = arith.constant 112 : index
    %c0_72 = arith.constant 0 : index
    %245 = vector.load %arg9[%c112_71, %c0_72] : memref<128x128xbf16, #tpu.memory_space<vmem>>, vector<16x128xbf16>
    %cst_73 = arith.constant dense<0.000000e+00> : vector<16x128xf32>
    %246 = tpu.matmul %244, %245, %cst_73 {dimension_numbers = #tpu.dot_dimension_numbers<[1], [0], [0], [1], [0, 0, 1, 1], [], []>} : vector<16x16xbf16>, vector<16x128xbf16>, vector<16x128xf32> -> vector<16x128xf32>
    %247 = arith.addf %242, %246 : vector<16x128xf32>
    %248 = tpu.concatenate %133, %247 in 0 : vector<16x128xf32>, vector<16x128xf32> -> vector<32x128xf32>
    %c0_74 = arith.constant 0 : index
    %c0_75 = arith.constant 0 : index
    %249 = vector.load %arg10[%c0_74, %c0_75] : memref<1x128xf32, #tpu.memory_space<vmem>>, vector<1x128xf32>
    %250 = vector.broadcast %249 : vector<1x128xf32> to vector<32x128xf32>
    %251 = arith.addf %248, %250 : vector<32x128xf32>
    %252 = arith.addf %4, %251 : vector<32x128xf32>
    %c0_76 = arith.constant 0 : index
    %c0_77 = arith.constant 0 : index
    %253 = vector.load %arg11[%c0_76, %c0_77] : memref<1x128xf32, #tpu.memory_space<vmem>>, vector<1x128xf32>
    %c0_78 = arith.constant 0 : index
    %c0_79 = arith.constant 0 : index
    %254 = vector.load %arg12[%c0_78, %c0_79] : memref<1x128xf32, #tpu.memory_space<vmem>>, vector<1x128xf32>
    %cst_80 = arith.constant dense<0.000000e+00> : vector<32xf32>
    %255 = vector.multi_reduction <add>, %252, %cst_80 [1] : vector<32x128xf32> to vector<32xf32>
    %256 = vector.shape_cast %255 : vector<32xf32> to vector<32x1xf32>
    %cst_81 = arith.constant 1.280000e+02 : f32
    %257 = vector.broadcast %cst_81 : f32 to vector<32x1xf32>
    %258 = arith.divf %256, %257 : vector<32x1xf32>
    %259 = vector.broadcast %258 : vector<32x1xf32> to vector<32x128xf32>
    %260 = arith.subf %252, %259 : vector<32x128xf32>
    %261 = arith.mulf %260, %260 : vector<32x128xf32>
    %cst_82 = arith.constant dense<0.000000e+00> : vector<32xf32>
    %262 = vector.multi_reduction <add>, %261, %cst_82 [1] : vector<32x128xf32> to vector<32xf32>
    %263 = vector.shape_cast %262 : vector<32xf32> to vector<32x1xf32>
    %cst_83 = arith.constant 1.270000e+02 : f32
    %264 = vector.broadcast %cst_83 : f32 to vector<32x1xf32>
    %265 = arith.divf %263, %264 : vector<32x1xf32>
    %266 = math.sqrt %265 : vector<32x1xf32>
    %cst_84 = arith.constant 9.99999997E-7 : f32
    %267 = vector.broadcast %cst_84 : f32 to vector<32x1xf32>
    %268 = arith.addf %266, %267 : vector<32x1xf32>
    %cst_85 = arith.constant 1.000000e+00 : f32
    %269 = vector.broadcast %cst_85 : f32 to vector<32x1xf32>
    %270 = arith.divf %269, %268 : vector<32x1xf32>
    %271 = vector.broadcast %258 : vector<32x1xf32> to vector<32x128xf32>
    %272 = arith.subf %252, %271 : vector<32x128xf32>
    %273 = vector.broadcast %253 : vector<1x128xf32> to vector<32x128xf32>
    %274 = arith.mulf %273, %272 : vector<32x128xf32>
    %275 = vector.broadcast %270 : vector<32x1xf32> to vector<32x128xf32>
    %276 = arith.mulf %274, %275 : vector<32x128xf32>
    %277 = vector.broadcast %254 : vector<1x128xf32> to vector<32x128xf32>
    %278 = arith.addf %276, %277 : vector<32x128xf32>
    %279 = arith.truncf %278 : vector<32x128xf32> to vector<32x128xbf16>
    %c0_86 = arith.constant 0 : index
    %c0_87 = arith.constant 0 : index
    %280 = vector.load %arg13[%c0_86, %c0_87] : memref<128x512xbf16, #tpu.memory_space<vmem>>, vector<128x512xbf16>
    %cst_88 = arith.constant dense<0.000000e+00> : vector<32x512xf32>
    %281 = tpu.matmul %279, %280, %cst_88 {dimension_numbers = #tpu.dot_dimension_numbers<[1], [0], [0], [1], [0, 0, 1, 1], [], []>} : vector<32x128xbf16>, vector<128x512xbf16>, vector<32x512xf32> -> vector<32x512xf32>
    %c0_89 = arith.constant 0 : index
    %c0_90 = arith.constant 0 : index
    %282 = vector.load %arg14[%c0_89, %c0_90] : memref<1x512xf32, #tpu.memory_space<vmem>>, vector<1x512xf32>
    %283 = vector.broadcast %282 : vector<1x512xf32> to vector<32x512xf32>
    %284 = arith.addf %281, %283 : vector<32x512xf32>
    %cst_91 = arith.constant 0.000000e+00 : f32
    %285 = vector.broadcast %cst_91 : f32 to vector<32x512xf32>
    %286 = arith.maximumf %284, %285 : vector<32x512xf32>
    %287 = arith.truncf %286 : vector<32x512xf32> to vector<32x512xbf16>
    %c0_92 = arith.constant 0 : index
    %c0_93 = arith.constant 0 : index
    %288 = vector.load %arg15[%c0_92, %c0_93] : memref<512x128xbf16, #tpu.memory_space<vmem>>, vector<512x128xbf16>
    %cst_94 = arith.constant dense<0.000000e+00> : vector<32x128xf32>
    %289 = tpu.matmul %287, %288, %cst_94 {dimension_numbers = #tpu.dot_dimension_numbers<[1], [0], [0], [1], [0, 0, 1, 1], [], []>} : vector<32x512xbf16>, vector<512x128xbf16>, vector<32x128xf32> -> vector<32x128xf32>
    %c0_95 = arith.constant 0 : index
    %c0_96 = arith.constant 0 : index
    %290 = vector.load %arg16[%c0_95, %c0_96] : memref<1x128xf32, #tpu.memory_space<vmem>>, vector<1x128xf32>
    %291 = vector.broadcast %290 : vector<1x128xf32> to vector<32x128xf32>
    %292 = arith.addf %289, %291 : vector<32x128xf32>
    %293 = arith.addf %278, %292 : vector<32x128xf32>
    %c0_97 = arith.constant 0 : index
    %c0_98 = arith.constant 0 : index
    %294 = vector.load %arg17[%c0_97, %c0_98] : memref<1x128xf32, #tpu.memory_space<vmem>>, vector<1x128xf32>
    %c0_99 = arith.constant 0 : index
    %c0_100 = arith.constant 0 : index
    %295 = vector.load %arg18[%c0_99, %c0_100] : memref<1x128xf32, #tpu.memory_space<vmem>>, vector<1x128xf32>
    %cst_101 = arith.constant dense<0.000000e+00> : vector<32xf32>
    %296 = vector.multi_reduction <add>, %293, %cst_101 [1] : vector<32x128xf32> to vector<32xf32>
    %297 = vector.shape_cast %296 : vector<32xf32> to vector<32x1xf32>
    %cst_102 = arith.constant 1.280000e+02 : f32
    %298 = vector.broadcast %cst_102 : f32 to vector<32x1xf32>
    %299 = arith.divf %297, %298 : vector<32x1xf32>
    %300 = vector.broadcast %299 : vector<32x1xf32> to vector<32x128xf32>
    %301 = arith.subf %293, %300 : vector<32x128xf32>
    %302 = arith.mulf %301, %301 : vector<32x128xf32>
    %cst_103 = arith.constant dense<0.000000e+00> : vector<32xf32>
    %303 = vector.multi_reduction <add>, %302, %cst_103 [1] : vector<32x128xf32> to vector<32xf32>
    %304 = vector.shape_cast %303 : vector<32xf32> to vector<32x1xf32>
    %cst_104 = arith.constant 1.270000e+02 : f32
    %305 = vector.broadcast %cst_104 : f32 to vector<32x1xf32>
    %306 = arith.divf %304, %305 : vector<32x1xf32>
    %307 = math.sqrt %306 : vector<32x1xf32>
    %cst_105 = arith.constant 9.99999997E-7 : f32
    %308 = vector.broadcast %cst_105 : f32 to vector<32x1xf32>
    %309 = arith.addf %307, %308 : vector<32x1xf32>
    %cst_106 = arith.constant 1.000000e+00 : f32
    %310 = vector.broadcast %cst_106 : f32 to vector<32x1xf32>
    %311 = arith.divf %310, %309 : vector<32x1xf32>
    %312 = vector.broadcast %299 : vector<32x1xf32> to vector<32x128xf32>
    %313 = arith.subf %293, %312 : vector<32x128xf32>
    %314 = vector.broadcast %294 : vector<1x128xf32> to vector<32x128xf32>
    %315 = arith.mulf %314, %313 : vector<32x128xf32>
    %316 = vector.broadcast %311 : vector<32x1xf32> to vector<32x128xf32>
    %317 = arith.mulf %315, %316 : vector<32x128xf32>
    %318 = vector.broadcast %295 : vector<1x128xf32> to vector<32x128xf32>
    %319 = arith.addf %317, %318 : vector<32x128xf32>
    %320 = vector.extract_strided_slice %319 {offsets = [0, 0], sizes = [16, 128], strides = [1, 1]} : vector<32x128xf32> to vector<16x128xf32>
    %c0_107 = arith.constant 0 : index
    %c0_108 = arith.constant 0 : index
    %c0_109 = arith.constant 0 : index
    %321 = vector.load %arg19[%c0_107, %c0_108, %c0_109] : memref<2x16x128xf32, #tpu.memory_space<vmem>>, vector<1x16x128xf32>
    %322 = vector.shape_cast %321 : vector<1x16x128xf32> to vector<16x128xf32>
    %323 = vector.shape_cast %320 : vector<16x128xf32> to vector<1x16x128xf32>
    tpu.vector_store %arg19[%c0_107, %c0_108, %c0_109], %323 {strides = array<i32>} : memref<2x16x128xf32, #tpu.memory_space<vmem>>, vector<1x16x128xf32>,
    %324 = vector.extract_strided_slice %319 {offsets = [16, 0], sizes = [16, 128], strides = [1, 1]} : vector<32x128xf32> to vector<16x128xf32>
    %c1_110 = arith.constant 1 : index
    %c0_111 = arith.constant 0 : index
    %c0_112 = arith.constant 0 : index
    %325 = vector.load %arg19[%c1_110, %c0_111, %c0_112] : memref<2x16x128xf32, #tpu.memory_space<vmem>>, vector<1x16x128xf32>
    %326 = vector.shape_cast %325 : vector<1x16x128xf32> to vector<16x128xf32>
    %327 = vector.shape_cast %324 : vector<16x128xf32> to vector<1x16x128xf32>
    tpu.vector_store %arg19[%c1_110, %c0_111, %c0_112], %327 {strides = array<i32>} : memref<2x16x128xf32, #tpu.memory_space<vmem>>, vector<1x16x128xf32>,
    return
  }
  func.func @transform_0(%arg0: i32, %arg1: i32) -> (i32, i32, i32) {
    %c0_i32 = arith.constant 0 : i32
    %c0_i32_0 = arith.constant 0 : i32
    return %arg0, %arg1, %c0_i32 : i32, i32, i32
  }
  func.func @transform_1(%arg0: i32, %arg1: i32) -> (i32, i32) {
    %c0_i32 = arith.constant 0 : i32
    %c0_i32_0 = arith.constant 0 : i32
    return %arg0, %c0_i32 : i32, i32
  }
  func.func @transform_2(%arg0: i32, %arg1: i32) -> (i32, i32, i32) {
    %c0_i32 = arith.constant 0 : i32
    %c0_i32_0 = arith.constant 0 : i32
    %c0_i32_1 = arith.constant 0 : i32
    return %arg0, %c0_i32, %c0_i32_0 : i32, i32, i32
  }
  func.func @transform_3(%arg0: i32, %arg1: i32) -> (i32, i32) {
    %c0_i32 = arith.constant 0 : i32
    %c0_i32_0 = arith.constant 0 : i32
    %c0_i32_1 = arith.constant 0 : i32
    return %c0_i32, %c0_i32_0 : i32, i32
  }
  func.func @transform_4(%arg0: i32, %arg1: i32) -> (i32, i32) {
    %c0_i32 = arith.constant 0 : i32
    %c0_i32_0 = arith.constant 0 : i32
    %c0_i32_1 = arith.constant 0 : i32
    return %c0_i32, %c0_i32_0 : i32, i32
  }
  func.func @transform_5(%arg0: i32, %arg1: i32) -> (i32, i32) {
    %c0_i32 = arith.constant 0 : i32
    %c0_i32_0 = arith.constant 0 : i32
    %c0_i32_1 = arith.constant 0 : i32
    return %c0_i32, %c0_i32_0 : i32, i32
  }
  func.func @transform_6(%arg0: i32, %arg1: i32) -> (i32, i32) {
    %c0_i32 = arith.constant 0 : i32
    %c0_i32_0 = arith.constant 0 : i32
    %c0_i32_1 = arith.constant 0 : i32
    return %c0_i32, %c0_i32_0 : i32, i32
  }
  func.func @transform_7(%arg0: i32, %arg1: i32) -> (i32, i32) {
    %c0_i32 = arith.constant 0 : i32
    %c0_i32_0 = arith.constant 0 : i32
    %c0_i32_1 = arith.constant 0 : i32
    return %c0_i32, %c0_i32_0 : i32, i32
  }
  func.func @transform_8(%arg0: i32, %arg1: i32) -> (i32, i32) {
    %c0_i32 = arith.constant 0 : i32
    %c0_i32_0 = arith.constant 0 : i32
    %c0_i32_1 = arith.constant 0 : i32
    return %c0_i32, %c0_i32_0 : i32, i32
  }
  func.func @transform_9(%arg0: i32, %arg1: i32) -> (i32, i32) {
    %c0_i32 = arith.constant 0 : i32
    %c0_i32_0 = arith.constant 0 : i32
    %c0_i32_1 = arith.constant 0 : i32
    return %c0_i32, %c0_i32_0 : i32, i32
  }
  func.func @transform_10(%arg0: i32, %arg1: i32) -> (i32, i32) {
    %c0_i32 = arith.constant 0 : i32
    %c0_i32_0 = arith.constant 0 : i32
    %c0_i32_1 = arith.constant 0 : i32
    return %c0_i32, %c0_i32_0 : i32, i32
  }
  func.func @transform_11(%arg0: i32, %arg1: i32) -> (i32, i32) {
    %c0_i32 = arith.constant 0 : i32
    %c0_i32_0 = arith.constant 0 : i32
    %c0_i32_1 = arith.constant 0 : i32
    return %c0_i32, %c0_i32_0 : i32, i32
  }
  func.func @transform_12(%arg0: i32, %arg1: i32) -> (i32, i32) {
    %c0_i32 = arith.constant 0 : i32
    %c0_i32_0 = arith.constant 0 : i32
    %c0_i32_1 = arith.constant 0 : i32
    return %c0_i32, %c0_i32_0 : i32, i32
  }
  func.func @transform_13(%arg0: i32, %arg1: i32) -> (i32, i32) {
    %c0_i32 = arith.constant 0 : i32
    %c0_i32_0 = arith.constant 0 : i32
    %c0_i32_1 = arith.constant 0 : i32
    return %c0_i32, %c0_i32_0 : i32, i32
  }
  func.func @transform_14(%arg0: i32, %arg1: i32) -> (i32, i32) {
    %c0_i32 = arith.constant 0 : i32
    %c0_i32_0 = arith.constant 0 : i32
    %c0_i32_1 = arith.constant 0 : i32
    return %c0_i32, %c0_i32_0 : i32, i32
  }
  func.func @transform_15(%arg0: i32, %arg1: i32) -> (i32, i32) {
    %c0_i32 = arith.constant 0 : i32
    %c0_i32_0 = arith.constant 0 : i32
    %c0_i32_1 = arith.constant 0 : i32
    return %c0_i32, %c0_i32_0 : i32, i32
  }
  func.func @transform_16(%arg0: i32, %arg1: i32) -> (i32, i32) {
    %c0_i32 = arith.constant 0 : i32
    %c0_i32_0 = arith.constant 0 : i32
    %c0_i32_1 = arith.constant 0 : i32
    return %c0_i32, %c0_i32_0 : i32, i32
  }
  func.func @transform_17(%arg0: i32, %arg1: i32) -> (i32, i32, i32) {
    %c0_i32 = arith.constant 0 : i32
    %c0_i32_0 = arith.constant 0 : i32
    return %arg0, %arg1, %c0_i32 : i32, i32, i32
  }
}

</mosaic_0001>

<llo_original>
// kernel: tpu_custom_call.1
$region0: #{tpu_custom_call.1}
  #allocation0 [shape = 'u32[]', space=smem, size = 0x4, offset = 0x4, fixed_abs, tag = 'smem constant byte address 0x4 - core index']
  #allocation1 [shape = 'u32[144,128]{1,0:T(1,128)}', space=vmem, size = 0x12000, scoped, tag = 'internal scratch']
  %s0 = inlined_call_operand.hbm [shape: f32[2,16,128], index: 0, kind: input, shape index: {}]
  %s1 = inlined_call_operand.hbm [shape: f32[32,128], index: 1, kind: input, shape index: {}]
  %s2 = inlined_call_operand.vmem [shape: f32[2,1,16], index: 2, kind: input, shape index: {}]
  %s3 = inlined_call_operand.hbm [shape: bf16[128,128], index: 3, kind: input, shape index: {}]
  %s4 = inlined_call_operand.vmem [shape: f32[1,128], index: 4, kind: input, shape index: {}]
  %s5 = inlined_call_operand.hbm [shape: bf16[128,256], index: 5, kind: input, shape index: {}]
  %s6 = inlined_call_operand.vmem [shape: f32[1,256], index: 6, kind: input, shape index: {}]
  %s7 = inlined_call_operand.hbm [shape: bf16[128,128], index: 7, kind: input, shape index: {}]
  %s8 = inlined_call_operand.vmem [shape: f32[1,128], index: 8, kind: input, shape index: {}]
  %s9 = inlined_call_operand.vmem [shape: f32[1,128], index: 9, kind: input, shape index: {}]
  %s10 = inlined_call_operand.vmem [shape: f32[1,128], index: 10, kind: input, shape index: {}]
  %s11 = inlined_call_operand.hbm [shape: bf16[128,512], index: 11, kind: input, shape index: {}]
  %s12 = inlined_call_operand.vmem [shape: f32[1,512], index: 12, kind: input, shape index: {}]
  %s13 = inlined_call_operand.hbm [shape: bf16[512,128], index: 13, kind: input, shape index: {}]
  %s14 = inlined_call_operand.vmem [shape: f32[1,128], index: 14, kind: input, shape index: {}]
  %s15 = inlined_call_operand.vmem [shape: f32[1,128], index: 15, kind: input, shape index: {}]
  %s16 = inlined_call_operand.vmem [shape: f32[1,128], index: 16, kind: input, shape index: {}]
  %s17 = inlined_call_operand.hbm [shape: f32[2,16,128], index: 17, kind: output, shape index: {}]
  %s18 = sld [smem:[#allocation0]]
  $region106: #{tpu_custom_call.1} parent=0
    _
  %s20 = ssub.s32 1, %s18
  %s21 = scalar_select 0, %s20, %s18
  $region1: #{tpu_custom_call.1} parent=0
    #allocation2 [shape = 'u8[16384]{0}', space=vmem, size = 0x4000, scoped, tag = 'input window, operand 0, single buffered']
    #allocation3 [shape = 's32[1]{0}', space=sflag, size = 0x4, scoped, tag = 'scoped memory for tpu_custom_call.1']
    #allocation4 [shape = 's32[1]{0}', space=sflag, size = 0x4, scoped, tag = 'scoped memory for tpu_custom_call.1']
    #allocation5 [shape = 'u8[16384]{0}', space=vmem, size = 0x4000, scoped, tag = 'input window, operand 1, single buffered']
    #allocation6 [shape = 's32[1]{0}', space=sflag, size = 0x4, scoped, tag = 'scoped memory for tpu_custom_call.1']
    #allocation7 [shape = 'u8[32768]{0}', space=vmem, size = 0x8000, scoped, tag = 'input window, operand 3, single buffered']
    #allocation8 [shape = 'u8[65536]{0}', space=vmem, size = 0x10000, scoped, tag = 'input window, operand 5, single buffered']
    #allocation9 [shape = 's32[1]{0}', space=sflag, size = 0x4, scoped, tag = 'scoped memory for tpu_custom_call.1']
    #allocation10 [shape = 'u8[32768]{0}', space=vmem, size = 0x8000, scoped, tag = 'input window, operand 7, single buffered']
    #allocation11 [shape = 'u8[131072]{0}', space=vmem, size = 0x20000, scoped, tag = 'input window, operand 11, single buffered']
    #allocation12 [shape = 's32[1]{0}', space=sflag, size = 0x4, scoped, tag = 'scoped memory for tpu_custom_call.1']
    #allocation13 [shape = 'u8[131072]{0}', space=vmem, size = 0x20000, scoped, tag = 'input window, operand 13, single buffered']
    #allocation14 [shape = 'u8[16384]{0}', space=vmem, size = 0x4000, scoped, tag = 'output window, operand 0, single buffered']
    %22 = vsyncpa [#allocation3], 0
    %23 = vsyncpa [#allocation6], 0
    %24 = vsyncpa [#allocation9], 0
    %25 = vsyncpa [#allocation12], 0
    %26 = vsyncpa [#allocation4], 0
    // Predicated region
    $region2: #{tpu_custom_call.1} parent=1 // pred_check
      _
    $region3: #{tpu_custom_call.1} parent=1 // pred_check_branch
      %28 = sbr.rel (0) target = $region5
    $region4: #{tpu_custom_call.1} parent=1 // pred_region
      %s30 = ssub.s32 512, 512
      %31 = vsyncadd [#allocation3], %s30
      %s32 = sshll.u32 [#allocation2], 4
      %s33 = int_to_ptr.vmem [resolvable:$true] %s32
      %38 = dma.hbm_to_vmem [thread:$0]  %s0, 512, %s33, [#allocation3], 128, 128, 8
    $region5: #{tpu_custom_call.1} parent=1 // pred_fallthru
      _
    // Predicated region
    $region6: #{tpu_custom_call.1} parent=1 // pred_check
      _
    $region7: #{tpu_custom_call.1} parent=1 // pred_check_branch
      %40 = sbr.rel (0) target = $region9
    $region8: #{tpu_custom_call.1} parent=1 // pred_region
      %s42 = ssub.s32 512, 512
      %43 = vsyncadd [#allocation6], %s42
      %s44 = sshll.u32 [#allocation5], 4
      %s45 = int_to_ptr.vmem [resolvable:$true] %s44
      %50 = dma.hbm_to_vmem [thread:$0]  %s1, 512, %s45, [#allocation6], 128, 128, 8
    $region9: #{tpu_custom_call.1} parent=1 // pred_fallthru
      _
    // Predicated region
    $region10: #{tpu_custom_call.1} parent=1 // pred_check
      _
    $region11: #{tpu_custom_call.1} parent=1 // pred_check_branch
      %52 = sbr.rel (0) target = $region13
    $region12: #{tpu_custom_call.1} parent=1 // pred_region
      _
    $region13: #{tpu_custom_call.1} parent=1 // pred_fallthru
      _
    // Predicated region
    $region14: #{tpu_custom_call.1} parent=1 // pred_check
      _
    $region15: #{tpu_custom_call.1} parent=1 // pred_check_branch
      %54 = sbr.rel (0) target = $region17
    $region16: #{tpu_custom_call.1} parent=1 // pred_region
      %s56 = ssub.s32 1024, 1024
      %57 = vsyncadd [#allocation6], %s56
      %s58 = sshll.u32 [#allocation7], 4
      %s59 = int_to_ptr.vmem [resolvable:$true] %s58
      %64 = dma.hbm_to_vmem [thread:$0]  %s3, 1024, %s59, [#allocation6], 64, 64, 4
    $region17: #{tpu_custom_call.1} parent=1 // pred_fallthru
      _
    // Predicated region
    $region18: #{tpu_custom_call.1} parent=1 // pred_check
      _
    $region19: #{tpu_custom_call.1} parent=1 // pred_check_branch
      %66 = sbr.rel (0) target = $region21
    $region20: #{tpu_custom_call.1} parent=1 // pred_region
      _
    $region21: #{tpu_custom_call.1} parent=1 // pred_fallthru
      _
    // Predicated region
    $region22: #{tpu_custom_call.1} parent=1 // pred_check
      _
    $region23: #{tpu_custom_call.1} parent=1 // pred_check_branch
      %68 = sbr.rel (0) target = $region25
    $region24: #{tpu_custom_call.1} parent=1 // pred_region
      %s70 = ssub.s32 2048, 2048
      %71 = vsyncadd [#allocation9], %s70
      %s72 = sshll.u32 [#allocation8], 4
      %s73 = int_to_ptr.vmem [resolvable:$true] %s72
      %78 = dma.hbm_to_vmem [thread:$0]  %s5, 2048, %s73, [#allocation9], 128, 128, 8
    $region25: #{tpu_custom_call.1} parent=1 // pred_fallthru
      _
    // Predicated region
    $region26: #{tpu_custom_call.1} parent=1 // pred_check
      _
    $region27: #{tpu_custom_call.1} parent=1 // pred_check_branch
      %80 = sbr.rel (0) target = $region29
    $region28: #{tpu_custom_call.1} parent=1 // pred_region
      _
    $region29: #{tpu_custom_call.1} parent=1 // pred_fallthru
      _
    // Predicated region
    $region30: #{tpu_custom_call.1} parent=1 // pred_check
      _
    $region31: #{tpu_custom_call.1} parent=1 // pred_check_branch
      %82 = sbr.rel (0) target = $region33
    $region32: #{tpu_custom_call.1} parent=1 // pred_region
      %s84 = ssub.s32 1024, 1024
      %85 = vsyncadd [#allocation9], %s84
      %s86 = sshll.u32 [#allocation10], 4
      %s87 = int_to_ptr.vmem [resolvable:$true] %s86
      %92 = dma.hbm_to_vmem [thread:$0]  %s7, 1024, %s87, [#allocation9], 64, 64, 4
    $region33: #{tpu_custom_call.1} parent=1 // pred_fallthru
      _
    // Predicated region
    $region34: #{tpu_custom_call.1} parent=1 // pred_check
      _
    $region35: #{tpu_custom_call.1} parent=1 // pred_check_branch
      %94 = sbr.rel (0) target = $region37
    $region36: #{tpu_custom_call.1} parent=1 // pred_region
      _
    $region37: #{tpu_custom_call.1} parent=1 // pred_fallthru
      _
    // Predicated region
    $region38: #{tpu_custom_call.1} parent=1 // pred_check
      _
    $region39: #{tpu_custom_call.1} parent=1 // pred_check_branch
      %96 = sbr.rel (0) target = $region41
    $region40: #{tpu_custom_call.1} parent=1 // pred_region
      _
    $region41: #{tpu_custom_call.1} parent=1 // pred_fallthru
      _
    // Predicated region
    $region42: #{tpu_custom_call.1} parent=1 // pred_check
      _
    $region43: #{tpu_custom_call.1} parent=1 // pred_check_branch
      %98 = sbr.rel (0) target = $region45
    $region44: #{tpu_custom_call.1} parent=1 // pred_region
      _
    $region45: #{tpu_custom_call.1} parent=1 // pred_fallthru
      _
    // Predicated region
    $region46: #{tpu_custom_call.1} parent=1 // pred_check
      _
    $region47: #{tpu_custom_call.1} parent=1 // pred_check_branch
      %100 = sbr.rel (0) target = $region49
    $region48: #{tpu_custom_call.1} parent=1 // pred_region
      %s102 = ssub.s32 4096, 4096
      %103 = vsyncadd [#allocation12], %s102
      %s104 = sshll.u32 [#allocation11], 4
      %s105 = int_to_ptr.vmem [resolvable:$true] %s104
      %110 = dma.hbm_to_vmem [thread:$0]  %s11, 4096, %s105, [#allocation12], 256, 256, 16
    $region49: #{tpu_custom_call.1} parent=1 // pred_fallthru
      _
    // Predicated region
    $region50: #{tpu_custom_call.1} parent=1 // pred_check
      _
    $region51: #{tpu_custom_call.1} parent=1 // pred_check_branch
      %112 = sbr.rel (0) target = $region53
    $region52: #{tpu_custom_call.1} parent=1 // pred_region
      _
    $region53: #{tpu_custom_call.1} parent=1 // pred_fallthru
      _
    // Predicated region
    $region54: #{tpu_custom_call.1} parent=1 // pred_check
      _
    $region55: #{tpu_custom_call.1} parent=1 // pred_check_branch
      %114 = sbr.rel (0) target = $region57
    $region56: #{tpu_custom_call.1} parent=1 // pred_region
      %s116 = ssub.s32 4096, 4096
      %117 = vsyncadd [#allocation12], %s116
      %s118 = sshll.u32 [#allocation13], 4
      %s119 = int_to_ptr.vmem [resolvable:$true] %s118
      %124 = dma.hbm_to_vmem [thread:$0]  %s13, 4096, %s119, [#allocation12], 64, 64, 4
    $region57: #{tpu_custom_call.1} parent=1 // pred_fallthru
      _
    // Predicated region
    $region58: #{tpu_custom_call.1} parent=1 // pred_check
      _
    $region59: #{tpu_custom_call.1} parent=1 // pred_check_branch
      %126 = sbr.rel (0) target = $region61
    $region60: #{tpu_custom_call.1} parent=1 // pred_region
      _
    $region61: #{tpu_custom_call.1} parent=1 // pred_fallthru
      _
    // Predicated region
    $region62: #{tpu_custom_call.1} parent=1 // pred_check
      _
    $region63: #{tpu_custom_call.1} parent=1 // pred_check_branch
      %128 = sbr.rel (0) target = $region65
    $region64: #{tpu_custom_call.1} parent=1 // pred_region
      _
    $region65: #{tpu_custom_call.1} parent=1 // pred_fallthru
      _
    // Predicated region
    $region66: #{tpu_custom_call.1} parent=1 // pred_check
      _
    $region67: #{tpu_custom_call.1} parent=1 // pred_check_branch
      %130 = sbr.rel (0) target = $region69
    $region68: #{tpu_custom_call.1} parent=1 // pred_region
      _
    $region69: #{tpu_custom_call.1} parent=1 // pred_fallthru
      _
    // Predicated region
    $region70: #{tpu_custom_call.1} parent=1 // pred_check
      _
    $region71: #{tpu_custom_call.1} parent=1 // pred_check_branch
      %132 = sbr.rel (0) target = $region73
    $region72: #{tpu_custom_call.1} parent=1 // pred_region
      %133 = dma.done [#allocation3], 512
    $region73: #{tpu_custom_call.1} parent=1 // pred_fallthru
      _
    // Predicated region
    $region74: #{tpu_custom_call.1} parent=1 // pred_check
      _
    $region75: #{tpu_custom_call.1} parent=1 // pred_check_branch
      %135 = sbr.rel (0) target = $region77
    $region76: #{tpu_custom_call.1} parent=1 // pred_region
      %136 = dma.done [#allocation6], 512
    $region77: #{tpu_custom_call.1} parent=1 // pred_fallthru
      _
    // Predicated region
    $region78: #{tpu_custom_call.1} parent=1 // pred_check
      _
    $region79: #{tpu_custom_call.1} parent=1 // pred_check_branch
      %138 = sbr.rel (0) target = $region81
    $region80: #{tpu_custom_call.1} parent=1 // pred_region
      %139 = dma.done [#allocation6], 1024
    $region81: #{tpu_custom_call.1} parent=1 // pred_fallthru
      _
    // Predicated region
    $region82: #{tpu_custom_call.1} parent=1 // pred_check
      _
    $region83: #{tpu_custom_call.1} parent=1 // pred_check_branch
      %141 = sbr.rel (0) target = $region85
    $region84: #{tpu_custom_call.1} parent=1 // pred_region
      %142 = dma.done [#allocation9], 2048
    $region85: #{tpu_custom_call.1} parent=1 // pred_fallthru
      _
    // Predicated region
    $region86: #{tpu_custom_call.1} parent=1 // pred_check
      _
    $region87: #{tpu_custom_call.1} parent=1 // pred_check_branch
      %144 = sbr.rel (0) target = $region89
    $region88: #{tpu_custom_call.1} parent=1 // pred_region
      %145 = dma.done [#allocation9], 1024
    $region89: #{tpu_custom_call.1} parent=1 // pred_fallthru
      _
    // Predicated region
    $region90: #{tpu_custom_call.1} parent=1 // pred_check
      _
    $region91: #{tpu_custom_call.1} parent=1 // pred_check_branch
      %147 = sbr.rel (0) target = $region93
    $region92: #{tpu_custom_call.1} parent=1 // pred_region
      %148 = dma.done [#allocation12], 4096
    $region93: #{tpu_custom_call.1} parent=1 // pred_fallthru
      _
    // Predicated region
    $region94: #{tpu_custom_call.1} parent=1 // pred_check
      _
    $region95: #{tpu_custom_call.1} parent=1 // pred_check_branch
      %150 = sbr.rel (0) target = $region97
    $region96: #{tpu_custom_call.1} parent=1 // pred_region
      %151 = dma.done [#allocation12], 4096
    $region97: #{tpu_custom_call.1} parent=1 // pred_fallthru
      _
    %v153 = vld [vmem:[#allocation2] sm:$0xff]
    %v154 = vld [vmem:[#allocation2 + $0x8] sm:$0xff]
    %s155 = scalar_lea.vmem [#allocation2], 16
    %v156 = vld [vmem:[%s155] sm:$0xff]
    %v157 = vld [vmem:[%s155 + $0x8] sm:$0xff]
    %v158 = vld [vmem:[#allocation5] sm:$0xff]
    %v159 = vld [vmem:[#allocation5 + $0x8] sm:$0xff]
    %v160 = vld [vmem:[#allocation5 + $0x10] sm:$0xff]
    %v161 = vld [vmem:[#allocation5 + $0x18] sm:$0xff]
    %v162 = vpack.c.bf16 %v154, %v153
    %v163 = vpack.c.bf16 %v157, %v156
    %v164 = vpack.c.bf16 %v159, %v158
    %v165 = vpack.c.bf16 %v161, %v160
    %v166 = vld [vmem:[#allocation7] sm:$0xf]
    %v167 = vld [vmem:[#allocation7 + $0x4] sm:$0xf]
    %v168 = vld [vmem:[#allocation7 + $0x8] sm:$0xf]
    %v169 = vld [vmem:[#allocation7 + $0xc] sm:$0xf]
    %v170 = vld [vmem:[#allocation7 + $0x10] sm:$0xf]
    %v171 = vld [vmem:[#allocation7 + $0x14] sm:$0xf]
    %v172 = vld [vmem:[#allocation7 + $0x18] sm:$0xf]
    %v173 = vld [vmem:[#allocation7 + $0x1c] sm:$0xf]
    %v174 = vld [vmem:[#allocation7 + $0x20] sm:$0xf]
    %v175 = vld [vmem:[#allocation7 + $0x24] sm:$0xf]
    %v176 = vld [vmem:[#allocation7 + $0x28] sm:$0xf]
    %v177 = vld [vmem:[#allocation7 + $0x2c] sm:$0xf]
    %v178 = vld [vmem:[#allocation7 + $0x30] sm:$0xf]
    %v179 = vld [vmem:[#allocation7 + $0x34] sm:$0xf]
    %v180 = vld [vmem:[#allocation7 + $0x38] sm:$0xf]
    %v181 = vld [vmem:[#allocation7 + $0x3c] sm:$0xf]
    %v182 = vld [vmem:[%s4] sm:$0x1]
    %v184 = vlaneseq
    %v185 = vshrl.u32 %v184, 7
    %v186 = vsub.s32 0, %v185
    %v187 = vrot.slane %v182, %v186
    %v205 = vunpack.c.l.b16 %v166
    %v206 = vunpack.c.l.b16 %v167
    %v207 = vunpack.c.l.b16 %v168
    %v208 = vunpack.c.l.b16 %v169
    %v209 = vunpack.c.l.b16 %v170
    %v210 = vunpack.c.l.b16 %v171
    %v211 = vunpack.c.l.b16 %v172
    %v212 = vunpack.c.l.b16 %v173
    %v213 = vunpack.c.l.b16 %v174
    %v214 = vunpack.c.l.b16 %v175
    %v215 = vunpack.c.l.b16 %v176
    %v216 = vunpack.c.l.b16 %v177
    %v217 = vunpack.c.l.b16 %v178
    %v218 = vunpack.c.l.b16 %v179
    %v219 = vunpack.c.l.b16 %v180
    %v220 = vunpack.c.l.b16 %v181
    %v221 = vpack.c.b16 %v206, %v205
    %v222 = vpack.c.b16 %v208, %v207
    %v223 = vpack.c.b16 %v210, %v209
    %v224 = vpack.c.b16 %v212, %v211
    %v225 = vpack.c.b16 %v214, %v213
    %v226 = vpack.c.b16 %v216, %v215
    %v227 = vpack.c.b16 %v218, %v217
    %v228 = vpack.c.b16 %v220, %v219
    %237 = vmatprep.subr.bf16.mxu0 0
    %238 = vmatpush1.bf16.msra.mxu0 %v221
    %239 = vmatprep.subr.bf16.mxu0 0
    %240 = vmatpush1.bf16.msra.mxu0 %v222
    %241 = vmatprep.subr.bf16.mxu0 0
    %242 = vmatpush1.bf16.msra.mxu0 %v223
    %243 = vmatprep.subr.bf16.mxu0 0
    %244 = vmatpush1.bf16.msra.mxu0 %v224
    %245 = vmatprep.subr.bf16.mxu0 0
    %246 = vmatpush1.bf16.msra.mxu0 %v225
    %247 = vmatprep.subr.bf16.mxu0 0
    %248 = vmatpush1.bf16.msra.mxu0 %v226
    %249 = vmatprep.subr.bf16.mxu0 0
    %250 = vmatpush1.bf16.msra.mxu0 %v227
    %251 = vmatprep.subr.bf16.mxu0 0
    %252 = vmatpush1.bf16.msra.mxu0 %v228
    %253 = vmatprep.subr.bf16.mxu0 0
    %254 = vmatpush1.bf16.msra.mxu0 0
    %255 = vmatprep.subr.bf16.mxu0 0
    %256 = vmatpush1.bf16.msra.mxu0 0
    %257 = vmatprep.subr.bf16.mxu0 0
    %258 = vmatpush1.bf16.msra.mxu0 0
    %259 = vmatprep.subr.bf16.mxu0 0
    %260 = vmatpush1.bf16.msra.mxu0 0
    %261 = vmatprep.subr.bf16.mxu0 0
    %262 = vmatpush1.bf16.msra.mxu0 0
    %263 = vmatprep.subr.bf16.mxu0 0
    %264 = vmatpush1.bf16.msra.mxu0 0
    %265 = vmatprep.subr.bf16.mxu0 0
    %266 = vmatpush1.bf16.msra.mxu0 0
    %267 = vmatprep.subr.bf16.mxu0 0
    %268 = vmatpush1.bf16.msra.mxu0 0
    %269 = vmatprep.mubr.bf16.mxu0 0
    %270 = vmatmul.mubr.bf16.gmra.mrb[0].mxu0 %v162
    %v271 = vpop.f32.mrb[0].mxu0
    %v272 = vadd.f32 %v187, %v271
    %v273 = vpop.f32.mrb[0].mxu0
    %v274 = vpop.f32.mrb[0].mxu0
    %v275 = vadd.f32 %v187, %v274
    %v276 = vpop.f32.mrb[0].mxu0
    %277 = vmatprep.mubr.bf16.mxu0 0
    %278 = vmatmul.mubr.bf16.gmra.mrb[0].mxu0 %v163
    %v279 = vpop.f32.mrb[0].mxu0
    %v280 = vadd.f32 %v187, %v279
    %v281 = vpop.f32.mrb[0].mxu0
    %v282 = vpop.f32.mrb[0].mxu0
    %v283 = vadd.f32 %v187, %v282
    %v284 = vpop.f32.mrb[0].mxu0
    %285 = vdwg.mxu0
    %v286 = vpack.c.bf16 %v275, %v272
    %v287 = vpack.c.bf16 %v283, %v280
    %v288 = vld [vmem:[#allocation8] sm:$0xff]
    %v289 = vld [vmem:[#allocation8 + $0x8] sm:$0xff]
    %v290 = vld [vmem:[#allocation8 + $0x10] sm:$0xff]
    %v291 = vld [vmem:[#allocation8 + $0x18] sm:$0xff]
    %v292 = vld [vmem:[#allocation8 + $0x20] sm:$0xff]
    %v293 = vld [vmem:[#allocation8 + $0x28] sm:$0xff]
    %v294 = vld [vmem:[#allocation8 + $0x30] sm:$0xff]
    %v295 = vld [vmem:[#allocation8 + $0x38] sm:$0xff]
    %v296 = vld [vmem:[#allocation8 + $0x40] sm:$0xff]
    %v297 = vld [vmem:[#allocation8 + $0x48] sm:$0xff]
    %v298 = vld [vmem:[#allocation8 + $0x50] sm:$0xff]
    %v299 = vld [vmem:[#allocation8 + $0x58] sm:$0xff]
    %v300 = vld [vmem:[#allocation8 + $0x60] sm:$0xff]
    %v301 = vld [vmem:[#allocation8 + $0x68] sm:$0xff]
    %v302 = vld [vmem:[#allocation8 + $0x70] sm:$0xff]
    %v303 = vld [vmem:[#allocation8 + $0x78] sm:$0xff]
    %v304 = vld [vmem:[%s6] sm:$0x3]
    %v306 = vlaneseq
    %v307 = vshrl.u32 %v306, 7
    %v308 = vsub.s32 0, %v307
    %v309 = vrot.slane %v304, %v308
    %v310 = vlaneseq
    %v311 = vshrl.u32 %v310, 7
    %v312 = vsub.s32 1, %v311
    %v313 = vrot.slane %v304, %v312
    %v332 = vunpack.c.l.b16 %v288
    %v333 = vunpack.c.h.b16 %v288
    %v334 = vunpack.c.l.b16 %v289
    %v335 = vunpack.c.h.b16 %v289
    %v336 = vunpack.c.l.b16 %v290
    %v337 = vunpack.c.h.b16 %v290
    %v338 = vunpack.c.l.b16 %v291
    %v339 = vunpack.c.h.b16 %v291
    %v340 = vunpack.c.l.b16 %v292
    %v341 = vunpack.c.h.b16 %v292
    %v342 = vunpack.c.l.b16 %v293
    %v343 = vunpack.c.h.b16 %v293
    %v344 = vunpack.c.l.b16 %v294
    %v345 = vunpack.c.h.b16 %v294
    %v346 = vunpack.c.l.b16 %v295
    %v347 = vunpack.c.h.b16 %v295
    %v348 = vunpack.c.l.b16 %v296
    %v349 = vunpack.c.h.b16 %v296
    %v350 = vunpack.c.l.b16 %v297
    %v351 = vunpack.c.h.b16 %v297
    %v352 = vunpack.c.l.b16 %v298
    %v353 = vunpack.c.h.b16 %v298
    %v354 = vunpack.c.l.b16 %v299
    %v355 = vunpack.c.h.b16 %v299
    %v356 = vunpack.c.l.b16 %v300
    %v357 = vunpack.c.h.b16 %v300
    %v358 = vunpack.c.l.b16 %v301
    %v359 = vunpack.c.h.b16 %v301
    %v360 = vunpack.c.l.b16 %v302
    %v361 = vunpack.c.h.b16 %v302
    %v362 = vunpack.c.l.b16 %v303
    %v363 = vunpack.c.h.b16 %v303
    %v364 = vpack.c.b16 %v334, %v332
    %v365 = vpack.c.b16 %v335, %v333
    %v366 = vpack.c.b16 %v338, %v336
    %v367 = vpack.c.b16 %v339, %v337
    %v368 = vpack.c.b16 %v342, %v340
    %v369 = vpack.c.b16 %v343, %v341
    %v370 = vpack.c.b16 %v346, %v344
    %v371 = vpack.c.b16 %v347, %v345
    %v372 = vpack.c.b16 %v350, %v348
    %v373 = vpack.c.b16 %v351, %v349
    %v374 = vpack.c.b16 %v354, %v352
    %v375 = vpack.c.b16 %v355, %v353
    %v376 = vpack.c.b16 %v358, %v356
    %v377 = vpack.c.b16 %v359, %v357
    %v378 = vpack.c.b16 %v362, %v360
    %v379 = vpack.c.b16 %v363, %v361
    %396 = vmatprep.subr.bf16.mxu0 %v365
    %397 = vmatpush1.bf16.msra.mxu0 %v364
    %398 = vmatprep.subr.bf16.mxu0 %v367
    %399 = vmatpush1.bf16.msra.mxu0 %v366
    %400 = vmatprep.subr.bf16.mxu0 %v369
    %401 = vmatpush1.bf16.msra.mxu0 %v368
    %402 = vmatprep.subr.bf16.mxu0 %v371
    %403 = vmatpush1.bf16.msra.mxu0 %v370
    %404 = vmatprep.subr.bf16.mxu0 %v373
    %405 = vmatpush1.bf16.msra.mxu0 %v372
    %406 = vmatprep.subr.bf16.mxu0 %v375
    %407 = vmatpush1.bf16.msra.mxu0 %v374
    %408 = vmatprep.subr.bf16.mxu0 %v377
    %409 = vmatpush1.bf16.msra.mxu0 %v376
    %410 = vmatprep.subr.bf16.mxu0 %v379
    %411 = vmatpush1.bf16.msra.mxu0 %v378
    %412 = vmatprep.subr.bf16.mxu0 0
    %413 = vmatpush1.bf16.msra.mxu0 0
    %414 = vmatprep.subr.bf16.mxu0 0
    %415 = vmatpush1.bf16.msra.mxu0 0
    %416 = vmatprep.subr.bf16.mxu0 0
    %417 = vmatpush1.bf16.msra.mxu0 0
    %418 = vmatprep.subr.bf16.mxu0 0
    %419 = vmatpush1.bf16.msra.mxu0 0
    %420 = vmatprep.subr.bf16.mxu0 0
    %421 = vmatpush1.bf16.msra.mxu0 0
    %422 = vmatprep.subr.bf16.mxu0 0
    %423 = vmatpush1.bf16.msra.mxu0 0
    %424 = vmatprep.subr.bf16.mxu0 0
    %425 = vmatpush1.bf16.msra.mxu0 0
    %426 = vmatprep.subr.bf16.mxu0 0
    %427 = vmatpush1.bf16.msra.mxu0 0
    %428 = vmatprep.mubr.bf16.mxu0 0
    %429 = vmatmul.mubr.bf16.gmra.mrb[0].mxu0 %v164
    %v430 = vpop.f32.mrb[0].mxu0
    %v431 = vadd.f32 %v309, %v430
    %v432 = vpop.f32.mrb[0].mxu0
    %v433 = vadd.f32 %v313, %v432
    %v434 = vpop.f32.mrb[0].mxu0
    %v435 = vadd.f32 %v309, %v434
    %v436 = vpop.f32.mrb[0].mxu0
    %v437 = vadd.f32 %v313, %v436
    %438 = vmatprep.mubr.bf16.mxu0 0
    %439 = vmatmul.mubr.bf16.gmra.mrb[0].mxu0 %v165
    %v440 = vpop.f32.mrb[0].mxu0
    %v441 = vadd.f32 %v309, %v440
    %v442 = vpop.f32.mrb[0].mxu0
    %v443 = vadd.f32 %v313, %v442
    %v444 = vpop.f32.mrb[0].mxu0
    %v445 = vadd.f32 %v309, %v444
    %v446 = vpop.f32.mrb[0].mxu0
    %v447 = vadd.f32 %v313, %v446
    %448 = vdwg.mxu0
    %v449 = vpack.c.bf16 %v435, %v431
    %v450 = vpack.c.bf16 %v437, %v433
    %v451 = vpack.c.bf16 %v445, %v441
    %v452 = vpack.c.bf16 %v447, %v443
    %454 = vrot.lane.b32.xlu0 %v286, 112
    %v455 = vpop.permute.xlu0 %454
    %456 = vrot.lane.b32.xlu0 %v286, 96
    %v457 = vpop.permute.xlu0 %456
    %458 = vrot.lane.b32.xlu0 %v286, 80
    %v459 = vpop.permute.xlu0 %458
    %460 = vrot.lane.b32.xlu0 %v286, 64
    %v461 = vpop.permute.xlu0 %460
    %462 = vrot.lane.b32.xlu0 %v286, 48
    %v463 = vpop.permute.xlu0 %462
    %464 = vrot.lane.b32.xlu0 %v286, 32
    %v465 = vpop.permute.xlu0 %464
    %466 = vrot.lane.b32.xlu0 %v286, 16
    %v467 = vpop.permute.xlu0 %466
    %469 = vrot.lane.b32.xlu0 %v449, 112
    %v470 = vpop.permute.xlu0 %469
    %471 = vrot.lane.b32.xlu0 %v449, 96
    %v472 = vpop.permute.xlu0 %471
    %473 = vrot.lane.b32.xlu0 %v449, 80
    %v474 = vpop.permute.xlu0 %473
    %475 = vrot.lane.b32.xlu0 %v449, 64
    %v476 = vpop.permute.xlu0 %475
    %477 = vrot.lane.b32.xlu0 %v449, 48
    %v478 = vpop.permute.xlu0 %477
    %479 = vrot.lane.b32.xlu0 %v449, 32
    %v480 = vpop.permute.xlu0 %479
    %481 = vrot.lane.b32.xlu0 %v449, 16
    %v482 = vpop.permute.xlu0 %481
    %484 = vrot.lane.b32.xlu0 %v450, 112
    %v485 = vpop.permute.xlu0 %484
    %487 = vrot.lane.b32.xlu0 %v450, 96
    %v488 = vpop.permute.xlu0 %487
    %490 = vrot.lane.b32.xlu0 %v450, 80
    %v491 = vpop.permute.xlu0 %490
    %493 = vrot.lane.b32.xlu0 %v450, 64
    %v494 = vpop.permute.xlu0 %493
    %496 = vrot.lane.b32.xlu0 %v450, 48
    %v497 = vpop.permute.xlu0 %496
    %499 = vrot.lane.b32.xlu0 %v450, 32
    %v500 = vpop.permute.xlu0 %499
    %502 = vrot.lane.b32.xlu0 %v450, 16
    %v503 = vpop.permute.xlu0 %502
    %vm505 = vcmask 130048
    %v507 = vsel %vm505, %v286, 0
    %v510 = vsel %vm505, %v449, 0
    %512 = vmatprep.subr.bf16.mxu0 0
    %513 = vmatpush1.bf16.xpose.msra.mxu0 %v510
    %514 = vmatprep.subr.bf16.mxu0 0
    %515 = vmatpush1.bf16.xpose.msra.mxu0 0
    %516 = vmatprep.subr.bf16.mxu0 0
    %517 = vmatpush1.bf16.xpose.msra.mxu0 0
    %518 = vmatprep.subr.bf16.mxu0 0
    %519 = vmatpush1.bf16.xpose.msra.mxu0 0
    %520 = vmatprep.subr.bf16.mxu0 0
    %521 = vmatpush1.bf16.xpose.msra.mxu0 0
    %522 = vmatprep.subr.bf16.mxu0 0
    %523 = vmatpush1.bf16.xpose.msra.mxu0 0
    %524 = vmatprep.subr.bf16.mxu0 0
    %525 = vmatpush1.bf16.xpose.msra.mxu0 0
    %526 = vmatprep.subr.bf16.mxu0 0
    %527 = vmatpush1.bf16.xpose.msra.mxu0 0
    %528 = vmatprep.subr.bf16.mxu0 0
    %529 = vmatpush1.bf16.xpose.msra.mxu0 0
    %530 = vmatprep.subr.bf16.mxu0 0
    %531 = vmatpush1.bf16.xpose.msra.mxu0 0
    %532 = vmatprep.subr.bf16.mxu0 0
    %533 = vmatpush1.bf16.xpose.msra.mxu0 0
    %534 = vmatprep.subr.bf16.mxu0 0
    %535 = vmatpush1.bf16.xpose.msra.mxu0 0
    %536 = vmatprep.subr.bf16.mxu0 0
    %537 = vmatpush1.bf16.xpose.msra.mxu0 0
    %538 = vmatprep.subr.bf16.mxu0 0
    %539 = vmatpush1.bf16.xpose.msra.mxu0 0
    %540 = vmatprep.subr.bf16.mxu0 0
    %541 = vmatpush1.bf16.xpose.msra.mxu0 0
    %542 = vmatprep.subr.bf16.mxu0 0
    %543 = vmatpush1.bf16.xpose.msra.mxu0 0
    %544 = vmatprep.mubr.bf16.mxu0 0
    %545 = vmatmul.mubr.bf16.gmra.mrb[0].mxu0 %v507
    %v546 = vpop.f32.mrb[0].mxu0
    %v547 = vadd.f32 0.0, %v546
    %v548 = vpop.f32.mrb[0].mxu0
    %v549 = vpop.f32.mrb[0].mxu0
    %v550 = vadd.f32 0.0, %v549
    %v551 = vpop.f32.mrb[0].mxu0
    %552 = vdwg.mxu0
    %v554 = vsel %vm505, %v455, 0
    %v557 = vsel %vm505, %v470, 0
    %559 = vmatprep.subr.bf16.mxu0 0
    %560 = vmatpush1.bf16.xpose.msra.mxu0 %v557
    %561 = vmatprep.subr.bf16.mxu0 0
    %562 = vmatpush1.bf16.xpose.msra.mxu0 0
    %563 = vmatprep.subr.bf16.mxu0 0
    %564 = vmatpush1.bf16.xpose.msra.mxu0 0
    %565 = vmatprep.subr.bf16.mxu0 0
    %566 = vmatpush1.bf16.xpose.msra.mxu0 0
    %567 = vmatprep.subr.bf16.mxu0 0
    %568 = vmatpush1.bf16.xpose.msra.mxu0 0
    %569 = vmatprep.subr.bf16.mxu0 0
    %570 = vmatpush1.bf16.xpose.msra.mxu0 0
    %571 = vmatprep.subr.bf16.mxu0 0
    %572 = vmatpush1.bf16.xpose.msra.mxu0 0
    %573 = vmatprep.subr.bf16.mxu0 0
    %574 = vmatpush1.bf16.xpose.msra.mxu0 0
    %575 = vmatprep.subr.bf16.mxu0 0
    %576 = vmatpush1.bf16.xpose.msra.mxu0 0
    %577 = vmatprep.subr.bf16.mxu0 0
    %578 = vmatpush1.bf16.xpose.msra.mxu0 0
    %579 = vmatprep.subr.bf16.mxu0 0
    %580 = vmatpush1.bf16.xpose.msra.mxu0 0
    %581 = vmatprep.subr.bf16.mxu0 0
    %582 = vmatpush1.bf16.xpose.msra.mxu0 0
    %583 = vmatprep.subr.bf16.mxu0 0
    %584 = vmatpush1.bf16.xpose.msra.mxu0 0
    %585 = vmatprep.subr.bf16.mxu0 0
    %586 = vmatpush1.bf16.xpose.msra.mxu0 0
    %587 = vmatprep.subr.bf16.mxu0 0
    %588 = vmatpush1.bf16.xpose.msra.mxu0 0
    %589 = vmatprep.subr.bf16.mxu0 0
    %590 = vmatpush1.bf16.xpose.msra.mxu0 0
    %591 = vmatprep.mubr.bf16.mxu0 0
    %592 = vmatmul.mubr.bf16.gmra.mrb[0].mxu0 %v554
    %v593 = vpop.f32.mrb[0].mxu0
    %v594 = vadd.f32 0.0, %v593
    %v595 = vpop.f32.mrb[0].mxu0
    %v596 = vpop.f32.mrb[0].mxu0
    %v597 = vadd.f32 0.0, %v596
    %v598 = vpop.f32.mrb[0].mxu0
    %599 = vdwg.mxu0
    %v601 = vsel %vm505, %v457, 0
    %v604 = vsel %vm505, %v472, 0
    %606 = vmatprep.subr.bf16.mxu0 0
    %607 = vmatpush1.bf16.xpose.msra.mxu0 %v604
    %608 = vmatprep.subr.bf16.mxu0 0
    %609 = vmatpush1.bf16.xpose.msra.mxu0 0
    %610 = vmatprep.subr.bf16.mxu0 0
    %611 = vmatpush1.bf16.xpose.msra.mxu0 0
    %612 = vmatprep.subr.bf16.mxu0 0
    %613 = vmatpush1.bf16.xpose.msra.mxu0 0
    %614 = vmatprep.subr.bf16.mxu0 0
    %615 = vmatpush1.bf16.xpose.msra.mxu0 0
    %616 = vmatprep.subr.bf16.mxu0 0
    %617 = vmatpush1.bf16.xpose.msra.mxu0 0
    %618 = vmatprep.subr.bf16.mxu0 0
    %619 = vmatpush1.bf16.xpose.msra.mxu0 0
    %620 = vmatprep.subr.bf16.mxu0 0
    %621 = vmatpush1.bf16.xpose.msra.mxu0 0
    %622 = vmatprep.subr.bf16.mxu0 0
    %623 = vmatpush1.bf16.xpose.msra.mxu0 0
    %624 = vmatprep.subr.bf16.mxu0 0
    %625 = vmatpush1.bf16.xpose.msra.mxu0 0
    %626 = vmatprep.subr.bf16.mxu0 0
    %627 = vmatpush1.bf16.xpose.msra.mxu0 0
    %628 = vmatprep.subr.bf16.mxu0 0
    %629 = vmatpush1.bf16.xpose.msra.mxu0 0
    %630 = vmatprep.subr.bf16.mxu0 0
    %631 = vmatpush1.bf16.xpose.msra.mxu0 0
    %632 = vmatprep.subr.bf16.mxu0 0
    %633 = vmatpush1.bf16.xpose.msra.mxu0 0
    %634 = vmatprep.subr.bf16.mxu0 0
    %635 = vmatpush1.bf16.xpose.msra.mxu0 0
    %636 = vmatprep.subr.bf16.mxu0 0
    %637 = vmatpush1.bf16.xpose.msra.mxu0 0
    %638 = vmatprep.mubr.bf16.mxu0 0
    %639 = vmatmul.mubr.bf16.gmra.mrb[0].mxu0 %v601
    %v640 = vpop.f32.mrb[0].mxu0
    %v641 = vadd.f32 0.0, %v640
    %v642 = vpop.f32.mrb[0].mxu0
    %v643 = vpop.f32.mrb[0].mxu0
    %v644 = vadd.f32 0.0, %v643
    %v645 = vpop.f32.mrb[0].mxu0
    %646 = vdwg.mxu0
    %v648 = vsel %vm505, %v459, 0
    %v651 = vsel %vm505, %v474, 0
    %653 = vmatprep.subr.bf16.mxu0 0
    %654 = vmatpush1.bf16.xpose.msra.mxu0 %v651
    %655 = vmatprep.subr.bf16.mxu0 0
    %656 = vmatpush1.bf16.xpose.msra.mxu0 0
    %657 = vmatprep.subr.bf16.mxu0 0
    %658 = vmatpush1.bf16.xpose.msra.mxu0 0
    %659 = vmatprep.subr.bf16.mxu0 0
    %660 = vmatpush1.bf16.xpose.msra.mxu0 0
    %661 = vmatprep.subr.bf16.mxu0 0
    %662 = vmatpush1.bf16.xpose.msra.mxu0 0
    %663 = vmatprep.subr.bf16.mxu0 0
    %664 = vmatpush1.bf16.xpose.msra.mxu0 0
    %665 = vmatprep.subr.bf16.mxu0 0
    %666 = vmatpush1.bf16.xpose.msra.mxu0 0
    %667 = vmatprep.subr.bf16.mxu0 0
    %668 = vmatpush1.bf16.xpose.msra.mxu0 0
    %669 = vmatprep.subr.bf16.mxu0 0
    %670 = vmatpush1.bf16.xpose.msra.mxu0 0
    %671 = vmatprep.subr.bf16.mxu0 0
    %672 = vmatpush1.bf16.xpose.msra.mxu0 0
    %673 = vmatprep.subr.bf16.mxu0 0
    %674 = vmatpush1.bf16.xpose.msra.mxu0 0
    %675 = vmatprep.subr.bf16.mxu0 0
    %676 = vmatpush1.bf16.xpose.msra.mxu0 0
    %677 = vmatprep.subr.bf16.mxu0 0
    %678 = vmatpush1.bf16.xpose.msra.mxu0 0
    %679 = vmatprep.subr.bf16.mxu0 0
    %680 = vmatpush1.bf16.xpose.msra.mxu0 0
    %681 = vmatprep.subr.bf16.mxu0 0
    %682 = vmatpush1.bf16.xpose.msra.mxu0 0
    %683 = vmatprep.subr.bf16.mxu0 0
    %684 = vmatpush1.bf16.xpose.msra.mxu0 0
    %685 = vmatprep.mubr.bf16.mxu0 0
    %686 = vmatmul.mubr.bf16.gmra.mrb[0].mxu0 %v648
    %v687 = vpop.f32.mrb[0].mxu0
    %v688 = vadd.f32 0.0, %v687
    %v689 = vpop.f32.mrb[0].mxu0
    %v690 = vpop.f32.mrb[0].mxu0
    %v691 = vadd.f32 0.0, %v690
    %v692 = vpop.f32.mrb[0].mxu0
    %693 = vdwg.mxu0
    %v695 = vsel %vm505, %v461, 0
    %v698 = vsel %vm505, %v476, 0
    %700 = vmatprep.subr.bf16.mxu0 0
    %701 = vmatpush1.bf16.xpose.msra.mxu0 %v698
    %702 = vmatprep.subr.bf16.mxu0 0
    %703 = vmatpush1.bf16.xpose.msra.mxu0 0
    %704 = vmatprep.subr.bf16.mxu0 0
    %705 = vmatpush1.bf16.xpose.msra.mxu0 0
    %706 = vmatprep.subr.bf16.mxu0 0
    %707 = vmatpush1.bf16.xpose.msra.mxu0 0
    %708 = vmatprep.subr.bf16.mxu0 0
    %709 = vmatpush1.bf16.xpose.msra.mxu0 0
    %710 = vmatprep.subr.bf16.mxu0 0
    %711 = vmatpush1.bf16.xpose.msra.mxu0 0
    %712 = vmatprep.subr.bf16.mxu0 0
    %713 = vmatpush1.bf16.xpose.msra.mxu0 0
    %714 = vmatprep.subr.bf16.mxu0 0
    %715 = vmatpush1.bf16.xpose.msra.mxu0 0
    %716 = vmatprep.subr.bf16.mxu0 0
    %717 = vmatpush1.bf16.xpose.msra.mxu0 0
    %718 = vmatprep.subr.bf16.mxu0 0
    %719 = vmatpush1.bf16.xpose.msra.mxu0 0
    %720 = vmatprep.subr.bf16.mxu0 0
    %721 = vmatpush1.bf16.xpose.msra.mxu0 0
    %722 = vmatprep.subr.bf16.mxu0 0
    %723 = vmatpush1.bf16.xpose.msra.mxu0 0
    %724 = vmatprep.subr.bf16.mxu0 0
    %725 = vmatpush1.bf16.xpose.msra.mxu0 0
    %726 = vmatprep.subr.bf16.mxu0 0
    %727 = vmatpush1.bf16.xpose.msra.mxu0 0
    %728 = vmatprep.subr.bf16.mxu0 0
    %729 = vmatpush1.bf16.xpose.msra.mxu0 0
    %730 = vmatprep.subr.bf16.mxu0 0
    %731 = vmatpush1.bf16.xpose.msra.mxu0 0
    %732 = vmatprep.mubr.bf16.mxu0 0
    %733 = vmatmul.mubr.bf16.gmra.mrb[0].mxu0 %v695
    %v734 = vpop.f32.mrb[0].mxu0
    %v735 = vadd.f32 0.0, %v734
    %v736 = vpop.f32.mrb[0].mxu0
    %v737 = vpop.f32.mrb[0].mxu0
    %v738 = vadd.f32 0.0, %v737
    %v739 = vpop.f32.mrb[0].mxu0
    %740 = vdwg.mxu0
    %v742 = vsel %vm505, %v463, 0
    %v745 = vsel %vm505, %v478, 0
    %747 = vmatprep.subr.bf16.mxu0 0
    %748 = vmatpush1.bf16.xpose.msra.mxu0 %v745
    %749 = vmatprep.subr.bf16.mxu0 0
    %750 = vmatpush1.bf16.xpose.msra.mxu0 0
    %751 = vmatprep.subr.bf16.mxu0 0
    %752 = vmatpush1.bf16.xpose.msra.mxu0 0
    %753 = vmatprep.subr.bf16.mxu0 0
    %754 = vmatpush1.bf16.xpose.msra.mxu0 0
    %755 = vmatprep.subr.bf16.mxu0 0
    %756 = vmatpush1.bf16.xpose.msra.mxu0 0
    %757 = vmatprep.subr.bf16.mxu0 0
    %758 = vmatpush1.bf16.xpose.msra.mxu0 0
    %759 = vmatprep.subr.bf16.mxu0 0
    %760 = vmatpush1.bf16.xpose.msra.mxu0 0
    %761 = vmatprep.subr.bf16.mxu0 0
    %762 = vmatpush1.bf16.xpose.msra.mxu0 0
    %763 = vmatprep.subr.bf16.mxu0 0
    %764 = vmatpush1.bf16.xpose.msra.mxu0 0
    %765 = vmatprep.subr.bf16.mxu0 0
    %766 = vmatpush1.bf16.xpose.msra.mxu0 0
    %767 = vmatprep.subr.bf16.mxu0 0
    %768 = vmatpush1.bf16.xpose.msra.mxu0 0
    %769 = vmatprep.subr.bf16.mxu0 0
    %770 = vmatpush1.bf16.xpose.msra.mxu0 0
    %771 = vmatprep.subr.bf16.mxu0 0
    %772 = vmatpush1.bf16.xpose.msra.mxu0 0
    %773 = vmatprep.subr.bf16.mxu0 0
    %774 = vmatpush1.bf16.xpose.msra.mxu0 0
    %775 = vmatprep.subr.bf16.mxu0 0
    %776 = vmatpush1.bf16.xpose.msra.mxu0 0
    %777 = vmatprep.subr.bf16.mxu0 0
    %778 = vmatpush1.bf16.xpose.msra.mxu0 0
    %779 = vmatprep.mubr.bf16.mxu0 0
    %780 = vmatmul.mubr.bf16.gmra.mrb[0].mxu0 %v742
    %v781 = vpop.f32.mrb[0].mxu0
    %v782 = vadd.f32 0.0, %v781
    %v783 = vpop.f32.mrb[0].mxu0
    %v784 = vpop.f32.mrb[0].mxu0
    %v785 = vadd.f32 0.0, %v784
    %v786 = vpop.f32.mrb[0].mxu0
    %787 = vdwg.mxu0
    %v789 = vsel %vm505, %v465, 0
    %v792 = vsel %vm505, %v480, 0
    %794 = vmatprep.subr.bf16.mxu0 0
    %795 = vmatpush1.bf16.xpose.msra.mxu0 %v792
    %796 = vmatprep.subr.bf16.mxu0 0
    %797 = vmatpush1.bf16.xpose.msra.mxu0 0
    %798 = vmatprep.subr.bf16.mxu0 0
    %799 = vmatpush1.bf16.xpose.msra.mxu0 0
    %800 = vmatprep.subr.bf16.mxu0 0
    %801 = vmatpush1.bf16.xpose.msra.mxu0 0
    %802 = vmatprep.subr.bf16.mxu0 0
    %803 = vmatpush1.bf16.xpose.msra.mxu0 0
    %804 = vmatprep.subr.bf16.mxu0 0
    %805 = vmatpush1.bf16.xpose.msra.mxu0 0
    %806 = vmatprep.subr.bf16.mxu0 0
    %807 = vmatpush1.bf16.xpose.msra.mxu0 0
    %808 = vmatprep.subr.bf16.mxu0 0
    %809 = vmatpush1.bf16.xpose.msra.mxu0 0
    %810 = vmatprep.subr.bf16.mxu0 0
    %811 = vmatpush1.bf16.xpose.msra.mxu0 0
    %812 = vmatprep.subr.bf16.mxu0 0
    %813 = vmatpush1.bf16.xpose.msra.mxu0 0
    %814 = vmatprep.subr.bf16.mxu0 0
    %815 = vmatpush1.bf16.xpose.msra.mxu0 0
    %816 = vmatprep.subr.bf16.mxu0 0
    %817 = vmatpush1.bf16.xpose.msra.mxu0 0
    %818 = vmatprep.subr.bf16.mxu0 0
    %819 = vmatpush1.bf16.xpose.msra.mxu0 0
    %820 = vmatprep.subr.bf16.mxu0 0
    %821 = vmatpush1.bf16.xpose.msra.mxu0 0
    %822 = vmatprep.subr.bf16.mxu0 0
    %823 = vmatpush1.bf16.xpose.msra.mxu0 0
    %824 = vmatprep.subr.bf16.mxu0 0
    %825 = vmatpush1.bf16.xpose.msra.mxu0 0
    %826 = vmatprep.mubr.bf16.mxu0 0
    %827 = vmatmul.mubr.bf16.gmra.mrb[0].mxu0 %v789
    %v828 = vpop.f32.mrb[0].mxu0
    %v829 = vadd.f32 0.0, %v828
    %v830 = vpop.f32.mrb[0].mxu0
    %v831 = vpop.f32.mrb[0].mxu0
    %v832 = vadd.f32 0.0, %v831
    %v833 = vpop.f32.mrb[0].mxu0
    %834 = vdwg.mxu0
    %v836 = vsel %vm505, %v467, 0
    %v839 = vsel %vm505, %v482, 0
    %841 = vmatprep.subr.bf16.mxu0 0
    %842 = vmatpush1.bf16.xpose.msra.mxu0 %v839
    %843 = vmatprep.subr.bf16.mxu0 0
    %844 = vmatpush1.bf16.xpose.msra.mxu0 0
    %845 = vmatprep.subr.bf16.mxu0 0
    %846 = vmatpush1.bf16.xpose.msra.mxu0 0
    %847 = vmatprep.subr.bf16.mxu0 0
    %848 = vmatpush1.bf16.xpose.msra.mxu0 0
    %849 = vmatprep.subr.bf16.mxu0 0
    %850 = vmatpush1.bf16.xpose.msra.mxu0 0
    %851 = vmatprep.subr.bf16.mxu0 0
    %852 = vmatpush1.bf16.xpose.msra.mxu0 0
    %853 = vmatprep.subr.bf16.mxu0 0
    %854 = vmatpush1.bf16.xpose.msra.mxu0 0
    %855 = vmatprep.subr.bf16.mxu0 0
    %856 = vmatpush1.bf16.xpose.msra.mxu0 0
    %857 = vmatprep.subr.bf16.mxu0 0
    %858 = vmatpush1.bf16.xpose.msra.mxu0 0
    %859 = vmatprep.subr.bf16.mxu0 0
    %860 = vmatpush1.bf16.xpose.msra.mxu0 0
    %861 = vmatprep.subr.bf16.mxu0 0
    %862 = vmatpush1.bf16.xpose.msra.mxu0 0
    %863 = vmatprep.subr.bf16.mxu0 0
    %864 = vmatpush1.bf16.xpose.msra.mxu0 0
    %865 = vmatprep.subr.bf16.mxu0 0
    %866 = vmatpush1.bf16.xpose.msra.mxu0 0
    %867 = vmatprep.subr.bf16.mxu0 0
    %868 = vmatpush1.bf16.xpose.msra.mxu0 0
    %869 = vmatprep.subr.bf16.mxu0 0
    %870 = vmatpush1.bf16.xpose.msra.mxu0 0
    %871 = vmatprep.subr.bf16.mxu0 0
    %872 = vmatpush1.bf16.xpose.msra.mxu0 0
    %873 = vmatprep.mubr.bf16.mxu0 0
    %874 = vmatmul.mubr.bf16.gmra.mrb[0].mxu0 %v836
    %v875 = vpop.f32.mrb[0].mxu0
    %v876 = vadd.f32 0.0, %v875
    %v877 = vpop.f32.mrb[0].mxu0
    %v878 = vpop.f32.mrb[0].mxu0
    %v879 = vadd.f32 0.0, %v878
    %v880 = vpop.f32.mrb[0].mxu0
    %881 = vdwg.mxu0
    %v882 = vld [vmem:[%s2] sm:$0x1]
    %vm883 = vcmp.gt.f32.partialorder %v882, 0.5
    %v884 = vsel %vm883, 1, 0
    %v885 = vlaneseq
    %v886 = vshrl.u32 %v885, 7
    %v887 = vsub.s32 0, %v886
    %v888 = vrot.slane %v884, %v887
    %vm889 = vcmp.eq.s32.totalorder %v888, 1
    %v890 = vsel %vm889, -1e+09, %v547
    %v891 = vsel %vm889, -1e+09, %v550
    %v892 = vsel %vm889, -1e+09, %v594
    %v893 = vsel %vm889, -1e+09, %v597
    %v894 = vsel %vm889, -1e+09, %v641
    %v895 = vsel %vm889, -1e+09, %v644
    %v896 = vsel %vm889, -1e+09, %v688
    %v897 = vsel %vm889, -1e+09, %v691
    %v898 = vsel %vm889, -1e+09, %v735
    %v899 = vsel %vm889, -1e+09, %v738
    %v900 = vsel %vm889, -1e+09, %v782
    %v901 = vsel %vm889, -1e+09, %v785
    %v902 = vsel %vm889, -1e+09, %v829
    %v903 = vsel %vm889, -1e+09, %v832
    %v904 = vsel %vm889, -1e+09, %v876
    %v905 = vsel %vm889, -1e+09, %v879
    %v906 = vsel %vm505, %v890, -inf
    %907 = vmax.xlane.f32.xlu0 %v906
    %v908 = vpop.xlane.xlu0 %907
    %v909 = vsel %vm505, %v891, -inf
    %910 = vmax.xlane.f32.xlu0 %v909
    %v911 = vpop.xlane.xlu0 %910
    %v912 = vsel %vm505, %v892, -inf
    %913 = vmax.xlane.f32.xlu0 %v912
    %v914 = vpop.xlane.xlu0 %913
    %v915 = vsel %vm505, %v893, -inf
    %916 = vmax.xlane.f32.xlu0 %v915
    %v917 = vpop.xlane.xlu0 %916
    %v918 = vsel %vm505, %v894, -inf
    %919 = vmax.xlane.f32.xlu0 %v918
    %v920 = vpop.xlane.xlu0 %919
    %v921 = vsel %vm505, %v895, -inf
    %922 = vmax.xlane.f32.xlu0 %v921
    %v923 = vpop.xlane.xlu0 %922
    %v924 = vsel %vm505, %v896, -inf
    %925 = vmax.xlane.f32.xlu0 %v924
    %v926 = vpop.xlane.xlu0 %925
    %v927 = vsel %vm505, %v897, -inf
    %928 = vmax.xlane.f32.xlu0 %v927
    %v929 = vpop.xlane.xlu0 %928
    %v930 = vsel %vm505, %v898, -inf
    %931 = vmax.xlane.f32.xlu0 %v930
    %v932 = vpop.xlane.xlu0 %931
    %v933 = vsel %vm505, %v899, -inf
    %934 = vmax.xlane.f32.xlu0 %v933
    %v935 = vpop.xlane.xlu0 %934
    %v936 = vsel %vm505, %v900, -inf
    %937 = vmax.xlane.f32.xlu0 %v936
    %v938 = vpop.xlane.xlu0 %937
    %v939 = vsel %vm505, %v901, -inf
    %940 = vmax.xlane.f32.xlu0 %v939
    %v941 = vpop.xlane.xlu0 %940
    %v942 = vsel %vm505, %v902, -inf
    %943 = vmax.xlane.f32.xlu0 %v942
    %v944 = vpop.xlane.xlu0 %943
    %v945 = vsel %vm505, %v903, -inf
    %946 = vmax.xlane.f32.xlu0 %v945
    %v947 = vpop.xlane.xlu0 %946
    %v948 = vsel %vm505, %v904, -inf
    %949 = vmax.xlane.f32.xlu0 %v948
    %v950 = vpop.xlane.xlu0 %949
    %v951 = vsel %vm505, %v905, -inf
    %952 = vmax.xlane.f32.xlu0 %v951
    %v953 = vpop.xlane.xlu0 %952
    %v954 = vsub.f32 %v890, %v908
    %v955 = vsub.f32 %v891, %v911
    %v956 = vsub.f32 %v892, %v914
    %v957 = vsub.f32 %v893, %v917
    %v958 = vsub.f32 %v894, %v920
    %v959 = vsub.f32 %v895, %v923
    %v960 = vsub.f32 %v896, %v926
    %v961 = vsub.f32 %v897, %v929
    %v962 = vsub.f32 %v898, %v932
    %v963 = vsub.f32 %v899, %v935
    %v964 = vsub.f32 %v900, %v938
    %v965 = vsub.f32 %v901, %v941
    %v966 = vsub.f32 %v902, %v944
    %v967 = vsub.f32 %v903, %v947
    %v968 = vsub.f32 %v904, %v950
    %v969 = vsub.f32 %v905, %v953
    %v970 = vmul.f32 %v954, 1.442695
    %v971 = vpow.pop %v970
    %v972 = vmul.f32 %v955, 1.442695
    %v973 = vpow.pop %v972
    %v974 = vmul.f32 %v956, 1.442695
    %v975 = vpow.pop %v974
    %v976 = vmul.f32 %v957, 1.442695
    %v977 = vpow.pop %v976
    %v978 = vmul.f32 %v958, 1.442695
    %v979 = vpow.pop %v978
    %v980 = vmul.f32 %v959, 1.442695
    %v981 = vpow.pop %v980
    %v982 = vmul.f32 %v960, 1.442695
    %v983 = vpow.pop %v982
    %v984 = vmul.f32 %v961, 1.442695
    %v985 = vpow.pop %v984
    %v986 = vmul.f32 %v962, 1.442695
    %v987 = vpow.pop %v986
    %v988 = vmul.f32 %v963, 1.442695
    %v989 = vpow.pop %v988
    %v990 = vmul.f32 %v964, 1.442695
    %v991 = vpow.pop %v990
    %v992 = vmul.f32 %v965, 1.442695
    %v993 = vpow.pop %v992
    %v994 = vmul.f32 %v966, 1.442695
    %v995 = vpow.pop %v994
    %v996 = vmul.f32 %v967, 1.442695
    %v997 = vpow.pop %v996
    %v998 = vmul.f32 %v968, 1.442695
    %v999 = vpow.pop %v998
    %v1000 = vmul.f32 %v969, 1.442695
    %v1001 = vpow.pop %v1000
    %v1002 = vsel %vm505, %v971, 0.0
    %1003 = vadd.xlane.f32.xlu0 %v1002
    %v1004 = vpop.xlane.xlu0 %1003
    %v1005 = vsel %vm505, %v973, 0.0
    %1006 = vadd.xlane.f32.xlu0 %v1005
    %v1007 = vpop.xlane.xlu0 %1006
    %v1008 = vsel %vm505, %v975, 0.0
    %1009 = vadd.xlane.f32.xlu0 %v1008
    %v1010 = vpop.xlane.xlu0 %1009
    %v1011 = vsel %vm505, %v977, 0.0
    %1012 = vadd.xlane.f32.xlu0 %v1011
    %v1013 = vpop.xlane.xlu0 %1012
    %v1014 = vsel %vm505, %v979, 0.0
    %1015 = vadd.xlane.f32.xlu0 %v1014
    %v1016 = vpop.xlane.xlu0 %1015
    %v1017 = vsel %vm505, %v981, 0.0
    %1018 = vadd.xlane.f32.xlu0 %v1017
    %v1019 = vpop.xlane.xlu0 %1018
    %v1020 = vsel %vm505, %v983, 0.0
    %1021 = vadd.xlane.f32.xlu0 %v1020
    %v1022 = vpop.xlane.xlu0 %1021
    %v1023 = vsel %vm505, %v985, 0.0
    %1024 = vadd.xlane.f32.xlu0 %v1023
    %v1025 = vpop.xlane.xlu0 %1024
    %v1026 = vsel %vm505, %v987, 0.0
    %1027 = vadd.xlane.f32.xlu0 %v1026
    %v1028 = vpop.xlane.xlu0 %1027
    %v1029 = vsel %vm505, %v989, 0.0
    %1030 = vadd.xlane.f32.xlu0 %v1029
    %v1031 = vpop.xlane.xlu0 %1030
    %v1032 = vsel %vm505, %v991, 0.0
    %1033 = vadd.xlane.f32.xlu0 %v1032
    %v1034 = vpop.xlane.xlu0 %1033
    %v1035 = vsel %vm505, %v993, 0.0
    %1036 = vadd.xlane.f32.xlu0 %v1035
    %v1037 = vpop.xlane.xlu0 %1036
    %v1038 = vsel %vm505, %v995, 0.0
    %1039 = vadd.xlane.f32.xlu0 %v1038
    %v1040 = vpop.xlane.xlu0 %1039
    %v1041 = vsel %vm505, %v997, 0.0
    %1042 = vadd.xlane.f32.xlu0 %v1041
    %v1043 = vpop.xlane.xlu0 %1042
    %v1044 = vsel %vm505, %v999, 0.0
    %1045 = vadd.xlane.f32.xlu0 %v1044
    %v1046 = vpop.xlane.xlu0 %1045
    %v1047 = vsel %vm505, %v1001, 0.0
    %1048 = vadd.xlane.f32.xlu0 %v1047
    %v1049 = vpop.xlane.xlu0 %1048
    %v1050 = vrcp.pop %v1004
    %v1051 = vrcp.pop %v1007
    %v1052 = vrcp.pop %v1010
    %v1053 = vrcp.pop %v1013
    %v1054 = vrcp.pop %v1016
    %v1055 = vrcp.pop %v1019
    %v1056 = vrcp.pop %v1022
    %v1057 = vrcp.pop %v1025
    %v1058 = vrcp.pop %v1028
    %v1059 = vrcp.pop %v1031
    %v1060 = vrcp.pop %v1034
    %v1061 = vrcp.pop %v1037
    %v1062 = vrcp.pop %v1040
    %v1063 = vrcp.pop %v1043
    %v1064 = vrcp.pop %v1046
    %v1065 = vrcp.pop %v1049
    %v1066 = vmul.f32 %v971, %v1050
    %v1067 = vmul.f32 %v973, %v1051
    %v1068 = vmul.f32 %v975, %v1052
    %v1069 = vmul.f32 %v977, %v1053
    %v1070 = vmul.f32 %v979, %v1054
    %v1071 = vmul.f32 %v981, %v1055
    %v1072 = vmul.f32 %v983, %v1056
    %v1073 = vmul.f32 %v985, %v1057
    %v1074 = vmul.f32 %v987, %v1058
    %v1075 = vmul.f32 %v989, %v1059
    %v1076 = vmul.f32 %v991, %v1060
    %v1077 = vmul.f32 %v993, %v1061
    %v1078 = vmul.f32 %v995, %v1062
    %v1079 = vmul.f32 %v997, %v1063
    %v1080 = vmul.f32 %v999, %v1064
    %v1081 = vmul.f32 %v1001, %v1065
    %v1082 = vpack.c.bf16 %v1067, %v1066
    %v1083 = vpack.c.bf16 %v1069, %v1068
    %v1084 = vpack.c.bf16 %v1071, %v1070
    %v1085 = vpack.c.bf16 %v1073, %v1072
    %v1086 = vpack.c.bf16 %v1075, %v1074
    %v1087 = vpack.c.bf16 %v1077, %v1076
    %v1088 = vpack.c.bf16 %v1079, %v1078
    %v1089 = vpack.c.bf16 %v1081, %v1080
    %v1091 = vsel %vm505, %v1082, 0
    %1093 = vmatprep.subr.bf16.mxu0 0
    %1094 = vmatpush1.bf16.msra.mxu0 %v450
    %1095 = vmatprep.subr.bf16.mxu0 0
    %1096 = vmatpush1.bf16.msra.mxu0 0
    %1097 = vmatprep.subr.bf16.mxu0 0
    %1098 = vmatpush1.bf16.msra.mxu0 0
    %1099 = vmatprep.subr.bf16.mxu0 0
    %1100 = vmatpush1.bf16.msra.mxu0 0
    %1101 = vmatprep.subr.bf16.mxu0 0
    %1102 = vmatpush1.bf16.msra.mxu0 0
    %1103 = vmatprep.subr.bf16.mxu0 0
    %1104 = vmatpush1.bf16.msra.mxu0 0
    %1105 = vmatprep.subr.bf16.mxu0 0
    %1106 = vmatpush1.bf16.msra.mxu0 0
    %1107 = vmatprep.subr.bf16.mxu0 0
    %1108 = vmatpush1.bf16.msra.mxu0 0
    %1109 = vmatprep.subr.bf16.mxu0 0
    %1110 = vmatpush1.bf16.msra.mxu0 0
    %1111 = vmatprep.subr.bf16.mxu0 0
    %1112 = vmatpush1.bf16.msra.mxu0 0
    %1113 = vmatprep.subr.bf16.mxu0 0
    %1114 = vmatpush1.bf16.msra.mxu0 0
    %1115 = vmatprep.subr.bf16.mxu0 0
    %1116 = vmatpush1.bf16.msra.mxu0 0
    %1117 = vmatprep.subr.bf16.mxu0 0
    %1118 = vmatpush1.bf16.msra.mxu0 0
    %1119 = vmatprep.subr.bf16.mxu0 0
    %1120 = vmatpush1.bf16.msra.mxu0 0
    %1121 = vmatprep.subr.bf16.mxu0 0
    %1122 = vmatpush1.bf16.msra.mxu0 0
    %1123 = vmatprep.subr.bf16.mxu0 0
    %1124 = vmatpush1.bf16.msra.mxu0 0
    %1125 = vmatprep.mubr.bf16.mxu0 0
    %1126 = vmatmul.mubr.bf16.gmra.mrb[0].mxu0 %v1091
    %v1127 = vpop.f32.mrb[0].mxu0
    %v1128 = vadd.f32 0.0, %v1127
    %v1129 = vpop.f32.mrb[0].mxu0
    %v1130 = vpop.f32.mrb[0].mxu0
    %v1131 = vadd.f32 0.0, %v1130
    %v1132 = vpop.f32.mrb[0].mxu0
    %1133 = vdwg.mxu0
    %v1135 = vsel %vm505, %v1083, 0
    %1137 = vmatprep.subr.bf16.mxu0 0
    %1138 = vmatpush1.bf16.msra.mxu0 %v485
    %1139 = vmatprep.subr.bf16.mxu0 0
    %1140 = vmatpush1.bf16.msra.mxu0 0
    %1141 = vmatprep.subr.bf16.mxu0 0
    %1142 = vmatpush1.bf16.msra.mxu0 0
    %1143 = vmatprep.subr.bf16.mxu0 0
    %1144 = vmatpush1.bf16.msra.mxu0 0
    %1145 = vmatprep.subr.bf16.mxu0 0
    %1146 = vmatpush1.bf16.msra.mxu0 0
    %1147 = vmatprep.subr.bf16.mxu0 0
    %1148 = vmatpush1.bf16.msra.mxu0 0
    %1149 = vmatprep.subr.bf16.mxu0 0
    %1150 = vmatpush1.bf16.msra.mxu0 0
    %1151 = vmatprep.subr.bf16.mxu0 0
    %1152 = vmatpush1.bf16.msra.mxu0 0
    %1153 = vmatprep.subr.bf16.mxu0 0
    %1154 = vmatpush1.bf16.msra.mxu0 0
    %1155 = vmatprep.subr.bf16.mxu0 0
    %1156 = vmatpush1.bf16.msra.mxu0 0
    %1157 = vmatprep.subr.bf16.mxu0 0
    %1158 = vmatpush1.bf16.msra.mxu0 0
    %1159 = vmatprep.subr.bf16.mxu0 0
    %1160 = vmatpush1.bf16.msra.mxu0 0
    %1161 = vmatprep.subr.bf16.mxu0 0
    %1162 = vmatpush1.bf16.msra.mxu0 0
    %1163 = vmatprep.subr.bf16.mxu0 0
    %1164 = vmatpush1.bf16.msra.mxu0 0
    %1165 = vmatprep.subr.bf16.mxu0 0
    %1166 = vmatpush1.bf16.msra.mxu0 0
    %1167 = vmatprep.subr.bf16.mxu0 0
    %1168 = vmatpush1.bf16.msra.mxu0 0
    %1169 = vmatprep.mubr.bf16.mxu0 0
    %1170 = vmatmul.mubr.bf16.gmra.mrb[0].mxu0 %v1135
    %v1171 = vpop.f32.mrb[0].mxu0
    %v1172 = vadd.f32 0.0, %v1171
    %v1173 = vpop.f32.mrb[0].mxu0
    %v1174 = vpop.f32.mrb[0].mxu0
    %v1175 = vadd.f32 0.0, %v1174
    %v1176 = vpop.f32.mrb[0].mxu0
    %1177 = vdwg.mxu0
    %v1179 = vsel %vm505, %v1084, 0
    %1181 = vmatprep.subr.bf16.mxu0 0
    %1182 = vmatpush1.bf16.msra.mxu0 %v488
    %1183 = vmatprep.subr.bf16.mxu0 0
    %1184 = vmatpush1.bf16.msra.mxu0 0
    %1185 = vmatprep.subr.bf16.mxu0 0
    %1186 = vmatpush1.bf16.msra.mxu0 0
    %1187 = vmatprep.subr.bf16.mxu0 0
    %1188 = vmatpush1.bf16.msra.mxu0 0
    %1189 = vmatprep.subr.bf16.mxu0 0
    %1190 = vmatpush1.bf16.msra.mxu0 0
    %1191 = vmatprep.subr.bf16.mxu0 0
    %1192 = vmatpush1.bf16.msra.mxu0 0
    %1193 = vmatprep.subr.bf16.mxu0 0
    %1194 = vmatpush1.bf16.msra.mxu0 0
    %1195 = vmatprep.subr.bf16.mxu0 0
    %1196 = vmatpush1.bf16.msra.mxu0 0
    %1197 = vmatprep.subr.bf16.mxu0 0
    %1198 = vmatpush1.bf16.msra.mxu0 0
    %1199 = vmatprep.subr.bf16.mxu0 0
    %1200 = vmatpush1.bf16.msra.mxu0 0
    %1201 = vmatprep.subr.bf16.mxu0 0
    %1202 = vmatpush1.bf16.msra.mxu0 0
    %1203 = vmatprep.subr.bf16.mxu0 0
    %1204 = vmatpush1.bf16.msra.mxu0 0
    %1205 = vmatprep.subr.bf16.mxu0 0
    %1206 = vmatpush1.bf16.msra.mxu0 0
    %1207 = vmatprep.subr.bf16.mxu0 0
    %1208 = vmatpush1.bf16.msra.mxu0 0
    %1209 = vmatprep.subr.bf16.mxu0 0
    %1210 = vmatpush1.bf16.msra.mxu0 0
    %1211 = vmatprep.subr.bf16.mxu0 0
    %1212 = vmatpush1.bf16.msra.mxu0 0
    %1213 = vmatprep.mubr.bf16.mxu0 0
    %1214 = vmatmul.mubr.bf16.gmra.mrb[0].mxu0 %v1179
    %v1215 = vpop.f32.mrb[0].mxu0
    %v1216 = vadd.f32 0.0, %v1215
    %v1217 = vpop.f32.mrb[0].mxu0
    %v1218 = vpop.f32.mrb[0].mxu0
    %v1219 = vadd.f32 0.0, %v1218
    %v1220 = vpop.f32.mrb[0].mxu0
    %1221 = vdwg.mxu0
    %v1223 = vsel %vm505, %v1085, 0
    %1225 = vmatprep.subr.bf16.mxu0 0
    %1226 = vmatpush1.bf16.msra.mxu0 %v491
    %1227 = vmatprep.subr.bf16.mxu0 0
    %1228 = vmatpush1.bf16.msra.mxu0 0
    %1229 = vmatprep.subr.bf16.mxu0 0
    %1230 = vmatpush1.bf16.msra.mxu0 0
    %1231 = vmatprep.subr.bf16.mxu0 0
    %1232 = vmatpush1.bf16.msra.mxu0 0
    %1233 = vmatprep.subr.bf16.mxu0 0
    %1234 = vmatpush1.bf16.msra.mxu0 0
    %1235 = vmatprep.subr.bf16.mxu0 0
    %1236 = vmatpush1.bf16.msra.mxu0 0
    %1237 = vmatprep.subr.bf16.mxu0 0
    %1238 = vmatpush1.bf16.msra.mxu0 0
    %1239 = vmatprep.subr.bf16.mxu0 0
    %1240 = vmatpush1.bf16.msra.mxu0 0
    %1241 = vmatprep.subr.bf16.mxu0 0
    %1242 = vmatpush1.bf16.msra.mxu0 0
    %1243 = vmatprep.subr.bf16.mxu0 0
    %1244 = vmatpush1.bf16.msra.mxu0 0
    %1245 = vmatprep.subr.bf16.mxu0 0
    %1246 = vmatpush1.bf16.msra.mxu0 0
    %1247 = vmatprep.subr.bf16.mxu0 0
    %1248 = vmatpush1.bf16.msra.mxu0 0
    %1249 = vmatprep.subr.bf16.mxu0 0
    %1250 = vmatpush1.bf16.msra.mxu0 0
    %1251 = vmatprep.subr.bf16.mxu0 0
    %1252 = vmatpush1.bf16.msra.mxu0 0
    %1253 = vmatprep.subr.bf16.mxu0 0
    %1254 = vmatpush1.bf16.msra.mxu0 0
    %1255 = vmatprep.subr.bf16.mxu0 0
    %1256 = vmatpush1.bf16.msra.mxu0 0
    %1257 = vmatprep.mubr.bf16.mxu0 0
    %1258 = vmatmul.mubr.bf16.gmra.mrb[0].mxu0 %v1223
    %v1259 = vpop.f32.mrb[0].mxu0
    %v1260 = vadd.f32 0.0, %v1259
    %v1261 = vpop.f32.mrb[0].mxu0
    %v1262 = vpop.f32.mrb[0].mxu0
    %v1263 = vadd.f32 0.0, %v1262
    %v1264 = vpop.f32.mrb[0].mxu0
    %1265 = vdwg.mxu0
    %v1267 = vsel %vm505, %v1086, 0
    %1269 = vmatprep.subr.bf16.mxu0 0
    %1270 = vmatpush1.bf16.msra.mxu0 %v494
    %1271 = vmatprep.subr.bf16.mxu0 0
    %1272 = vmatpush1.bf16.msra.mxu0 0
    %1273 = vmatprep.subr.bf16.mxu0 0
    %1274 = vmatpush1.bf16.msra.mxu0 0
    %1275 = vmatprep.subr.bf16.mxu0 0
    %1276 = vmatpush1.bf16.msra.mxu0 0
    %1277 = vmatprep.subr.bf16.mxu0 0
    %1278 = vmatpush1.bf16.msra.mxu0 0
    %1279 = vmatprep.subr.bf16.mxu0 0
    %1280 = vmatpush1.bf16.msra.mxu0 0
    %1281 = vmatprep.subr.bf16.mxu0 0
    %1282 = vmatpush1.bf16.msra.mxu0 0
    %1283 = vmatprep.subr.bf16.mxu0 0
    %1284 = vmatpush1.bf16.msra.mxu0 0
    %1285 = vmatprep.subr.bf16.mxu0 0
    %1286 = vmatpush1.bf16.msra.mxu0 0
    %1287 = vmatprep.subr.bf16.mxu0 0
    %1288 = vmatpush1.bf16.msra.mxu0 0
    %1289 = vmatprep.subr.bf16.mxu0 0
    %1290 = vmatpush1.bf16.msra.mxu0 0
    %1291 = vmatprep.subr.bf16.mxu0 0
    %1292 = vmatpush1.bf16.msra.mxu0 0
    %1293 = vmatprep.subr.bf16.mxu0 0
    %1294 = vmatpush1.bf16.msra.mxu0 0
    %1295 = vmatprep.subr.bf16.mxu0 0
    %1296 = vmatpush1.bf16.msra.mxu0 0
    %1297 = vmatprep.subr.bf16.mxu0 0
    %1298 = vmatpush1.bf16.msra.mxu0 0
    %1299 = vmatprep.subr.bf16.mxu0 0
    %1300 = vmatpush1.bf16.msra.mxu0 0
    %1301 = vmatprep.mubr.bf16.mxu0 0
    %1302 = vmatmul.mubr.bf16.gmra.mrb[0].mxu0 %v1267
    %v1303 = vpop.f32.mrb[0].mxu0
    %v1304 = vadd.f32 0.0, %v1303
    %v1305 = vpop.f32.mrb[0].mxu0
    %v1306 = vpop.f32.mrb[0].mxu0
    %v1307 = vadd.f32 0.0, %v1306
    %v1308 = vpop.f32.mrb[0].mxu0
    %1309 = vdwg.mxu0
    %v1311 = vsel %vm505, %v1087, 0
    %1313 = vmatprep.subr.bf16.mxu0 0
    %1314 = vmatpush1.bf16.msra.mxu0 %v497
    %1315 = vmatprep.subr.bf16.mxu0 0
    %1316 = vmatpush1.bf16.msra.mxu0 0
    %1317 = vmatprep.subr.bf16.mxu0 0
    %1318 = vmatpush1.bf16.msra.mxu0 0
    %1319 = vmatprep.subr.bf16.mxu0 0
    %1320 = vmatpush1.bf16.msra.mxu0 0
    %1321 = vmatprep.subr.bf16.mxu0 0
    %1322 = vmatpush1.bf16.msra.mxu0 0
    %1323 = vmatprep.subr.bf16.mxu0 0
    %1324 = vmatpush1.bf16.msra.mxu0 0
    %1325 = vmatprep.subr.bf16.mxu0 0
    %1326 = vmatpush1.bf16.msra.mxu0 0
    %1327 = vmatprep.subr.bf16.mxu0 0
    %1328 = vmatpush1.bf16.msra.mxu0 0
    %1329 = vmatprep.subr.bf16.mxu0 0
    %1330 = vmatpush1.bf16.msra.mxu0 0
    %1331 = vmatprep.subr.bf16.mxu0 0
    %1332 = vmatpush1.bf16.msra.mxu0 0
    %1333 = vmatprep.subr.bf16.mxu0 0
    %1334 = vmatpush1.bf16.msra.mxu0 0
    %1335 = vmatprep.subr.bf16.mxu0 0
    %1336 = vmatpush1.bf16.msra.mxu0 0
    %1337 = vmatprep.subr.bf16.mxu0 0
    %1338 = vmatpush1.bf16.msra.mxu0 0
    %1339 = vmatprep.subr.bf16.mxu0 0
    %1340 = vmatpush1.bf16.msra.mxu0 0
    %1341 = vmatprep.subr.bf16.mxu0 0
    %1342 = vmatpush1.bf16.msra.mxu0 0
    %1343 = vmatprep.subr.bf16.mxu0 0
    %1344 = vmatpush1.bf16.msra.mxu0 0
    %1345 = vmatprep.mubr.bf16.mxu0 0
    %1346 = vmatmul.mubr.bf16.gmra.mrb[0].mxu0 %v1311
    %v1347 = vpop.f32.mrb[0].mxu0
    %v1348 = vadd.f32 0.0, %v1347
    %v1349 = vpop.f32.mrb[0].mxu0
    %v1350 = vpop.f32.mrb[0].mxu0
    %v1351 = vadd.f32 0.0, %v1350
    %v1352 = vpop.f32.mrb[0].mxu0
    %1353 = vdwg.mxu0
    %v1355 = vsel %vm505, %v1088, 0
    %1357 = vmatprep.subr.bf16.mxu0 0
    %1358 = vmatpush1.bf16.msra.mxu0 %v500
    %1359 = vmatprep.subr.bf16.mxu0 0
    %1360 = vmatpush1.bf16.msra.mxu0 0
    %1361 = vmatprep.subr.bf16.mxu0 0
    %1362 = vmatpush1.bf16.msra.mxu0 0
    %1363 = vmatprep.subr.bf16.mxu0 0
    %1364 = vmatpush1.bf16.msra.mxu0 0
    %1365 = vmatprep.subr.bf16.mxu0 0
    %1366 = vmatpush1.bf16.msra.mxu0 0
    %1367 = vmatprep.subr.bf16.mxu0 0
    %1368 = vmatpush1.bf16.msra.mxu0 0
    %1369 = vmatprep.subr.bf16.mxu0 0
    %1370 = vmatpush1.bf16.msra.mxu0 0
    %1371 = vmatprep.subr.bf16.mxu0 0
    %1372 = vmatpush1.bf16.msra.mxu0 0
    %1373 = vmatprep.subr.bf16.mxu0 0
    %1374 = vmatpush1.bf16.msra.mxu0 0
    %1375 = vmatprep.subr.bf16.mxu0 0
    %1376 = vmatpush1.bf16.msra.mxu0 0
    %1377 = vmatprep.subr.bf16.mxu0 0
    %1378 = vmatpush1.bf16.msra.mxu0 0
    %1379 = vmatprep.subr.bf16.mxu0 0
    %1380 = vmatpush1.bf16.msra.mxu0 0
    %1381 = vmatprep.subr.bf16.mxu0 0
    %1382 = vmatpush1.bf16.msra.mxu0 0
    %1383 = vmatprep.subr.bf16.mxu0 0
    %1384 = vmatpush1.bf16.msra.mxu0 0
    %1385 = vmatprep.subr.bf16.mxu0 0
    %1386 = vmatpush1.bf16.msra.mxu0 0
    %1387 = vmatprep.subr.bf16.mxu0 0
    %1388 = vmatpush1.bf16.msra.mxu0 0
    %1389 = vmatprep.mubr.bf16.mxu0 0
    %1390 = vmatmul.mubr.bf16.gmra.mrb[0].mxu0 %v1355
    %v1391 = vpop.f32.mrb[0].mxu0
    %v1392 = vadd.f32 0.0, %v1391
    %v1393 = vpop.f32.mrb[0].mxu0
    %v1394 = vpop.f32.mrb[0].mxu0
    %v1395 = vadd.f32 0.0, %v1394
    %v1396 = vpop.f32.mrb[0].mxu0
    %1397 = vdwg.mxu0
    %v1399 = vsel %vm505, %v1089, 0
    %1401 = vmatprep.subr.bf16.mxu0 0
    %1402 = vmatpush1.bf16.msra.mxu0 %v503
    %1403 = vmatprep.subr.bf16.mxu0 0
    %1404 = vmatpush1.bf16.msra.mxu0 0
    %1405 = vmatprep.subr.bf16.mxu0 0
    %1406 = vmatpush1.bf16.msra.mxu0 0
    %1407 = vmatprep.subr.bf16.mxu0 0
    %1408 = vmatpush1.bf16.msra.mxu0 0
    %1409 = vmatprep.subr.bf16.mxu0 0
    %1410 = vmatpush1.bf16.msra.mxu0 0
    %1411 = vmatprep.subr.bf16.mxu0 0
    %1412 = vmatpush1.bf16.msra.mxu0 0
    %1413 = vmatprep.subr.bf16.mxu0 0
    %1414 = vmatpush1.bf16.msra.mxu0 0
    %1415 = vmatprep.subr.bf16.mxu0 0
    %1416 = vmatpush1.bf16.msra.mxu0 0
    %1417 = vmatprep.subr.bf16.mxu0 0
    %1418 = vmatpush1.bf16.msra.mxu0 0
    %1419 = vmatprep.subr.bf16.mxu0 0
    %1420 = vmatpush1.bf16.msra.mxu0 0
    %1421 = vmatprep.subr.bf16.mxu0 0
    %1422 = vmatpush1.bf16.msra.mxu0 0
    %1423 = vmatprep.subr.bf16.mxu0 0
    %1424 = vmatpush1.bf16.msra.mxu0 0
    %1425 = vmatprep.subr.bf16.mxu0 0
    %1426 = vmatpush1.bf16.msra.mxu0 0
    %1427 = vmatprep.subr.bf16.mxu0 0
    %1428 = vmatpush1.bf16.msra.mxu0 0
    %1429 = vmatprep.subr.bf16.mxu0 0
    %1430 = vmatpush1.bf16.msra.mxu0 0
    %1431 = vmatprep.subr.bf16.mxu0 0
    %1432 = vmatpush1.bf16.msra.mxu0 0
    %1433 = vmatprep.mubr.bf16.mxu0 0
    %1434 = vmatmul.mubr.bf16.gmra.mrb[0].mxu0 %v1399
    %v1435 = vpop.f32.mrb[0].mxu0
    %v1436 = vadd.f32 0.0, %v1435
    %v1437 = vpop.f32.mrb[0].mxu0
    %v1438 = vpop.f32.mrb[0].mxu0
    %v1439 = vadd.f32 0.0, %v1438
    %v1440 = vpop.f32.mrb[0].mxu0
    %1441 = vdwg.mxu0
    %v1442 = vpack.c.bf16 %v1131, %v1128
    %v1443 = vpack.c.bf16 %v1175, %v1172
    %v1444 = vpack.c.bf16 %v1219, %v1216
    %v1445 = vpack.c.bf16 %v1263, %v1260
    %v1446 = vpack.c.bf16 %v1307, %v1304
    %v1447 = vpack.c.bf16 %v1351, %v1348
    %v1448 = vpack.c.bf16 %v1395, %v1392
    %v1449 = vpack.c.bf16 %v1439, %v1436
    %v1450 = vld [vmem:[#allocation10] sm:$0xf]
    %v1451 = vld [vmem:[#allocation10 + $0x4] sm:$0xf]
    %v1452 = vld [vmem:[#allocation10 + $0x8] sm:$0xf]
    %v1453 = vld [vmem:[#allocation10 + $0xc] sm:$0xf]
    %v1456 = vunpack.c.l.b16 %v1452
    %v1457 = vunpack.c.l.b16 %v1453
    %v1458 = vpack.c.b16 %v1457, %v1456
    %v1461 = vsel %vm505, %v1443, 0
    %1463 = vmatprep.subr.bf16.mxu0 0
    %1464 = vmatpush1.bf16.msra.mxu0 %v1458
    %1465 = vmatprep.subr.bf16.mxu0 0
    %1466 = vmatpush1.bf16.msra.mxu0 0
    %1467 = vmatprep.subr.bf16.mxu0 0
    %1468 = vmatpush1.bf16.msra.mxu0 0
    %1469 = vmatprep.subr.bf16.mxu0 0
    %1470 = vmatpush1.bf16.msra.mxu0 0
    %1471 = vmatprep.subr.bf16.mxu0 0
    %1472 = vmatpush1.bf16.msra.mxu0 0
    %1473 = vmatprep.subr.bf16.mxu0 0
    %1474 = vmatpush1.bf16.msra.mxu0 0
    %1475 = vmatprep.subr.bf16.mxu0 0
    %1476 = vmatpush1.bf16.msra.mxu0 0
    %1477 = vmatprep.subr.bf16.mxu0 0
    %1478 = vmatpush1.bf16.msra.mxu0 0
    %1479 = vmatprep.subr.bf16.mxu0 0
    %1480 = vmatpush1.bf16.msra.mxu0 0
    %1481 = vmatprep.subr.bf16.mxu0 0
    %1482 = vmatpush1.bf16.msra.mxu0 0
    %1483 = vmatprep.subr.bf16.mxu0 0
    %1484 = vmatpush1.bf16.msra.mxu0 0
    %1485 = vmatprep.subr.bf16.mxu0 0
    %1486 = vmatpush1.bf16.msra.mxu0 0
    %1487 = vmatprep.subr.bf16.mxu0 0
    %1488 = vmatpush1.bf16.msra.mxu0 0
    %1489 = vmatprep.subr.bf16.mxu0 0
    %1490 = vmatpush1.bf16.msra.mxu0 0
    %1491 = vmatprep.subr.bf16.mxu0 0
    %1492 = vmatpush1.bf16.msra.mxu0 0
    %1493 = vmatprep.subr.bf16.mxu0 0
    %1494 = vmatpush1.bf16.msra.mxu0 0
    %1495 = vmatprep.mubr.bf16.mxu0 0
    %1496 = vmatmul.mubr.bf16.gmra.mrb[0].mxu0 %v1461
    %v1497 = vpop.f32.mrb[0].mxu0
    %v1498 = vadd.f32 0.0, %v1497
    %v1499 = vpop.f32.mrb[0].mxu0
    %v1500 = vpop.f32.mrb[0].mxu0
    %v1501 = vadd.f32 0.0, %v1500
    %v1502 = vpop.f32.mrb[0].mxu0
    %1503 = vdwg.mxu0
    %v1506 = vunpack.c.l.b16 %v1450
    %v1507 = vunpack.c.l.b16 %v1451
    %v1508 = vpack.c.b16 %v1507, %v1506
    %v1511 = vsel %vm505, %v1442, 0
    %1513 = vmatprep.subr.bf16.mxu0 0
    %1514 = vmatpush1.bf16.msra.mxu0 %v1508
    %1515 = vmatprep.subr.bf16.mxu0 0
    %1516 = vmatpush1.bf16.msra.mxu0 0
    %1517 = vmatprep.subr.bf16.mxu0 0
    %1518 = vmatpush1.bf16.msra.mxu0 0
    %1519 = vmatprep.subr.bf16.mxu0 0
    %1520 = vmatpush1.bf16.msra.mxu0 0
    %1521 = vmatprep.subr.bf16.mxu0 0
    %1522 = vmatpush1.bf16.msra.mxu0 0
    %1523 = vmatprep.subr.bf16.mxu0 0
    %1524 = vmatpush1.bf16.msra.mxu0 0
    %1525 = vmatprep.subr.bf16.mxu0 0
    %1526 = vmatpush1.bf16.msra.mxu0 0
    %1527 = vmatprep.subr.bf16.mxu0 0
    %1528 = vmatpush1.bf16.msra.mxu0 0
    %1529 = vmatprep.subr.bf16.mxu0 0
    %1530 = vmatpush1.bf16.msra.mxu0 0
    %1531 = vmatprep.subr.bf16.mxu0 0
    %1532 = vmatpush1.bf16.msra.mxu0 0
    %1533 = vmatprep.subr.bf16.mxu0 0
    %1534 = vmatpush1.bf16.msra.mxu0 0
    %1535 = vmatprep.subr.bf16.mxu0 0
    %1536 = vmatpush1.bf16.msra.mxu0 0
    %1537 = vmatprep.subr.bf16.mxu0 0
    %1538 = vmatpush1.bf16.msra.mxu0 0
    %1539 = vmatprep.subr.bf16.mxu0 0
    %1540 = vmatpush1.bf16.msra.mxu0 0
    %1541 = vmatprep.subr.bf16.mxu0 0
    %1542 = vmatpush1.bf16.msra.mxu0 0
    %1543 = vmatprep.subr.bf16.mxu0 0
    %1544 = vmatpush1.bf16.msra.mxu0 0
    %1545 = vmatprep.mubr.bf16.mxu0 0
    %1546 = vmatmul.mubr.bf16.gmra.mrb[0].mxu0 %v1511
    %v1547 = vpop.f32.mrb[0].mxu0
    %v1548 = vadd.f32 %v1498, %v1547
    %v1549 = vpop.f32.mrb[0].mxu0
    %v1550 = vpop.f32.mrb[0].mxu0
    %v1551 = vadd.f32 %v1501, %v1550
    %v1552 = vpop.f32.mrb[0].mxu0
    %1553 = vdwg.mxu0
    %v1554 = vld [vmem:[#allocation10 + $0x10] sm:$0xf]
    %v1555 = vld [vmem:[#allocation10 + $0x14] sm:$0xf]
    %v1558 = vunpack.c.l.b16 %v1554
    %v1559 = vunpack.c.l.b16 %v1555
    %v1560 = vpack.c.b16 %v1559, %v1558
    %v1563 = vsel %vm505, %v1444, 0
    %1565 = vmatprep.subr.bf16.mxu0 0
    %1566 = vmatpush1.bf16.msra.mxu0 %v1560
    %1567 = vmatprep.subr.bf16.mxu0 0
    %1568 = vmatpush1.bf16.msra.mxu0 0
    %1569 = vmatprep.subr.bf16.mxu0 0
    %1570 = vmatpush1.bf16.msra.mxu0 0
    %1571 = vmatprep.subr.bf16.mxu0 0
    %1572 = vmatpush1.bf16.msra.mxu0 0
    %1573 = vmatprep.subr.bf16.mxu0 0
    %1574 = vmatpush1.bf16.msra.mxu0 0
    %1575 = vmatprep.subr.bf16.mxu0 0
    %1576 = vmatpush1.bf16.msra.mxu0 0
    %1577 = vmatprep.subr.bf16.mxu0 0
    %1578 = vmatpush1.bf16.msra.mxu0 0
    %1579 = vmatprep.subr.bf16.mxu0 0
    %1580 = vmatpush1.bf16.msra.mxu0 0
    %1581 = vmatprep.subr.bf16.mxu0 0
    %1582 = vmatpush1.bf16.msra.mxu0 0
    %1583 = vmatprep.subr.bf16.mxu0 0
    %1584 = vmatpush1.bf16.msra.mxu0 0
    %1585 = vmatprep.subr.bf16.mxu0 0
    %1586 = vmatpush1.bf16.msra.mxu0 0
    %1587 = vmatprep.subr.bf16.mxu0 0
    %1588 = vmatpush1.bf16.msra.mxu0 0
    %1589 = vmatprep.subr.bf16.mxu0 0
    %1590 = vmatpush1.bf16.msra.mxu0 0
    %1591 = vmatprep.subr.bf16.mxu0 0
    %1592 = vmatpush1.bf16.msra.mxu0 0
    %1593 = vmatprep.subr.bf16.mxu0 0
    %1594 = vmatpush1.bf16.msra.mxu0 0
    %1595 = vmatprep.subr.bf16.mxu0 0
    %1596 = vmatpush1.bf16.msra.mxu0 0
    %1597 = vmatprep.mubr.bf16.mxu0 0
    %1598 = vmatmul.mubr.bf16.gmra.mrb[0].mxu0 %v1563
    %v1599 = vpop.f32.mrb[0].mxu0
    %v1600 = vadd.f32 0.0, %v1599
    %v1601 = vpop.f32.mrb[0].mxu0
    %v1602 = vpop.f32.mrb[0].mxu0
    %v1603 = vadd.f32 0.0, %v1602
    %v1604 = vpop.f32.mrb[0].mxu0
    %1605 = vdwg.mxu0
    %v1606 = vadd.f32 %v1548, %v1600
    %v1607 = vadd.f32 %v1551, %v1603
    %v1608 = vld [vmem:[#allocation10 + $0x18] sm:$0xf]
    %v1609 = vld [vmem:[#allocation10 + $0x1c] sm:$0xf]
    %v1612 = vunpack.c.l.b16 %v1608
    %v1613 = vunpack.c.l.b16 %v1609
    %v1614 = vpack.c.b16 %v1613, %v1612
    %v1617 = vsel %vm505, %v1445, 0
    %1619 = vmatprep.subr.bf16.mxu0 0
    %1620 = vmatpush1.bf16.msra.mxu0 %v1614
    %1621 = vmatprep.subr.bf16.mxu0 0
    %1622 = vmatpush1.bf16.msra.mxu0 0
    %1623 = vmatprep.subr.bf16.mxu0 0
    %1624 = vmatpush1.bf16.msra.mxu0 0
    %1625 = vmatprep.subr.bf16.mxu0 0
    %1626 = vmatpush1.bf16.msra.mxu0 0
    %1627 = vmatprep.subr.bf16.mxu0 0
    %1628 = vmatpush1.bf16.msra.mxu0 0
    %1629 = vmatprep.subr.bf16.mxu0 0
    %1630 = vmatpush1.bf16.msra.mxu0 0
    %1631 = vmatprep.subr.bf16.mxu0 0
    %1632 = vmatpush1.bf16.msra.mxu0 0
    %1633 = vmatprep.subr.bf16.mxu0 0
    %1634 = vmatpush1.bf16.msra.mxu0 0
    %1635 = vmatprep.subr.bf16.mxu0 0
    %1636 = vmatpush1.bf16.msra.mxu0 0
    %1637 = vmatprep.subr.bf16.mxu0 0
    %1638 = vmatpush1.bf16.msra.mxu0 0
    %1639 = vmatprep.subr.bf16.mxu0 0
    %1640 = vmatpush1.bf16.msra.mxu0 0
    %1641 = vmatprep.subr.bf16.mxu0 0
    %1642 = vmatpush1.bf16.msra.mxu0 0
    %1643 = vmatprep.subr.bf16.mxu0 0
    %1644 = vmatpush1.bf16.msra.mxu0 0
    %1645 = vmatprep.subr.bf16.mxu0 0
    %1646 = vmatpush1.bf16.msra.mxu0 0
    %1647 = vmatprep.subr.bf16.mxu0 0
    %1648 = vmatpush1.bf16.msra.mxu0 0
    %1649 = vmatprep.subr.bf16.mxu0 0
    %1650 = vmatpush1.bf16.msra.mxu0 0
    %1651 = vmatprep.mubr.bf16.mxu0 0
    %1652 = vmatmul.mubr.bf16.gmra.mrb[0].mxu0 %v1617
    %v1653 = vpop.f32.mrb[0].mxu0
    %v1654 = vadd.f32 0.0, %v1653
    %v1655 = vpop.f32.mrb[0].mxu0
    %v1656 = vpop.f32.mrb[0].mxu0
    %v1657 = vadd.f32 0.0, %v1656
    %v1658 = vpop.f32.mrb[0].mxu0
    %1659 = vdwg.mxu0
    %v1660 = vadd.f32 %v1606, %v1654
    %v1661 = vadd.f32 %v1607, %v1657
    %v1662 = vld [vmem:[#allocation10 + $0x20] sm:$0xf]
    %v1663 = vld [vmem:[#allocation10 + $0x24] sm:$0xf]
    %v1666 = vunpack.c.l.b16 %v1662
    %v1667 = vunpack.c.l.b16 %v1663
    %v1668 = vpack.c.b16 %v1667, %v1666
    %v1671 = vsel %vm505, %v1446, 0
    %1673 = vmatprep.subr.bf16.mxu0 0
    %1674 = vmatpush1.bf16.msra.mxu0 %v1668
    %1675 = vmatprep.subr.bf16.mxu0 0
    %1676 = vmatpush1.bf16.msra.mxu0 0
    %1677 = vmatprep.subr.bf16.mxu0 0
    %1678 = vmatpush1.bf16.msra.mxu0 0
    %1679 = vmatprep.subr.bf16.mxu0 0
    %1680 = vmatpush1.bf16.msra.mxu0 0
    %1681 = vmatprep.subr.bf16.mxu0 0
    %1682 = vmatpush1.bf16.msra.mxu0 0
    %1683 = vmatprep.subr.bf16.mxu0 0
    %1684 = vmatpush1.bf16.msra.mxu0 0
    %1685 = vmatprep.subr.bf16.mxu0 0
    %1686 = vmatpush1.bf16.msra.mxu0 0
    %1687 = vmatprep.subr.bf16.mxu0 0
    %1688 = vmatpush1.bf16.msra.mxu0 0
    %1689 = vmatprep.subr.bf16.mxu0 0
    %1690 = vmatpush1.bf16.msra.mxu0 0
    %1691 = vmatprep.subr.bf16.mxu0 0
    %1692 = vmatpush1.bf16.msra.mxu0 0
    %1693 = vmatprep.subr.bf16.mxu0 0
    %1694 = vmatpush1.bf16.msra.mxu0 0
    %1695 = vmatprep.subr.bf16.mxu0 0
    %1696 = vmatpush1.bf16.msra.mxu0 0
    %1697 = vmatprep.subr.bf16.mxu0 0
    %1698 = vmatpush1.bf16.msra.mxu0 0
    %1699 = vmatprep.subr.bf16.mxu0 0
    %1700 = vmatpush1.bf16.msra.mxu0 0
    %1701 = vmatprep.subr.bf16.mxu0 0
    %1702 = vmatpush1.bf16.msra.mxu0 0
    %1703 = vmatprep.subr.bf16.mxu0 0
    %1704 = vmatpush1.bf16.msra.mxu0 0
    %1705 = vmatprep.mubr.bf16.mxu0 0
    %1706 = vmatmul.mubr.bf16.gmra.mrb[0].mxu0 %v1671
    %v1707 = vpop.f32.mrb[0].mxu0
    %v1708 = vadd.f32 0.0, %v1707
    %v1709 = vpop.f32.mrb[0].mxu0
    %v1710 = vpop.f32.mrb[0].mxu0
    %v1711 = vadd.f32 0.0, %v1710
    %v1712 = vpop.f32.mrb[0].mxu0
    %1713 = vdwg.mxu0
    %v1714 = vadd.f32 %v1660, %v1708
    %v1715 = vadd.f32 %v1661, %v1711
    %v1716 = vld [vmem:[#allocation10 + $0x28] sm:$0xf]
    %v1717 = vld [vmem:[#allocation10 + $0x2c] sm:$0xf]
    %v1720 = vunpack.c.l.b16 %v1716
    %v1721 = vunpack.c.l.b16 %v1717
    %v1722 = vpack.c.b16 %v1721, %v1720
    %v1725 = vsel %vm505, %v1447, 0
    %1727 = vmatprep.subr.bf16.mxu0 0
    %1728 = vmatpush1.bf16.msra.mxu0 %v1722
    %1729 = vmatprep.subr.bf16.mxu0 0
    %1730 = vmatpush1.bf16.msra.mxu0 0
    %1731 = vmatprep.subr.bf16.mxu0 0
    %1732 = vmatpush1.bf16.msra.mxu0 0
    %1733 = vmatprep.subr.bf16.mxu0 0
    %1734 = vmatpush1.bf16.msra.mxu0 0
    %1735 = vmatprep.subr.bf16.mxu0 0
    %1736 = vmatpush1.bf16.msra.mxu0 0
    %1737 = vmatprep.subr.bf16.mxu0 0
    %1738 = vmatpush1.bf16.msra.mxu0 0
    %1739 = vmatprep.subr.bf16.mxu0 0
    %1740 = vmatpush1.bf16.msra.mxu0 0
    %1741 = vmatprep.subr.bf16.mxu0 0
    %1742 = vmatpush1.bf16.msra.mxu0 0
    %1743 = vmatprep.subr.bf16.mxu0 0
    %1744 = vmatpush1.bf16.msra.mxu0 0
    %1745 = vmatprep.subr.bf16.mxu0 0
    %1746 = vmatpush1.bf16.msra.mxu0 0
    %1747 = vmatprep.subr.bf16.mxu0 0
    %1748 = vmatpush1.bf16.msra.mxu0 0
    %1749 = vmatprep.subr.bf16.mxu0 0
    %1750 = vmatpush1.bf16.msra.mxu0 0
    %1751 = vmatprep.subr.bf16.mxu0 0
    %1752 = vmatpush1.bf16.msra.mxu0 0
    %1753 = vmatprep.subr.bf16.mxu0 0
    %1754 = vmatpush1.bf16.msra.mxu0 0
    %1755 = vmatprep.subr.bf16.mxu0 0
    %1756 = vmatpush1.bf16.msra.mxu0 0
    %1757 = vmatprep.subr.bf16.mxu0 0
    %1758 = vmatpush1.bf16.msra.mxu0 0
    %1759 = vmatprep.mubr.bf16.mxu0 0
    %1760 = vmatmul.mubr.bf16.gmra.mrb[0].mxu0 %v1725
    %v1761 = vpop.f32.mrb[0].mxu0
    %v1762 = vadd.f32 0.0, %v1761
    %v1763 = vpop.f32.mrb[0].mxu0
    %v1764 = vpop.f32.mrb[0].mxu0
    %v1765 = vadd.f32 0.0, %v1764
    %v1766 = vpop.f32.mrb[0].mxu0
    %1767 = vdwg.mxu0
    %v1768 = vadd.f32 %v1714, %v1762
    %v1769 = vadd.f32 %v1715, %v1765
    %v1770 = vld [vmem:[#allocation10 + $0x30] sm:$0xf]
    %v1771 = vld [vmem:[#allocation10 + $0x34] sm:$0xf]
    %v1774 = vunpack.c.l.b16 %v1770
    %v1775 = vunpack.c.l.b16 %v1771
    %v1776 = vpack.c.b16 %v1775, %v1774
    %v1779 = vsel %vm505, %v1448, 0
    %1781 = vmatprep.subr.bf16.mxu0 0
    %1782 = vmatpush1.bf16.msra.mxu0 %v1776
    %1783 = vmatprep.subr.bf16.mxu0 0
    %1784 = vmatpush1.bf16.msra.mxu0 0
    %1785 = vmatprep.subr.bf16.mxu0 0
    %1786 = vmatpush1.bf16.msra.mxu0 0
    %1787 = vmatprep.subr.bf16.mxu0 0
    %1788 = vmatpush1.bf16.msra.mxu0 0
    %1789 = vmatprep.subr.bf16.mxu0 0
    %1790 = vmatpush1.bf16.msra.mxu0 0
    %1791 = vmatprep.subr.bf16.mxu0 0
    %1792 = vmatpush1.bf16.msra.mxu0 0
    %1793 = vmatprep.subr.bf16.mxu0 0
    %1794 = vmatpush1.bf16.msra.mxu0 0
    %1795 = vmatprep.subr.bf16.mxu0 0
    %1796 = vmatpush1.bf16.msra.mxu0 0
    %1797 = vmatprep.subr.bf16.mxu0 0
    %1798 = vmatpush1.bf16.msra.mxu0 0
    %1799 = vmatprep.subr.bf16.mxu0 0
    %1800 = vmatpush1.bf16.msra.mxu0 0
    %1801 = vmatprep.subr.bf16.mxu0 0
    %1802 = vmatpush1.bf16.msra.mxu0 0
    %1803 = vmatprep.subr.bf16.mxu0 0
    %1804 = vmatpush1.bf16.msra.mxu0 0
    %1805 = vmatprep.subr.bf16.mxu0 0
    %1806 = vmatpush1.bf16.msra.mxu0 0
    %1807 = vmatprep.subr.bf16.mxu0 0
    %1808 = vmatpush1.bf16.msra.mxu0 0
    %1809 = vmatprep.subr.bf16.mxu0 0
    %1810 = vmatpush1.bf16.msra.mxu0 0
    %1811 = vmatprep.subr.bf16.mxu0 0
    %1812 = vmatpush1.bf16.msra.mxu0 0
    %1813 = vmatprep.mubr.bf16.mxu0 0
    %1814 = vmatmul.mubr.bf16.gmra.mrb[0].mxu0 %v1779
    %v1815 = vpop.f32.mrb[0].mxu0
    %v1816 = vadd.f32 0.0, %v1815
    %v1817 = vpop.f32.mrb[0].mxu0
    %v1818 = vpop.f32.mrb[0].mxu0
    %v1819 = vadd.f32 0.0, %v1818
    %v1820 = vpop.f32.mrb[0].mxu0
    %1821 = vdwg.mxu0
    %v1822 = vadd.f32 %v1768, %v1816
    %v1823 = vadd.f32 %v1769, %v1819
    %v1824 = vld [vmem:[#allocation10 + $0x38] sm:$0xf]
    %v1825 = vld [vmem:[#allocation10 + $0x3c] sm:$0xf]
    %v1828 = vunpack.c.l.b16 %v1824
    %v1829 = vunpack.c.l.b16 %v1825
    %v1830 = vpack.c.b16 %v1829, %v1828
    %v1833 = vsel %vm505, %v1449, 0
    %1835 = vmatprep.subr.bf16.mxu0 0
    %1836 = vmatpush1.bf16.msra.mxu0 %v1830
    %1837 = vmatprep.subr.bf16.mxu0 0
    %1838 = vmatpush1.bf16.msra.mxu0 0
    %1839 = vmatprep.subr.bf16.mxu0 0
    %1840 = vmatpush1.bf16.msra.mxu0 0
    %1841 = vmatprep.subr.bf16.mxu0 0
    %1842 = vmatpush1.bf16.msra.mxu0 0
    %1843 = vmatprep.subr.bf16.mxu0 0
    %1844 = vmatpush1.bf16.msra.mxu0 0
    %1845 = vmatprep.subr.bf16.mxu0 0
    %1846 = vmatpush1.bf16.msra.mxu0 0
    %1847 = vmatprep.subr.bf16.mxu0 0
    %1848 = vmatpush1.bf16.msra.mxu0 0
    %1849 = vmatprep.subr.bf16.mxu0 0
    %1850 = vmatpush1.bf16.msra.mxu0 0
    %1851 = vmatprep.subr.bf16.mxu0 0
    %1852 = vmatpush1.bf16.msra.mxu0 0
    %1853 = vmatprep.subr.bf16.mxu0 0
    %1854 = vmatpush1.bf16.msra.mxu0 0
    %1855 = vmatprep.subr.bf16.mxu0 0
    %1856 = vmatpush1.bf16.msra.mxu0 0
    %1857 = vmatprep.subr.bf16.mxu0 0
    %1858 = vmatpush1.bf16.msra.mxu0 0
    %1859 = vmatprep.subr.bf16.mxu0 0
    %1860 = vmatpush1.bf16.msra.mxu0 0
    %1861 = vmatprep.subr.bf16.mxu0 0
    %1862 = vmatpush1.bf16.msra.mxu0 0
    %1863 = vmatprep.subr.bf16.mxu0 0
    %1864 = vmatpush1.bf16.msra.mxu0 0
    %1865 = vmatprep.subr.bf16.mxu0 0
    %1866 = vmatpush1.bf16.msra.mxu0 0
    %1867 = vmatprep.mubr.bf16.mxu0 0
    %1868 = vmatmul.mubr.bf16.gmra.mrb[0].mxu0 %v1833
    %v1869 = vpop.f32.mrb[0].mxu0
    %v1870 = vadd.f32 0.0, %v1869
    %v1871 = vpop.f32.mrb[0].mxu0
    %v1872 = vpop.f32.mrb[0].mxu0
    %v1873 = vadd.f32 0.0, %v1872
    %v1874 = vpop.f32.mrb[0].mxu0
    %1875 = vdwg.mxu0
    %v1876 = vadd.f32 %v1822, %v1870
    %v1877 = vadd.f32 %v1823, %v1873
    %1879 = vrot.lane.b32.xlu0 %v287, 112
    %v1880 = vpop.permute.xlu0 %1879
    %1881 = vrot.lane.b32.xlu0 %v287, 96
    %v1882 = vpop.permute.xlu0 %1881
    %1883 = vrot.lane.b32.xlu0 %v287, 80
    %v1884 = vpop.permute.xlu0 %1883
    %1885 = vrot.lane.b32.xlu0 %v287, 64
    %v1886 = vpop.permute.xlu0 %1885
    %1887 = vrot.lane.b32.xlu0 %v287, 48
    %v1888 = vpop.permute.xlu0 %1887
    %1889 = vrot.lane.b32.xlu0 %v287, 32
    %v1890 = vpop.permute.xlu0 %1889
    %1891 = vrot.lane.b32.xlu0 %v287, 16
    %v1892 = vpop.permute.xlu0 %1891
    %1894 = vrot.lane.b32.xlu0 %v451, 112
    %v1895 = vpop.permute.xlu0 %1894
    %1896 = vrot.lane.b32.xlu0 %v451, 96
    %v1897 = vpop.permute.xlu0 %1896
    %1898 = vrot.lane.b32.xlu0 %v451, 80
    %v1899 = vpop.permute.xlu0 %1898
    %1900 = vrot.lane.b32.xlu0 %v451, 64
    %v1901 = vpop.permute.xlu0 %1900
    %1902 = vrot.lane.b32.xlu0 %v451, 48
    %v1903 = vpop.permute.xlu0 %1902
    %1904 = vrot.lane.b32.xlu0 %v451, 32
    %v1905 = vpop.permute.xlu0 %1904
    %1906 = vrot.lane.b32.xlu0 %v451, 16
    %v1907 = vpop.permute.xlu0 %1906
    %1909 = vrot.lane.b32.xlu0 %v452, 112
    %v1910 = vpop.permute.xlu0 %1909
    %1912 = vrot.lane.b32.xlu0 %v452, 96
    %v1913 = vpop.permute.xlu0 %1912
    %1915 = vrot.lane.b32.xlu0 %v452, 80
    %v1916 = vpop.permute.xlu0 %1915
    %1918 = vrot.lane.b32.xlu0 %v452, 64
    %v1919 = vpop.permute.xlu0 %1918
    %1921 = vrot.lane.b32.xlu0 %v452, 48
    %v1922 = vpop.permute.xlu0 %1921
    %1924 = vrot.lane.b32.xlu0 %v452, 32
    %v1925 = vpop.permute.xlu0 %1924
    %1927 = vrot.lane.b32.xlu0 %v452, 16
    %v1928 = vpop.permute.xlu0 %1927
    %v1931 = vsel %vm505, %v287, 0
    %v1934 = vsel %vm505, %v451, 0
    %1936 = vmatprep.subr.bf16.mxu0 0
    %1937 = vmatpush1.bf16.xpose.msra.mxu0 %v1934
    %1938 = vmatprep.subr.bf16.mxu0 0
    %1939 = vmatpush1.bf16.xpose.msra.mxu0 0
    %1940 = vmatprep.subr.bf16.mxu0 0
    %1941 = vmatpush1.bf16.xpose.msra.mxu0 0
    %1942 = vmatprep.subr.bf16.mxu0 0
    %1943 = vmatpush1.bf16.xpose.msra.mxu0 0
    %1944 = vmatprep.subr.bf16.mxu0 0
    %1945 = vmatpush1.bf16.xpose.msra.mxu0 0
    %1946 = vmatprep.subr.bf16.mxu0 0
    %1947 = vmatpush1.bf16.xpose.msra.mxu0 0
    %1948 = vmatprep.subr.bf16.mxu0 0
    %1949 = vmatpush1.bf16.xpose.msra.mxu0 0
    %1950 = vmatprep.subr.bf16.mxu0 0
    %1951 = vmatpush1.bf16.xpose.msra.mxu0 0
    %1952 = vmatprep.subr.bf16.mxu0 0
    %1953 = vmatpush1.bf16.xpose.msra.mxu0 0
    %1954 = vmatprep.subr.bf16.mxu0 0
    %1955 = vmatpush1.bf16.xpose.msra.mxu0 0
    %1956 = vmatprep.subr.bf16.mxu0 0
    %1957 = vmatpush1.bf16.xpose.msra.mxu0 0
    %1958 = vmatprep.subr.bf16.mxu0 0
    %1959 = vmatpush1.bf16.xpose.msra.mxu0 0
    %1960 = vmatprep.subr.bf16.mxu0 0
    %1961 = vmatpush1.bf16.xpose.msra.mxu0 0
    %1962 = vmatprep.subr.bf16.mxu0 0
    %1963 = vmatpush1.bf16.xpose.msra.mxu0 0
    %1964 = vmatprep.subr.bf16.mxu0 0
    %1965 = vmatpush1.bf16.xpose.msra.mxu0 0
    %1966 = vmatprep.subr.bf16.mxu0 0
    %1967 = vmatpush1.bf16.xpose.msra.mxu0 0
    %1968 = vmatprep.mubr.bf16.mxu0 0
    %1969 = vmatmul.mubr.bf16.gmra.mrb[0].mxu0 %v1931
    %v1970 = vpop.f32.mrb[0].mxu0
    %v1971 = vadd.f32 0.0, %v1970
    %v1972 = vpop.f32.mrb[0].mxu0
    %v1973 = vpop.f32.mrb[0].mxu0
    %v1974 = vadd.f32 0.0, %v1973
    %v1975 = vpop.f32.mrb[0].mxu0
    %1976 = vdwg.mxu0
    %v1978 = vsel %vm505, %v1880, 0
    %v1981 = vsel %vm505, %v1895, 0
    %1983 = vmatprep.subr.bf16.mxu0 0
    %1984 = vmatpush1.bf16.xpose.msra.mxu0 %v1981
    %1985 = vmatprep.subr.bf16.mxu0 0
    %1986 = vmatpush1.bf16.xpose.msra.mxu0 0
    %1987 = vmatprep.subr.bf16.mxu0 0
    %1988 = vmatpush1.bf16.xpose.msra.mxu0 0
    %1989 = vmatprep.subr.bf16.mxu0 0
    %1990 = vmatpush1.bf16.xpose.msra.mxu0 0
    %1991 = vmatprep.subr.bf16.mxu0 0
    %1992 = vmatpush1.bf16.xpose.msra.mxu0 0
    %1993 = vmatprep.subr.bf16.mxu0 0
    %1994 = vmatpush1.bf16.xpose.msra.mxu0 0
    %1995 = vmatprep.subr.bf16.mxu0 0
    %1996 = vmatpush1.bf16.xpose.msra.mxu0 0
    %1997 = vmatprep.subr.bf16.mxu0 0
    %1998 = vmatpush1.bf16.xpose.msra.mxu0 0
    %1999 = vmatprep.subr.bf16.mxu0 0
    %2000 = vmatpush1.bf16.xpose.msra.mxu0 0
    %2001 = vmatprep.subr.bf16.mxu0 0
    %2002 = vmatpush1.bf16.xpose.msra.mxu0 0
    %2003 = vmatprep.subr.bf16.mxu0 0
    %2004 = vmatpush1.bf16.xpose.msra.mxu0 0
    %2005 = vmatprep.subr.bf16.mxu0 0
    %2006 = vmatpush1.bf16.xpose.msra.mxu0 0
    %2007 = vmatprep.subr.bf16.mxu0 0
    %2008 = vmatpush1.bf16.xpose.msra.mxu0 0
    %2009 = vmatprep.subr.bf16.mxu0 0
    %2010 = vmatpush1.bf16.xpose.msra.mxu0 0
    %2011 = vmatprep.subr.bf16.mxu0 0
    %2012 = vmatpush1.bf16.xpose.msra.mxu0 0
    %2013 = vmatprep.subr.bf16.mxu0 0
    %2014 = vmatpush1.bf16.xpose.msra.mxu0 0
    %2015 = vmatprep.mubr.bf16.mxu0 0
    %2016 = vmatmul.mubr.bf16.gmra.mrb[0].mxu0 %v1978
    %v2017 = vpop.f32.mrb[0].mxu0
    %v2018 = vadd.f32 0.0, %v2017
    %v2019 = vpop.f32.mrb[0].mxu0
    %v2020 = vpop.f32.mrb[0].mxu0
    %v2021 = vadd.f32 0.0, %v2020
    %v2022 = vpop.f32.mrb[0].mxu0
    %2023 = vdwg.mxu0
    %v2025 = vsel %vm505, %v1882, 0
    %v2028 = vsel %vm505, %v1897, 0
    %2030 = vmatprep.subr.bf16.mxu0 0
    %2031 = vmatpush1.bf16.xpose.msra.mxu0 %v2028
    %2032 = vmatprep.subr.bf16.mxu0 0
    %2033 = vmatpush1.bf16.xpose.msra.mxu0 0
    %2034 = vmatprep.subr.bf16.mxu0 0
    %2035 = vmatpush1.bf16.xpose.msra.mxu0 0
    %2036 = vmatprep.subr.bf16.mxu0 0
    %2037 = vmatpush1.bf16.xpose.msra.mxu0 0
    %2038 = vmatprep.subr.bf16.mxu0 0
    %2039 = vmatpush1.bf16.xpose.msra.mxu0 0
    %2040 = vmatprep.subr.bf16.mxu0 0
    %2041 = vmatpush1.bf16.xpose.msra.mxu0 0
    %2042 = vmatprep.subr.bf16.mxu0 0
    %2043 = vmatpush1.bf16.xpose.msra.mxu0 0
    %2044 = vmatprep.subr.bf16.mxu0 0
    %2045 = vmatpush1.bf16.xpose.msra.mxu0 0
    %2046 = vmatprep.subr.bf16.mxu0 0
    %2047 = vmatpush1.bf16.xpose.msra.mxu0 0
    %2048 = vmatprep.subr.bf16.mxu0 0
    %2049 = vmatpush1.bf16.xpose.msra.mxu0 0
    %2050 = vmatprep.subr.bf16.mxu0 0
    %2051 = vmatpush1.bf16.xpose.msra.mxu0 0
    %2052 = vmatprep.subr.bf16.mxu0 0
    %2053 = vmatpush1.bf16.xpose.msra.mxu0 0
    %2054 = vmatprep.subr.bf16.mxu0 0
    %2055 = vmatpush1.bf16.xpose.msra.mxu0 0
    %2056 = vmatprep.subr.bf16.mxu0 0
    %2057 = vmatpush1.bf16.xpose.msra.mxu0 0
    %2058 = vmatprep.subr.bf16.mxu0 0
    %2059 = vmatpush1.bf16.xpose.msra.mxu0 0
    %2060 = vmatprep.subr.bf16.mxu0 0
    %2061 = vmatpush1.bf16.xpose.msra.mxu0 0
    %2062 = vmatprep.mubr.bf16.mxu0 0
    %2063 = vmatmul.mubr.bf16.gmra.mrb[0].mxu0 %v2025
    %v2064 = vpop.f32.mrb[0].mxu0
    %v2065 = vadd.f32 0.0, %v2064
    %v2066 = vpop.f32.mrb[0].mxu0
    %v2067 = vpop.f32.mrb[0].mxu0
    %v2068 = vadd.f32 0.0, %v2067
    %v2069 = vpop.f32.mrb[0].mxu0
    %2070 = vdwg.mxu0
    %v2072 = vsel %vm505, %v1884, 0
    %v2075 = vsel %vm505, %v1899, 0
    %2077 = vmatprep.subr.bf16.mxu0 0
    %2078 = vmatpush1.bf16.xpose.msra.mxu0 %v2075
    %2079 = vmatprep.subr.bf16.mxu0 0
    %2080 = vmatpush1.bf16.xpose.msra.mxu0 0
    %2081 = vmatprep.subr.bf16.mxu0 0
    %2082 = vmatpush1.bf16.xpose.msra.mxu0 0
    %2083 = vmatprep.subr.bf16.mxu0 0
    %2084 = vmatpush1.bf16.xpose.msra.mxu0 0
    %2085 = vmatprep.subr.bf16.mxu0 0
    %2086 = vmatpush1.bf16.xpose.msra.mxu0 0
    %2087 = vmatprep.subr.bf16.mxu0 0
    %2088 = vmatpush1.bf16.xpose.msra.mxu0 0
    %2089 = vmatprep.subr.bf16.mxu0 0
    %2090 = vmatpush1.bf16.xpose.msra.mxu0 0
    %2091 = vmatprep.subr.bf16.mxu0 0
    %2092 = vmatpush1.bf16.xpose.msra.mxu0 0
    %2093 = vmatprep.subr.bf16.mxu0 0
    %2094 = vmatpush1.bf16.xpose.msra.mxu0 0
    %2095 = vmatprep.subr.bf16.mxu0 0
    %2096 = vmatpush1.bf16.xpose.msra.mxu0 0
    %2097 = vmatprep.subr.bf16.mxu0 0
    %2098 = vmatpush1.bf16.xpose.msra.mxu0 0
    %2099 = vmatprep.subr.bf16.mxu0 0
    %2100 = vmatpush1.bf16.xpose.msra.mxu0 0
    %2101 = vmatprep.subr.bf16.mxu0 0
    %2102 = vmatpush1.bf16.xpose.msra.mxu0 0
    %2103 = vmatprep.subr.bf16.mxu0 0
    %2104 = vmatpush1.bf16.xpose.msra.mxu0 0
    %2105 = vmatprep.subr.bf16.mxu0 0
    %2106 = vmatpush1.bf16.xpose.msra.mxu0 0
    %2107 = vmatprep.subr.bf16.mxu0 0
    %2108 = vmatpush1.bf16.xpose.msra.mxu0 0
    %2109 = vmatprep.mubr.bf16.mxu0 0
    %2110 = vmatmul.mubr.bf16.gmra.mrb[0].mxu0 %v2072
    %v2111 = vpop.f32.mrb[0].mxu0
    %v2112 = vadd.f32 0.0, %v2111
    %v2113 = vpop.f32.mrb[0].mxu0
    %v2114 = vpop.f32.mrb[0].mxu0
    %v2115 = vadd.f32 0.0, %v2114
    %v2116 = vpop.f32.mrb[0].mxu0
    %2117 = vdwg.mxu0
    %v2119 = vsel %vm505, %v1886, 0
    %v2122 = vsel %vm505, %v1901, 0
    %2124 = vmatprep.subr.bf16.mxu0 0
    %2125 = vmatpush1.bf16.xpose.msra.mxu0 %v2122
    %2126 = vmatprep.subr.bf16.mxu0 0
    %2127 = vmatpush1.bf16.xpose.msra.mxu0 0
    %2128 = vmatprep.subr.bf16.mxu0 0
    %2129 = vmatpush1.bf16.xpose.msra.mxu0 0
    %2130 = vmatprep.subr.bf16.mxu0 0
    %2131 = vmatpush1.bf16.xpose.msra.mxu0 0
    %2132 = vmatprep.subr.bf16.mxu0 0
    %2133 = vmatpush1.bf16.xpose.msra.mxu0 0
    %2134 = vmatprep.subr.bf16.mxu0 0
    %2135 = vmatpush1.bf16.xpose.msra.mxu0 0
    %2136 = vmatprep.subr.bf16.mxu0 0
    %2137 = vmatpush1.bf16.xpose.msra.mxu0 0
    %2138 = vmatprep.subr.bf16.mxu0 0
    %2139 = vmatpush1.bf16.xpose.msra.mxu0 0
    %2140 = vmatprep.subr.bf16.mxu0 0
    %2141 = vmatpush1.bf16.xpose.msra.mxu0 0
    %2142 = vmatprep.subr.bf16.mxu0 0
    %2143 = vmatpush1.bf16.xpose.msra.mxu0 0
    %2144 = vmatprep.subr.bf16.mxu0 0
    %2145 = vmatpush1.bf16.xpose.msra.mxu0 0
    %2146 = vmatprep.subr.bf16.mxu0 0
    %2147 = vmatpush1.bf16.xpose.msra.mxu0 0
    %2148 = vmatprep.subr.bf16.mxu0 0
    %2149 = vmatpush1.bf16.xpose.msra.mxu0 0
    %2150 = vmatprep.subr.bf16.mxu0 0
    %2151 = vmatpush1.bf16.xpose.msra.mxu0 0
    %2152 = vmatprep.subr.bf16.mxu0 0
    %2153 = vmatpush1.bf16.xpose.msra.mxu0 0
    %2154 = vmatprep.subr.bf16.mxu0 0
    %2155 = vmatpush1.bf16.xpose.msra.mxu0 0
    %2156 = vmatprep.mubr.bf16.mxu0 0
    %2157 = vmatmul.mubr.bf16.gmra.mrb[0].mxu0 %v2119
    %v2158 = vpop.f32.mrb[0].mxu0
    %v2159 = vadd.f32 0.0, %v2158
    %v2160 = vpop.f32.mrb[0].mxu0
    %v2161 = vpop.f32.mrb[0].mxu0
    %v2162 = vadd.f32 0.0, %v2161
    %v2163 = vpop.f32.mrb[0].mxu0
    %2164 = vdwg.mxu0
    %v2166 = vsel %vm505, %v1888, 0
    %v2169 = vsel %vm505, %v1903, 0
    %2171 = vmatprep.subr.bf16.mxu0 0
    %2172 = vmatpush1.bf16.xpose.msra.mxu0 %v2169
    %2173 = vmatprep.subr.bf16.mxu0 0
    %2174 = vmatpush1.bf16.xpose.msra.mxu0 0
    %2175 = vmatprep.subr.bf16.mxu0 0
    %2176 = vmatpush1.bf16.xpose.msra.mxu0 0
    %2177 = vmatprep.subr.bf16.mxu0 0
    %2178 = vmatpush1.bf16.xpose.msra.mxu0 0
    %2179 = vmatprep.subr.bf16.mxu0 0
    %2180 = vmatpush1.bf16.xpose.msra.mxu0 0
    %2181 = vmatprep.subr.bf16.mxu0 0
    %2182 = vmatpush1.bf16.xpose.msra.mxu0 0
    %2183 = vmatprep.subr.bf16.mxu0 0
    %2184 = vmatpush1.bf16.xpose.msra.mxu0 0
    %2185 = vmatprep.subr.bf16.mxu0 0
    %2186 = vmatpush1.bf16.xpose.msra.mxu0 0
    %2187 = vmatprep.subr.bf16.mxu0 0
    %2188 = vmatpush1.bf16.xpose.msra.mxu0 0
    %2189 = vmatprep.subr.bf16.mxu0 0
    %2190 = vmatpush1.bf16.xpose.msra.mxu0 0
    %2191 = vmatprep.subr.bf16.mxu0 0
    %2192 = vmatpush1.bf16.xpose.msra.mxu0 0
    %2193 = vmatprep.subr.bf16.mxu0 0
    %2194 = vmatpush1.bf16.xpose.msra.mxu0 0
    %2195 = vmatprep.subr.bf16.mxu0 0
    %2196 = vmatpush1.bf16.xpose.msra.mxu0 0
    %2197 = vmatprep.subr.bf16.mxu0 0
    %2198 = vmatpush1.bf16.xpose.msra.mxu0 0
    %2199 = vmatprep.subr.bf16.mxu0 0
    %2200 = vmatpush1.bf16.xpose.msra.mxu0 0
    %2201 = vmatprep.subr.bf16.mxu0 0
    %2202 = vmatpush1.bf16.xpose.msra.mxu0 0
    %2203 = vmatprep.mubr.bf16.mxu0 0
    %2204 = vmatmul.mubr.bf16.gmra.mrb[0].mxu0 %v2166
    %v2205 = vpop.f32.mrb[0].mxu0
    %v2206 = vadd.f32 0.0, %v2205
    %v2207 = vpop.f32.mrb[0].mxu0
    %v2208 = vpop.f32.mrb[0].mxu0
    %v2209 = vadd.f32 0.0, %v2208
    %v2210 = vpop.f32.mrb[0].mxu0
    %2211 = vdwg.mxu0
    %v2213 = vsel %vm505, %v1890, 0
    %v2216 = vsel %vm505, %v1905, 0
    %2218 = vmatprep.subr.bf16.mxu0 0
    %2219 = vmatpush1.bf16.xpose.msra.mxu0 %v2216
    %2220 = vmatprep.subr.bf16.mxu0 0
    %2221 = vmatpush1.bf16.xpose.msra.mxu0 0
    %2222 = vmatprep.subr.bf16.mxu0 0
    %2223 = vmatpush1.bf16.xpose.msra.mxu0 0
    %2224 = vmatprep.subr.bf16.mxu0 0
    %2225 = vmatpush1.bf16.xpose.msra.mxu0 0
    %2226 = vmatprep.subr.bf16.mxu0 0
    %2227 = vmatpush1.bf16.xpose.msra.mxu0 0
    %2228 = vmatprep.subr.bf16.mxu0 0
    %2229 = vmatpush1.bf16.xpose.msra.mxu0 0
    %2230 = vmatprep.subr.bf16.mxu0 0
    %2231 = vmatpush1.bf16.xpose.msra.mxu0 0
    %2232 = vmatprep.subr.bf16.mxu0 0
    %2233 = vmatpush1.bf16.xpose.msra.mxu0 0
    %2234 = vmatprep.subr.bf16.mxu0 0
    %2235 = vmatpush1.bf16.xpose.msra.mxu0 0
    %2236 = vmatprep.subr.bf16.mxu0 0
    %2237 = vmatpush1.bf16.xpose.msra.mxu0 0
    %2238 = vmatprep.subr.bf16.mxu0 0
    %2239 = vmatpush1.bf16.xpose.msra.mxu0 0
    %2240 = vmatprep.subr.bf16.mxu0 0
    %2241 = vmatpush1.bf16.xpose.msra.mxu0 0
    %2242 = vmatprep.subr.bf16.mxu0 0
    %2243 = vmatpush1.bf16.xpose.msra.mxu0 0
    %2244 = vmatprep.subr.bf16.mxu0 0
    %2245 = vmatpush1.bf16.xpose.msra.mxu0 0
    %2246 = vmatprep.subr.bf16.mxu0 0
    %2247 = vmatpush1.bf16.xpose.msra.mxu0 0
    %2248 = vmatprep.subr.bf16.mxu0 0
    %2249 = vmatpush1.bf16.xpose.msra.mxu0 0
    %2250 = vmatprep.mubr.bf16.mxu0 0
    %2251 = vmatmul.mubr.bf16.gmra.mrb[0].mxu0 %v2213
    %v2252 = vpop.f32.mrb[0].mxu0
    %v2253 = vadd.f32 0.0, %v2252
    %v2254 = vpop.f32.mrb[0].mxu0
    %v2255 = vpop.f32.mrb[0].mxu0
    %v2256 = vadd.f32 0.0, %v2255
    %v2257 = vpop.f32.mrb[0].mxu0
    %2258 = vdwg.mxu0
    %v2260 = vsel %vm505, %v1892, 0
    %v2263 = vsel %vm505, %v1907, 0
    %2265 = vmatprep.subr.bf16.mxu0 0
    %2266 = vmatpush1.bf16.xpose.msra.mxu0 %v2263
    %2267 = vmatprep.subr.bf16.mxu0 0
    %2268 = vmatpush1.bf16.xpose.msra.mxu0 0
    %2269 = vmatprep.subr.bf16.mxu0 0
    %2270 = vmatpush1.bf16.xpose.msra.mxu0 0
    %2271 = vmatprep.subr.bf16.mxu0 0
    %2272 = vmatpush1.bf16.xpose.msra.mxu0 0
    %2273 = vmatprep.subr.bf16.mxu0 0
    %2274 = vmatpush1.bf16.xpose.msra.mxu0 0
    %2275 = vmatprep.subr.bf16.mxu0 0
    %2276 = vmatpush1.bf16.xpose.msra.mxu0 0
    %2277 = vmatprep.subr.bf16.mxu0 0
    %2278 = vmatpush1.bf16.xpose.msra.mxu0 0
    %2279 = vmatprep.subr.bf16.mxu0 0
    %2280 = vmatpush1.bf16.xpose.msra.mxu0 0
    %2281 = vmatprep.subr.bf16.mxu0 0
    %2282 = vmatpush1.bf16.xpose.msra.mxu0 0
    %2283 = vmatprep.subr.bf16.mxu0 0
    %2284 = vmatpush1.bf16.xpose.msra.mxu0 0
    %2285 = vmatprep.subr.bf16.mxu0 0
    %2286 = vmatpush1.bf16.xpose.msra.mxu0 0
    %2287 = vmatprep.subr.bf16.mxu0 0
    %2288 = vmatpush1.bf16.xpose.msra.mxu0 0
    %2289 = vmatprep.subr.bf16.mxu0 0
    %2290 = vmatpush1.bf16.xpose.msra.mxu0 0
    %2291 = vmatprep.subr.bf16.mxu0 0
    %2292 = vmatpush1.bf16.xpose.msra.mxu0 0
    %2293 = vmatprep.subr.bf16.mxu0 0
    %2294 = vmatpush1.bf16.xpose.msra.mxu0 0
    %2295 = vmatprep.subr.bf16.mxu0 0
    %2296 = vmatpush1.bf16.xpose.msra.mxu0 0
    %2297 = vmatprep.mubr.bf16.mxu0 0
    %2298 = vmatmul.mubr.bf16.gmra.mrb[0].mxu0 %v2260
    %v2299 = vpop.f32.mrb[0].mxu0
    %v2300 = vadd.f32 0.0, %v2299
    %v2301 = vpop.f32.mrb[0].mxu0
    %v2302 = vpop.f32.mrb[0].mxu0
    %v2303 = vadd.f32 0.0, %v2302
    %v2304 = vpop.f32.mrb[0].mxu0
    %2305 = vdwg.mxu0
    %s2306 = scalar_lea.vmem %s2, 1
    %v2307 = vld [vmem:[%s2306] sm:$0x1]
    %vm2308 = vcmp.gt.f32.partialorder %v2307, 0.5
    %v2309 = vsel %vm2308, 1, 0
    %v2310 = vlaneseq
    %v2311 = vshrl.u32 %v2310, 7
    %v2312 = vsub.s32 0, %v2311
    %v2313 = vrot.slane %v2309, %v2312
    %vm2314 = vcmp.eq.s32.totalorder %v2313, 1
    %v2315 = vsel %vm2314, -1e+09, %v1971
    %v2316 = vsel %vm2314, -1e+09, %v1974
    %v2317 = vsel %vm2314, -1e+09, %v2018
    %v2318 = vsel %vm2314, -1e+09, %v2021
    %v2319 = vsel %vm2314, -1e+09, %v2065
    %v2320 = vsel %vm2314, -1e+09, %v2068
    %v2321 = vsel %vm2314, -1e+09, %v2112
    %v2322 = vsel %vm2314, -1e+09, %v2115
    %v2323 = vsel %vm2314, -1e+09, %v2159
    %v2324 = vsel %vm2314, -1e+09, %v2162
    %v2325 = vsel %vm2314, -1e+09, %v2206
    %v2326 = vsel %vm2314, -1e+09, %v2209
    %v2327 = vsel %vm2314, -1e+09, %v2253
    %v2328 = vsel %vm2314, -1e+09, %v2256
    %v2329 = vsel %vm2314, -1e+09, %v2300
    %v2330 = vsel %vm2314, -1e+09, %v2303
    %v2331 = vsel %vm505, %v2315, -inf
    %2332 = vmax.xlane.f32.xlu0 %v2331
    %v2333 = vpop.xlane.xlu0 %2332
    %v2334 = vsel %vm505, %v2316, -inf
    %2335 = vmax.xlane.f32.xlu0 %v2334
    %v2336 = vpop.xlane.xlu0 %2335
    %v2337 = vsel %vm505, %v2317, -inf
    %2338 = vmax.xlane.f32.xlu0 %v2337
    %v2339 = vpop.xlane.xlu0 %2338
    %v2340 = vsel %vm505, %v2318, -inf
    %2341 = vmax.xlane.f32.xlu0 %v2340
    %v2342 = vpop.xlane.xlu0 %2341
    %v2343 = vsel %vm505, %v2319, -inf
    %2344 = vmax.xlane.f32.xlu0 %v2343
    %v2345 = vpop.xlane.xlu0 %2344
    %v2346 = vsel %vm505, %v2320, -inf
    %2347 = vmax.xlane.f32.xlu0 %v2346
    %v2348 = vpop.xlane.xlu0 %2347
    %v2349 = vsel %vm505, %v2321, -inf
    %2350 = vmax.xlane.f32.xlu0 %v2349
    %v2351 = vpop.xlane.xlu0 %2350
    %v2352 = vsel %vm505, %v2322, -inf
    %2353 = vmax.xlane.f32.xlu0 %v2352
    %v2354 = vpop.xlane.xlu0 %2353
    %v2355 = vsel %vm505, %v2323, -inf
    %2356 = vmax.xlane.f32.xlu0 %v2355
    %v2357 = vpop.xlane.xlu0 %2356
    %v2358 = vsel %vm505, %v2324, -inf
    %2359 = vmax.xlane.f32.xlu0 %v2358
    %v2360 = vpop.xlane.xlu0 %2359
    %v2361 = vsel %vm505, %v2325, -inf
    %2362 = vmax.xlane.f32.xlu0 %v2361
    %v2363 = vpop.xlane.xlu0 %2362
    %v2364 = vsel %vm505, %v2326, -inf
    %2365 = vmax.xlane.f32.xlu0 %v2364
    %v2366 = vpop.xlane.xlu0 %2365
    %v2367 = vsel %vm505, %v2327, -inf
    %2368 = vmax.xlane.f32.xlu0 %v2367
    %v2369 = vpop.xlane.xlu0 %2368
    %v2370 = vsel %vm505, %v2328, -inf
    %2371 = vmax.xlane.f32.xlu0 %v2370
    %v2372 = vpop.xlane.xlu0 %2371
    %v2373 = vsel %vm505, %v2329, -inf
    %2374 = vmax.xlane.f32.xlu0 %v2373
    %v2375 = vpop.xlane.xlu0 %2374
    %v2376 = vsel %vm505, %v2330, -inf
    %2377 = vmax.xlane.f32.xlu0 %v2376
    %v2378 = vpop.xlane.xlu0 %2377
    %v2379 = vsub.f32 %v2315, %v2333
    %v2380 = vsub.f32 %v2316, %v2336
    %v2381 = vsub.f32 %v2317, %v2339
    %v2382 = vsub.f32 %v2318, %v2342
    %v2383 = vsub.f32 %v2319, %v2345
    %v2384 = vsub.f32 %v2320, %v2348
    %v2385 = vsub.f32 %v2321, %v2351
    %v2386 = vsub.f32 %v2322, %v2354
    %v2387 = vsub.f32 %v2323, %v2357
    %v2388 = vsub.f32 %v2324, %v2360
    %v2389 = vsub.f32 %v2325, %v2363
    %v2390 = vsub.f32 %v2326, %v2366
    %v2391 = vsub.f32 %v2327, %v2369
    %v2392 = vsub.f32 %v2328, %v2372
    %v2393 = vsub.f32 %v2329, %v2375
    %v2394 = vsub.f32 %v2330, %v2378
    %v2395 = vmul.f32 %v2379, 1.442695
    %v2396 = vpow.pop %v2395
    %v2397 = vmul.f32 %v2380, 1.442695
    %v2398 = vpow.pop %v2397
    %v2399 = vmul.f32 %v2381, 1.442695
    %v2400 = vpow.pop %v2399
    %v2401 = vmul.f32 %v2382, 1.442695
    %v2402 = vpow.pop %v2401
    %v2403 = vmul.f32 %v2383, 1.442695
    %v2404 = vpow.pop %v2403
    %v2405 = vmul.f32 %v2384, 1.442695
    %v2406 = vpow.pop %v2405
    %v2407 = vmul.f32 %v2385, 1.442695
    %v2408 = vpow.pop %v2407
    %v2409 = vmul.f32 %v2386, 1.442695
    %v2410 = vpow.pop %v2409
    %v2411 = vmul.f32 %v2387, 1.442695
    %v2412 = vpow.pop %v2411
    %v2413 = vmul.f32 %v2388, 1.442695
    %v2414 = vpow.pop %v2413
    %v2415 = vmul.f32 %v2389, 1.442695
    %v2416 = vpow.pop %v2415
    %v2417 = vmul.f32 %v2390, 1.442695
    %v2418 = vpow.pop %v2417
    %v2419 = vmul.f32 %v2391, 1.442695
    %v2420 = vpow.pop %v2419
    %v2421 = vmul.f32 %v2392, 1.442695
    %v2422 = vpow.pop %v2421
    %v2423 = vmul.f32 %v2393, 1.442695
    %v2424 = vpow.pop %v2423
    %v2425 = vmul.f32 %v2394, 1.442695
    %v2426 = vpow.pop %v2425
    %v2427 = vsel %vm505, %v2396, 0.0
    %2428 = vadd.xlane.f32.xlu0 %v2427
    %v2429 = vpop.xlane.xlu0 %2428
    %v2430 = vsel %vm505, %v2398, 0.0
    %2431 = vadd.xlane.f32.xlu0 %v2430
    %v2432 = vpop.xlane.xlu0 %2431
    %v2433 = vsel %vm505, %v2400, 0.0
    %2434 = vadd.xlane.f32.xlu0 %v2433
    %v2435 = vpop.xlane.xlu0 %2434
    %v2436 = vsel %vm505, %v2402, 0.0
    %2437 = vadd.xlane.f32.xlu0 %v2436
    %v2438 = vpop.xlane.xlu0 %2437
    %v2439 = vsel %vm505, %v2404, 0.0
    %2440 = vadd.xlane.f32.xlu0 %v2439
    %v2441 = vpop.xlane.xlu0 %2440
    %v2442 = vsel %vm505, %v2406, 0.0
    %2443 = vadd.xlane.f32.xlu0 %v2442
    %v2444 = vpop.xlane.xlu0 %2443
    %v2445 = vsel %vm505, %v2408, 0.0
    %2446 = vadd.xlane.f32.xlu0 %v2445
    %v2447 = vpop.xlane.xlu0 %2446
    %v2448 = vsel %vm505, %v2410, 0.0
    %2449 = vadd.xlane.f32.xlu0 %v2448
    %v2450 = vpop.xlane.xlu0 %2449
    %v2451 = vsel %vm505, %v2412, 0.0
    %2452 = vadd.xlane.f32.xlu0 %v2451
    %v2453 = vpop.xlane.xlu0 %2452
    %v2454 = vsel %vm505, %v2414, 0.0
    %2455 = vadd.xlane.f32.xlu0 %v2454
    %v2456 = vpop.xlane.xlu0 %2455
    %v2457 = vsel %vm505, %v2416, 0.0
    %2458 = vadd.xlane.f32.xlu0 %v2457
    %v2459 = vpop.xlane.xlu0 %2458
    %v2460 = vsel %vm505, %v2418, 0.0
    %2461 = vadd.xlane.f32.xlu0 %v2460
    %v2462 = vpop.xlane.xlu0 %2461
    %v2463 = vsel %vm505, %v2420, 0.0
    %2464 = vadd.xlane.f32.xlu0 %v2463
    %v2465 = vpop.xlane.xlu0 %2464
    %v2466 = vsel %vm505, %v2422, 0.0
    %2467 = vadd.xlane.f32.xlu0 %v2466
    %v2468 = vpop.xlane.xlu0 %2467
    %v2469 = vsel %vm505, %v2424, 0.0
    %2470 = vadd.xlane.f32.xlu0 %v2469
    %v2471 = vpop.xlane.xlu0 %2470
    %v2472 = vsel %vm505, %v2426, 0.0
    %2473 = vadd.xlane.f32.xlu0 %v2472
    %v2474 = vpop.xlane.xlu0 %2473
    %v2475 = vrcp.pop %v2429
    %v2476 = vrcp.pop %v2432
    %v2477 = vrcp.pop %v2435
    %v2478 = vrcp.pop %v2438
    %v2479 = vrcp.pop %v2441
    %v2480 = vrcp.pop %v2444
    %v2481 = vrcp.pop %v2447
    %v2482 = vrcp.pop %v2450
    %v2483 = vrcp.pop %v2453
    %v2484 = vrcp.pop %v2456
    %v2485 = vrcp.pop %v2459
    %v2486 = vrcp.pop %v2462
    %v2487 = vrcp.pop %v2465
    %v2488 = vrcp.pop %v2468
    %v2489 = vrcp.pop %v2471
    %v2490 = vrcp.pop %v2474
    %v2491 = vmul.f32 %v2396, %v2475
    %v2492 = vmul.f32 %v2398, %v2476
    %v2493 = vmul.f32 %v2400, %v2477
    %v2494 = vmul.f32 %v2402, %v2478
    %v2495 = vmul.f32 %v2404, %v2479
    %v2496 = vmul.f32 %v2406, %v2480
    %v2497 = vmul.f32 %v2408, %v2481
    %v2498 = vmul.f32 %v2410, %v2482
    %v2499 = vmul.f32 %v2412, %v2483
    %v2500 = vmul.f32 %v2414, %v2484
    %v2501 = vmul.f32 %v2416, %v2485
    %v2502 = vmul.f32 %v2418, %v2486
    %v2503 = vmul.f32 %v2420, %v2487
    %v2504 = vmul.f32 %v2422, %v2488
    %v2505 = vmul.f32 %v2424, %v2489
    %v2506 = vmul.f32 %v2426, %v2490
    %v2507 = vpack.c.bf16 %v2492, %v2491
    %v2508 = vpack.c.bf16 %v2494, %v2493
    %v2509 = vpack.c.bf16 %v2496, %v2495
    %v2510 = vpack.c.bf16 %v2498, %v2497
    %v2511 = vpack.c.bf16 %v2500, %v2499
    %v2512 = vpack.c.bf16 %v2502, %v2501
    %v2513 = vpack.c.bf16 %v2504, %v2503
    %v2514 = vpack.c.bf16 %v2506, %v2505
    %v2516 = vsel %vm505, %v2507, 0
    %2518 = vmatprep.subr.bf16.mxu0 0
    %2519 = vmatpush1.bf16.msra.mxu0 %v452
    %2520 = vmatprep.subr.bf16.mxu0 0
    %2521 = vmatpush1.bf16.msra.mxu0 0
    %2522 = vmatprep.subr.bf16.mxu0 0
    %2523 = vmatpush1.bf16.msra.mxu0 0
    %2524 = vmatprep.subr.bf16.mxu0 0
    %2525 = vmatpush1.bf16.msra.mxu0 0
    %2526 = vmatprep.subr.bf16.mxu0 0
    %2527 = vmatpush1.bf16.msra.mxu0 0
    %2528 = vmatprep.subr.bf16.mxu0 0
    %2529 = vmatpush1.bf16.msra.mxu0 0
    %2530 = vmatprep.subr.bf16.mxu0 0
    %2531 = vmatpush1.bf16.msra.mxu0 0
    %2532 = vmatprep.subr.bf16.mxu0 0
    %2533 = vmatpush1.bf16.msra.mxu0 0
    %2534 = vmatprep.subr.bf16.mxu0 0
    %2535 = vmatpush1.bf16.msra.mxu0 0
    %2536 = vmatprep.subr.bf16.mxu0 0
    %2537 = vmatpush1.bf16.msra.mxu0 0
    %2538 = vmatprep.subr.bf16.mxu0 0
    %2539 = vmatpush1.bf16.msra.mxu0 0
    %2540 = vmatprep.subr.bf16.mxu0 0
    %2541 = vmatpush1.bf16.msra.mxu0 0
    %2542 = vmatprep.subr.bf16.mxu0 0
    %2543 = vmatpush1.bf16.msra.mxu0 0
    %2544 = vmatprep.subr.bf16.mxu0 0
    %2545 = vmatpush1.bf16.msra.mxu0 0
    %2546 = vmatprep.subr.bf16.mxu0 0
    %2547 = vmatpush1.bf16.msra.mxu0 0
    %2548 = vmatprep.subr.bf16.mxu0 0
    %2549 = vmatpush1.bf16.msra.mxu0 0
    %2550 = vmatprep.mubr.bf16.mxu0 0
    %2551 = vmatmul.mubr.bf16.gmra.mrb[0].mxu0 %v2516
    %v2552 = vpop.f32.mrb[0].mxu0
    %v2553 = vadd.f32 0.0, %v2552
    %v2554 = vpop.f32.mrb[0].mxu0
    %v2555 = vpop.f32.mrb[0].mxu0
    %v2556 = vadd.f32 0.0, %v2555
    %v2557 = vpop.f32.mrb[0].mxu0
    %2558 = vdwg.mxu0
    %v2560 = vsel %vm505, %v2508, 0
    %2562 = vmatprep.subr.bf16.mxu0 0
    %2563 = vmatpush1.bf16.msra.mxu0 %v1910
    %2564 = vmatprep.subr.bf16.mxu0 0
    %2565 = vmatpush1.bf16.msra.mxu0 0
    %2566 = vmatprep.subr.bf16.mxu0 0
    %2567 = vmatpush1.bf16.msra.mxu0 0
    %2568 = vmatprep.subr.bf16.mxu0 0
    %2569 = vmatpush1.bf16.msra.mxu0 0
    %2570 = vmatprep.subr.bf16.mxu0 0
    %2571 = vmatpush1.bf16.msra.mxu0 0
    %2572 = vmatprep.subr.bf16.mxu0 0
    %2573 = vmatpush1.bf16.msra.mxu0 0
    %2574 = vmatprep.subr.bf16.mxu0 0
    %2575 = vmatpush1.bf16.msra.mxu0 0
    %2576 = vmatprep.subr.bf16.mxu0 0
    %2577 = vmatpush1.bf16.msra.mxu0 0
    %2578 = vmatprep.subr.bf16.mxu0 0
    %2579 = vmatpush1.bf16.msra.mxu0 0
    %2580 = vmatprep.subr.bf16.mxu0 0
    %2581 = vmatpush1.bf16.msra.mxu0 0
    %2582 = vmatprep.subr.bf16.mxu0 0
    %2583 = vmatpush1.bf16.msra.mxu0 0
    %2584 = vmatprep.subr.bf16.mxu0 0
    %2585 = vmatpush1.bf16.msra.mxu0 0
    %2586 = vmatprep.subr.bf16.mxu0 0
    %2587 = vmatpush1.bf16.msra.mxu0 0
    %2588 = vmatprep.subr.bf16.mxu0 0
    %2589 = vmatpush1.bf16.msra.mxu0 0
    %2590 = vmatprep.subr.bf16.mxu0 0
    %2591 = vmatpush1.bf16.msra.mxu0 0
    %2592 = vmatprep.subr.bf16.mxu0 0
    %2593 = vmatpush1.bf16.msra.mxu0 0
    %2594 = vmatprep.mubr.bf16.mxu0 0
    %2595 = vmatmul.mubr.bf16.gmra.mrb[0].mxu0 %v2560
    %v2596 = vpop.f32.mrb[0].mxu0
    %v2597 = vadd.f32 0.0, %v2596
    %v2598 = vpop.f32.mrb[0].mxu0
    %v2599 = vpop.f32.mrb[0].mxu0
    %v2600 = vadd.f32 0.0, %v2599
    %v2601 = vpop.f32.mrb[0].mxu0
    %2602 = vdwg.mxu0
    %v2604 = vsel %vm505, %v2509, 0
    %2606 = vmatprep.subr.bf16.mxu0 0
    %2607 = vmatpush1.bf16.msra.mxu0 %v1913
    %2608 = vmatprep.subr.bf16.mxu0 0
    %2609 = vmatpush1.bf16.msra.mxu0 0
    %2610 = vmatprep.subr.bf16.mxu0 0
    %2611 = vmatpush1.bf16.msra.mxu0 0
    %2612 = vmatprep.subr.bf16.mxu0 0
    %2613 = vmatpush1.bf16.msra.mxu0 0
    %2614 = vmatprep.subr.bf16.mxu0 0
    %2615 = vmatpush1.bf16.msra.mxu0 0
    %2616 = vmatprep.subr.bf16.mxu0 0
    %2617 = vmatpush1.bf16.msra.mxu0 0
    %2618 = vmatprep.subr.bf16.mxu0 0
    %2619 = vmatpush1.bf16.msra.mxu0 0
    %2620 = vmatprep.subr.bf16.mxu0 0
    %2621 = vmatpush1.bf16.msra.mxu0 0
    %2622 = vmatprep.subr.bf16.mxu0 0
    %2623 = vmatpush1.bf16.msra.mxu0 0
    %2624 = vmatprep.subr.bf16.mxu0 0
    %2625 = vmatpush1.bf16.msra.mxu0 0
    %2626 = vmatprep.subr.bf16.mxu0 0
    %2627 = vmatpush1.bf16.msra.mxu0 0
    %2628 = vmatprep.subr.bf16.mxu0 0
    %2629 = vmatpush1.bf16.msra.mxu0 0
    %2630 = vmatprep.subr.bf16.mxu0 0
    %2631 = vmatpush1.bf16.msra.mxu0 0
    %2632 = vmatprep.subr.bf16.mxu0 0
    %2633 = vmatpush1.bf16.msra.mxu0 0
    %2634 = vmatprep.subr.bf16.mxu0 0
    %2635 = vmatpush1.bf16.msra.mxu0 0
    %2636 = vmatprep.subr.bf16.mxu0 0
    %2637 = vmatpush1.bf16.msra.mxu0 0
    %2638 = vmatprep.mubr.bf16.mxu0 0
    %2639 = vmatmul.mubr.bf16.gmra.mrb[0].mxu0 %v2604
    %v2640 = vpop.f32.mrb[0].mxu0
    %v2641 = vadd.f32 0.0, %v2640
    %v2642 = vpop.f32.mrb[0].mxu0
    %v2643 = vpop.f32.mrb[0].mxu0
    %v2644 = vadd.f32 0.0, %v2643
    %v2645 = vpop.f32.mrb[0].mxu0
    %2646 = vdwg.mxu0
    %v2648 = vsel %vm505, %v2510, 0
    %2650 = vmatprep.subr.bf16.mxu0 0
    %2651 = vmatpush1.bf16.msra.mxu0 %v1916
    %2652 = vmatprep.subr.bf16.mxu0 0
    %2653 = vmatpush1.bf16.msra.mxu0 0
    %2654 = vmatprep.subr.bf16.mxu0 0
    %2655 = vmatpush1.bf16.msra.mxu0 0
    %2656 = vmatprep.subr.bf16.mxu0 0
    %2657 = vmatpush1.bf16.msra.mxu0 0
    %2658 = vmatprep.subr.bf16.mxu0 0
    %2659 = vmatpush1.bf16.msra.mxu0 0
    %2660 = vmatprep.subr.bf16.mxu0 0
    %2661 = vmatpush1.bf16.msra.mxu0 0
    %2662 = vmatprep.subr.bf16.mxu0 0
    %2663 = vmatpush1.bf16.msra.mxu0 0
    %2664 = vmatprep.subr.bf16.mxu0 0
    %2665 = vmatpush1.bf16.msra.mxu0 0
    %2666 = vmatprep.subr.bf16.mxu0 0
    %2667 = vmatpush1.bf16.msra.mxu0 0
    %2668 = vmatprep.subr.bf16.mxu0 0
    %2669 = vmatpush1.bf16.msra.mxu0 0
    %2670 = vmatprep.subr.bf16.mxu0 0
    %2671 = vmatpush1.bf16.msra.mxu0 0
    %2672 = vmatprep.subr.bf16.mxu0 0
    %2673 = vmatpush1.bf16.msra.mxu0 0
    %2674 = vmatprep.subr.bf16.mxu0 0
    %2675 = vmatpush1.bf16.msra.mxu0 0
    %2676 = vmatprep.subr.bf16.mxu0 0
    %2677 = vmatpush1.bf16.msra.mxu0 0
    %2678 = vmatprep.subr.bf16.mxu0 0
    %2679 = vmatpush1.bf16.msra.mxu0 0
    %2680 = vmatprep.subr.bf16.mxu0 0
    %2681 = vmatpush1.bf16.msra.mxu0 0
    %2682 = vmatprep.mubr.bf16.mxu0 0
    %2683 = vmatmul.mubr.bf16.gmra.mrb[0].mxu0 %v2648
    %v2684 = vpop.f32.mrb[0].mxu0
    %v2685 = vadd.f32 0.0, %v2684
    %v2686 = vpop.f32.mrb[0].mxu0
    %v2687 = vpop.f32.mrb[0].mxu0
    %v2688 = vadd.f32 0.0, %v2687
    %v2689 = vpop.f32.mrb[0].mxu0
    %2690 = vdwg.mxu0
    %v2692 = vsel %vm505, %v2511, 0
    %2694 = vmatprep.subr.bf16.mxu0 0
    %2695 = vmatpush1.bf16.msra.mxu0 %v1919
    %2696 = vmatprep.subr.bf16.mxu0 0
    %2697 = vmatpush1.bf16.msra.mxu0 0
    %2698 = vmatprep.subr.bf16.mxu0 0
    %2699 = vmatpush1.bf16.msra.mxu0 0
    %2700 = vmatprep.subr.bf16.mxu0 0
    %2701 = vmatpush1.bf16.msra.mxu0 0
    %2702 = vmatprep.subr.bf16.mxu0 0
    %2703 = vmatpush1.bf16.msra.mxu0 0
    %2704 = vmatprep.subr.bf16.mxu0 0
    %2705 = vmatpush1.bf16.msra.mxu0 0
    %2706 = vmatprep.subr.bf16.mxu0 0
    %2707 = vmatpush1.bf16.msra.mxu0 0
    %2708 = vmatprep.subr.bf16.mxu0 0
    %2709 = vmatpush1.bf16.msra.mxu0 0
    %2710 = vmatprep.subr.bf16.mxu0 0
    %2711 = vmatpush1.bf16.msra.mxu0 0
    %2712 = vmatprep.subr.bf16.mxu0 0
    %2713 = vmatpush1.bf16.msra.mxu0 0
    %2714 = vmatprep.subr.bf16.mxu0 0
    %2715 = vmatpush1.bf16.msra.mxu0 0
    %2716 = vmatprep.subr.bf16.mxu0 0
    %2717 = vmatpush1.bf16.msra.mxu0 0
    %2718 = vmatprep.subr.bf16.mxu0 0
    %2719 = vmatpush1.bf16.msra.mxu0 0
    %2720 = vmatprep.subr.bf16.mxu0 0
    %2721 = vmatpush1.bf16.msra.mxu0 0
    %2722 = vmatprep.subr.bf16.mxu0 0
    %2723 = vmatpush1.bf16.msra.mxu0 0
    %2724 = vmatprep.subr.bf16.mxu0 0
    %2725 = vmatpush1.bf16.msra.mxu0 0
    %2726 = vmatprep.mubr.bf16.mxu0 0
    %2727 = vmatmul.mubr.bf16.gmra.mrb[0].mxu0 %v2692
    %v2728 = vpop.f32.mrb[0].mxu0
    %v2729 = vadd.f32 0.0, %v2728
    %v2730 = vpop.f32.mrb[0].mxu0
    %v2731 = vpop.f32.mrb[0].mxu0
    %v2732 = vadd.f32 0.0, %v2731
    %v2733 = vpop.f32.mrb[0].mxu0
    %2734 = vdwg.mxu0
    %v2736 = vsel %vm505, %v2512, 0
    %2738 = vmatprep.subr.bf16.mxu0 0
    %2739 = vmatpush1.bf16.msra.mxu0 %v1922
    %2740 = vmatprep.subr.bf16.mxu0 0
    %2741 = vmatpush1.bf16.msra.mxu0 0
    %2742 = vmatprep.subr.bf16.mxu0 0
    %2743 = vmatpush1.bf16.msra.mxu0 0
    %2744 = vmatprep.subr.bf16.mxu0 0
    %2745 = vmatpush1.bf16.msra.mxu0 0
    %2746 = vmatprep.subr.bf16.mxu0 0
    %2747 = vmatpush1.bf16.msra.mxu0 0
    %2748 = vmatprep.subr.bf16.mxu0 0
    %2749 = vmatpush1.bf16.msra.mxu0 0
    %2750 = vmatprep.subr.bf16.mxu0 0
    %2751 = vmatpush1.bf16.msra.mxu0 0
    %2752 = vmatprep.subr.bf16.mxu0 0
    %2753 = vmatpush1.bf16.msra.mxu0 0
    %2754 = vmatprep.subr.bf16.mxu0 0
    %2755 = vmatpush1.bf16.msra.mxu0 0
    %2756 = vmatprep.subr.bf16.mxu0 0
    %2757 = vmatpush1.bf16.msra.mxu0 0
    %2758 = vmatprep.subr.bf16.mxu0 0
    %2759 = vmatpush1.bf16.msra.mxu0 0
    %2760 = vmatprep.subr.bf16.mxu0 0
    %2761 = vmatpush1.bf16.msra.mxu0 0
    %2762 = vmatprep.subr.bf16.mxu0 0
    %2763 = vmatpush1.bf16.msra.mxu0 0
    %2764 = vmatprep.subr.bf16.mxu0 0
    %2765 = vmatpush1.bf16.msra.mxu0 0
    %2766 = vmatprep.subr.bf16.mxu0 0
    %2767 = vmatpush1.bf16.msra.mxu0 0
    %2768 = vmatprep.subr.bf16.mxu0 0
    %2769 = vmatpush1.bf16.msra.mxu0 0
    %2770 = vmatprep.mubr.bf16.mxu0 0
    %2771 = vmatmul.mubr.bf16.gmra.mrb[0].mxu0 %v2736
    %v2772 = vpop.f32.mrb[0].mxu0
    %v2773 = vadd.f32 0.0, %v2772
    %v2774 = vpop.f32.mrb[0].mxu0
    %v2775 = vpop.f32.mrb[0].mxu0
    %v2776 = vadd.f32 0.0, %v2775
    %v2777 = vpop.f32.mrb[0].mxu0
    %2778 = vdwg.mxu0
    %v2780 = vsel %vm505, %v2513, 0
    %2782 = vmatprep.subr.bf16.mxu0 0
    %2783 = vmatpush1.bf16.msra.mxu0 %v1925
    %2784 = vmatprep.subr.bf16.mxu0 0
    %2785 = vmatpush1.bf16.msra.mxu0 0
    %2786 = vmatprep.subr.bf16.mxu0 0
    %2787 = vmatpush1.bf16.msra.mxu0 0
    %2788 = vmatprep.subr.bf16.mxu0 0
    %2789 = vmatpush1.bf16.msra.mxu0 0
    %2790 = vmatprep.subr.bf16.mxu0 0
    %2791 = vmatpush1.bf16.msra.mxu0 0
    %2792 = vmatprep.subr.bf16.mxu0 0
    %2793 = vmatpush1.bf16.msra.mxu0 0
    %2794 = vmatprep.subr.bf16.mxu0 0
    %2795 = vmatpush1.bf16.msra.mxu0 0
    %2796 = vmatprep.subr.bf16.mxu0 0
    %2797 = vmatpush1.bf16.msra.mxu0 0
    %2798 = vmatprep.subr.bf16.mxu0 0
    %2799 = vmatpush1.bf16.msra.mxu0 0
    %2800 = vmatprep.subr.bf16.mxu0 0
    %2801 = vmatpush1.bf16.msra.mxu0 0
    %2802 = vmatprep.subr.bf16.mxu0 0
    %2803 = vmatpush1.bf16.msra.mxu0 0
    %2804 = vmatprep.subr.bf16.mxu0 0
    %2805 = vmatpush1.bf16.msra.mxu0 0
    %2806 = vmatprep.subr.bf16.mxu0 0
    %2807 = vmatpush1.bf16.msra.mxu0 0
    %2808 = vmatprep.subr.bf16.mxu0 0
    %2809 = vmatpush1.bf16.msra.mxu0 0
    %2810 = vmatprep.subr.bf16.mxu0 0
    %2811 = vmatpush1.bf16.msra.mxu0 0
    %2812 = vmatprep.subr.bf16.mxu0 0
    %2813 = vmatpush1.bf16.msra.mxu0 0
    %2814 = vmatprep.mubr.bf16.mxu0 0
    %2815 = vmatmul.mubr.bf16.gmra.mrb[0].mxu0 %v2780
    %v2816 = vpop.f32.mrb[0].mxu0
    %v2817 = vadd.f32 0.0, %v2816
    %v2818 = vpop.f32.mrb[0].mxu0
    %v2819 = vpop.f32.mrb[0].mxu0
    %v2820 = vadd.f32 0.0, %v2819
    %v2821 = vpop.f32.mrb[0].mxu0
    %2822 = vdwg.mxu0
    %v2824 = vsel %vm505, %v2514, 0
    %2826 = vmatprep.subr.bf16.mxu0 0
    %2827 = vmatpush1.bf16.msra.mxu0 %v1928
    %2828 = vmatprep.subr.bf16.mxu0 0
    %2829 = vmatpush1.bf16.msra.mxu0 0
    %2830 = vmatprep.subr.bf16.mxu0 0
    %2831 = vmatpush1.bf16.msra.mxu0 0
    %2832 = vmatprep.subr.bf16.mxu0 0
    %2833 = vmatpush1.bf16.msra.mxu0 0
    %2834 = vmatprep.subr.bf16.mxu0 0
    %2835 = vmatpush1.bf16.msra.mxu0 0
    %2836 = vmatprep.subr.bf16.mxu0 0
    %2837 = vmatpush1.bf16.msra.mxu0 0
    %2838 = vmatprep.subr.bf16.mxu0 0
    %2839 = vmatpush1.bf16.msra.mxu0 0
    %2840 = vmatprep.subr.bf16.mxu0 0
    %2841 = vmatpush1.bf16.msra.mxu0 0
    %2842 = vmatprep.subr.bf16.mxu0 0
    %2843 = vmatpush1.bf16.msra.mxu0 0
    %2844 = vmatprep.subr.bf16.mxu0 0
    %2845 = vmatpush1.bf16.msra.mxu0 0
    %2846 = vmatprep.subr.bf16.mxu0 0
    %2847 = vmatpush1.bf16.msra.mxu0 0
    %2848 = vmatprep.subr.bf16.mxu0 0
    %2849 = vmatpush1.bf16.msra.mxu0 0
    %2850 = vmatprep.subr.bf16.mxu0 0
    %2851 = vmatpush1.bf16.msra.mxu0 0
    %2852 = vmatprep.subr.bf16.mxu0 0
    %2853 = vmatpush1.bf16.msra.mxu0 0
    %2854 = vmatprep.subr.bf16.mxu0 0
    %2855 = vmatpush1.bf16.msra.mxu0 0
    %2856 = vmatprep.subr.bf16.mxu0 0
    %2857 = vmatpush1.bf16.msra.mxu0 0
    %2858 = vmatprep.mubr.bf16.mxu0 0
    %2859 = vmatmul.mubr.bf16.gmra.mrb[0].mxu0 %v2824
    %v2860 = vpop.f32.mrb[0].mxu0
    %v2861 = vadd.f32 0.0, %v2860
    %v2862 = vpop.f32.mrb[0].mxu0
    %v2863 = vpop.f32.mrb[0].mxu0
    %v2864 = vadd.f32 0.0, %v2863
    %v2865 = vpop.f32.mrb[0].mxu0
    %2866 = vdwg.mxu0
    %v2867 = vpack.c.bf16 %v2556, %v2553
    %v2868 = vpack.c.bf16 %v2600, %v2597
    %v2869 = vpack.c.bf16 %v2644, %v2641
    %v2870 = vpack.c.bf16 %v2688, %v2685
    %v2871 = vpack.c.bf16 %v2732, %v2729
    %v2872 = vpack.c.bf16 %v2776, %v2773
    %v2873 = vpack.c.bf16 %v2820, %v2817
    %v2874 = vpack.c.bf16 %v2864, %v2861
    %v2875 = vld [vmem:[#allocation10] sm:$0xf]
    %v2876 = vld [vmem:[#allocation10 + $0x4] sm:$0xf]
    %v2877 = vld [vmem:[#allocation10 + $0x8] sm:$0xf]
    %v2878 = vld [vmem:[#allocation10 + $0xc] sm:$0xf]
    %v2881 = vunpack.c.l.b16 %v2877
    %v2882 = vunpack.c.l.b16 %v2878
    %v2883 = vpack.c.b16 %v2882, %v2881
    %v2886 = vsel %vm505, %v2868, 0
    %2888 = vmatprep.subr.bf16.mxu0 0
    %2889 = vmatpush1.bf16.msra.mxu0 %v2883
    %2890 = vmatprep.subr.bf16.mxu0 0
    %2891 = vmatpush1.bf16.msra.mxu0 0
    %2892 = vmatprep.subr.bf16.mxu0 0
    %2893 = vmatpush1.bf16.msra.mxu0 0
    %2894 = vmatprep.subr.bf16.mxu0 0
    %2895 = vmatpush1.bf16.msra.mxu0 0
    %2896 = vmatprep.subr.bf16.mxu0 0
    %2897 = vmatpush1.bf16.msra.mxu0 0
    %2898 = vmatprep.subr.bf16.mxu0 0
    %2899 = vmatpush1.bf16.msra.mxu0 0
    %2900 = vmatprep.subr.bf16.mxu0 0
    %2901 = vmatpush1.bf16.msra.mxu0 0
    %2902 = vmatprep.subr.bf16.mxu0 0
    %2903 = vmatpush1.bf16.msra.mxu0 0
    %2904 = vmatprep.subr.bf16.mxu0 0
    %2905 = vmatpush1.bf16.msra.mxu0 0
    %2906 = vmatprep.subr.bf16.mxu0 0
    %2907 = vmatpush1.bf16.msra.mxu0 0
    %2908 = vmatprep.subr.bf16.mxu0 0
    %2909 = vmatpush1.bf16.msra.mxu0 0
    %2910 = vmatprep.subr.bf16.mxu0 0
    %2911 = vmatpush1.bf16.msra.mxu0 0
    %2912 = vmatprep.subr.bf16.mxu0 0
    %2913 = vmatpush1.bf16.msra.mxu0 0
    %2914 = vmatprep.subr.bf16.mxu0 0
    %2915 = vmatpush1.bf16.msra.mxu0 0
    %2916 = vmatprep.subr.bf16.mxu0 0
    %2917 = vmatpush1.bf16.msra.mxu0 0
    %2918 = vmatprep.subr.bf16.mxu0 0
    %2919 = vmatpush1.bf16.msra.mxu0 0
    %2920 = vmatprep.mubr.bf16.mxu0 0
    %2921 = vmatmul.mubr.bf16.gmra.mrb[0].mxu0 %v2886
    %v2922 = vpop.f32.mrb[0].mxu0
    %v2923 = vadd.f32 0.0, %v2922
    %v2924 = vpop.f32.mrb[0].mxu0
    %v2925 = vpop.f32.mrb[0].mxu0
    %v2926 = vadd.f32 0.0, %v2925
    %v2927 = vpop.f32.mrb[0].mxu0
    %2928 = vdwg.mxu0
    %v2931 = vunpack.c.l.b16 %v2875
    %v2932 = vunpack.c.l.b16 %v2876
    %v2933 = vpack.c.b16 %v2932, %v2931
    %v2936 = vsel %vm505, %v2867, 0
    %2938 = vmatprep.subr.bf16.mxu0 0
    %2939 = vmatpush1.bf16.msra.mxu0 %v2933
    %2940 = vmatprep.subr.bf16.mxu0 0
    %2941 = vmatpush1.bf16.msra.mxu0 0
    %2942 = vmatprep.subr.bf16.mxu0 0
    %2943 = vmatpush1.bf16.msra.mxu0 0
    %2944 = vmatprep.subr.bf16.mxu0 0
    %2945 = vmatpush1.bf16.msra.mxu0 0
    %2946 = vmatprep.subr.bf16.mxu0 0
    %2947 = vmatpush1.bf16.msra.mxu0 0
    %2948 = vmatprep.subr.bf16.mxu0 0
    %2949 = vmatpush1.bf16.msra.mxu0 0
    %2950 = vmatprep.subr.bf16.mxu0 0
    %2951 = vmatpush1.bf16.msra.mxu0 0
    %2952 = vmatprep.subr.bf16.mxu0 0
    %2953 = vmatpush1.bf16.msra.mxu0 0
    %2954 = vmatprep.subr.bf16.mxu0 0
    %2955 = vmatpush1.bf16.msra.mxu0 0
    %2956 = vmatprep.subr.bf16.mxu0 0
    %2957 = vmatpush1.bf16.msra.mxu0 0
    %2958 = vmatprep.subr.bf16.mxu0 0
    %2959 = vmatpush1.bf16.msra.mxu0 0
    %2960 = vmatprep.subr.bf16.mxu0 0
    %2961 = vmatpush1.bf16.msra.mxu0 0
    %2962 = vmatprep.subr.bf16.mxu0 0
    %2963 = vmatpush1.bf16.msra.mxu0 0
    %2964 = vmatprep.subr.bf16.mxu0 0
    %2965 = vmatpush1.bf16.msra.mxu0 0
    %2966 = vmatprep.subr.bf16.mxu0 0
    %2967 = vmatpush1.bf16.msra.mxu0 0
    %2968 = vmatprep.subr.bf16.mxu0 0
    %2969 = vmatpush1.bf16.msra.mxu0 0
    %2970 = vmatprep.mubr.bf16.mxu0 0
    %2971 = vmatmul.mubr.bf16.gmra.mrb[0].mxu0 %v2936
    %v2972 = vpop.f32.mrb[0].mxu0
    %v2973 = vadd.f32 %v2923, %v2972
    %v2974 = vpop.f32.mrb[0].mxu0
    %v2975 = vpop.f32.mrb[0].mxu0
    %v2976 = vadd.f32 %v2926, %v2975
    %v2977 = vpop.f32.mrb[0].mxu0
    %2978 = vdwg.mxu0
    %v2979 = vld [vmem:[#allocation10 + $0x10] sm:$0xf]
    %v2980 = vld [vmem:[#allocation10 + $0x14] sm:$0xf]
    %v2983 = vunpack.c.l.b16 %v2979
    %v2984 = vunpack.c.l.b16 %v2980
    %v2985 = vpack.c.b16 %v2984, %v2983
    %v2988 = vsel %vm505, %v2869, 0
    %2990 = vmatprep.subr.bf16.mxu0 0
    %2991 = vmatpush1.bf16.msra.mxu0 %v2985
    %2992 = vmatprep.subr.bf16.mxu0 0
    %2993 = vmatpush1.bf16.msra.mxu0 0
    %2994 = vmatprep.subr.bf16.mxu0 0
    %2995 = vmatpush1.bf16.msra.mxu0 0
    %2996 = vmatprep.subr.bf16.mxu0 0
    %2997 = vmatpush1.bf16.msra.mxu0 0
    %2998 = vmatprep.subr.bf16.mxu0 0
    %2999 = vmatpush1.bf16.msra.mxu0 0
    %3000 = vmatprep.subr.bf16.mxu0 0
    %3001 = vmatpush1.bf16.msra.mxu0 0
    %3002 = vmatprep.subr.bf16.mxu0 0
    %3003 = vmatpush1.bf16.msra.mxu0 0
    %3004 = vmatprep.subr.bf16.mxu0 0
    %3005 = vmatpush1.bf16.msra.mxu0 0
    %3006 = vmatprep.subr.bf16.mxu0 0
    %3007 = vmatpush1.bf16.msra.mxu0 0
    %3008 = vmatprep.subr.bf16.mxu0 0
    %3009 = vmatpush1.bf16.msra.mxu0 0
    %3010 = vmatprep.subr.bf16.mxu0 0
    %3011 = vmatpush1.bf16.msra.mxu0 0
    %3012 = vmatprep.subr.bf16.mxu0 0
    %3013 = vmatpush1.bf16.msra.mxu0 0
    %3014 = vmatprep.subr.bf16.mxu0 0
    %3015 = vmatpush1.bf16.msra.mxu0 0
    %3016 = vmatprep.subr.bf16.mxu0 0
    %3017 = vmatpush1.bf16.msra.mxu0 0
    %3018 = vmatprep.subr.bf16.mxu0 0
    %3019 = vmatpush1.bf16.msra.mxu0 0
    %3020 = vmatprep.subr.bf16.mxu0 0
    %3021 = vmatpush1.bf16.msra.mxu0 0
    %3022 = vmatprep.mubr.bf16.mxu0 0
    %3023 = vmatmul.mubr.bf16.gmra.mrb[0].mxu0 %v2988
    %v3024 = vpop.f32.mrb[0].mxu0
    %v3025 = vadd.f32 0.0, %v3024
    %v3026 = vpop.f32.mrb[0].mxu0
    %v3027 = vpop.f32.mrb[0].mxu0
    %v3028 = vadd.f32 0.0, %v3027
    %v3029 = vpop.f32.mrb[0].mxu0
    %3030 = vdwg.mxu0
    %v3031 = vadd.f32 %v2973, %v3025
    %v3032 = vadd.f32 %v2976, %v3028
    %v3033 = vld [vmem:[#allocation10 + $0x18] sm:$0xf]
    %v3034 = vld [vmem:[#allocation10 + $0x1c] sm:$0xf]
    %v3037 = vunpack.c.l.b16 %v3033
    %v3038 = vunpack.c.l.b16 %v3034
    %v3039 = vpack.c.b16 %v3038, %v3037
    %v3042 = vsel %vm505, %v2870, 0
    %3044 = vmatprep.subr.bf16.mxu0 0
    %3045 = vmatpush1.bf16.msra.mxu0 %v3039
    %3046 = vmatprep.subr.bf16.mxu0 0
    %3047 = vmatpush1.bf16.msra.mxu0 0
    %3048 = vmatprep.subr.bf16.mxu0 0
    %3049 = vmatpush1.bf16.msra.mxu0 0
    %3050 = vmatprep.subr.bf16.mxu0 0
    %3051 = vmatpush1.bf16.msra.mxu0 0
    %3052 = vmatprep.subr.bf16.mxu0 0
    %3053 = vmatpush1.bf16.msra.mxu0 0
    %3054 = vmatprep.subr.bf16.mxu0 0
    %3055 = vmatpush1.bf16.msra.mxu0 0
    %3056 = vmatprep.subr.bf16.mxu0 0
    %3057 = vmatpush1.bf16.msra.mxu0 0
    %3058 = vmatprep.subr.bf16.mxu0 0
    %3059 = vmatpush1.bf16.msra.mxu0 0
    %3060 = vmatprep.subr.bf16.mxu0 0
    %3061 = vmatpush1.bf16.msra.mxu0 0
    %3062 = vmatprep.subr.bf16.mxu0 0
    %3063 = vmatpush1.bf16.msra.mxu0 0
    %3064 = vmatprep.subr.bf16.mxu0 0
    %3065 = vmatpush1.bf16.msra.mxu0 0
    %3066 = vmatprep.subr.bf16.mxu0 0
    %3067 = vmatpush1.bf16.msra.mxu0 0
    %3068 = vmatprep.subr.bf16.mxu0 0
    %3069 = vmatpush1.bf16.msra.mxu0 0
    %3070 = vmatprep.subr.bf16.mxu0 0
    %3071 = vmatpush1.bf16.msra.mxu0 0
    %3072 = vmatprep.subr.bf16.mxu0 0
    %3073 = vmatpush1.bf16.msra.mxu0 0
    %3074 = vmatprep.subr.bf16.mxu0 0
    %3075 = vmatpush1.bf16.msra.mxu0 0
    %3076 = vmatprep.mubr.bf16.mxu0 0
    %3077 = vmatmul.mubr.bf16.gmra.mrb[0].mxu0 %v3042
    %v3078 = vpop.f32.mrb[0].mxu0
    %v3079 = vadd.f32 0.0, %v3078
    %v3080 = vpop.f32.mrb[0].mxu0
    %v3081 = vpop.f32.mrb[0].mxu0
    %v3082 = vadd.f32 0.0, %v3081
    %v3083 = vpop.f32.mrb[0].mxu0
    %3084 = vdwg.mxu0
    %v3085 = vadd.f32 %v3031, %v3079
    %v3086 = vadd.f32 %v3032, %v3082
    %v3087 = vld [vmem:[#allocation10 + $0x20] sm:$0xf]
    %v3088 = vld [vmem:[#allocation10 + $0x24] sm:$0xf]
    %v3091 = vunpack.c.l.b16 %v3087
    %v3092 = vunpack.c.l.b16 %v3088
    %v3093 = vpack.c.b16 %v3092, %v3091
    %v3096 = vsel %vm505, %v2871, 0
    %3098 = vmatprep.subr.bf16.mxu0 0
    %3099 = vmatpush1.bf16.msra.mxu0 %v3093
    %3100 = vmatprep.subr.bf16.mxu0 0
    %3101 = vmatpush1.bf16.msra.mxu0 0
    %3102 = vmatprep.subr.bf16.mxu0 0
    %3103 = vmatpush1.bf16.msra.mxu0 0
    %3104 = vmatprep.subr.bf16.mxu0 0
    %3105 = vmatpush1.bf16.msra.mxu0 0
    %3106 = vmatprep.subr.bf16.mxu0 0
    %3107 = vmatpush1.bf16.msra.mxu0 0
    %3108 = vmatprep.subr.bf16.mxu0 0
    %3109 = vmatpush1.bf16.msra.mxu0 0
    %3110 = vmatprep.subr.bf16.mxu0 0
    %3111 = vmatpush1.bf16.msra.mxu0 0
    %3112 = vmatprep.subr.bf16.mxu0 0
    %3113 = vmatpush1.bf16.msra.mxu0 0
    %3114 = vmatprep.subr.bf16.mxu0 0
    %3115 = vmatpush1.bf16.msra.mxu0 0
    %3116 = vmatprep.subr.bf16.mxu0 0
    %3117 = vmatpush1.bf16.msra.mxu0 0
    %3118 = vmatprep.subr.bf16.mxu0 0
    %3119 = vmatpush1.bf16.msra.mxu0 0
    %3120 = vmatprep.subr.bf16.mxu0 0
    %3121 = vmatpush1.bf16.msra.mxu0 0
    %3122 = vmatprep.subr.bf16.mxu0 0
    %3123 = vmatpush1.bf16.msra.mxu0 0
    %3124 = vmatprep.subr.bf16.mxu0 0
    %3125 = vmatpush1.bf16.msra.mxu0 0
    %3126 = vmatprep.subr.bf16.mxu0 0
    %3127 = vmatpush1.bf16.msra.mxu0 0
    %3128 = vmatprep.subr.bf16.mxu0 0
    %3129 = vmatpush1.bf16.msra.mxu0 0
    %3130 = vmatprep.mubr.bf16.mxu0 0
    %3131 = vmatmul.mubr.bf16.gmra.mrb[0].mxu0 %v3096
    %v3132 = vpop.f32.mrb[0].mxu0
    %v3133 = vadd.f32 0.0, %v3132
    %v3134 = vpop.f32.mrb[0].mxu0
    %v3135 = vpop.f32.mrb[0].mxu0
    %v3136 = vadd.f32 0.0, %v3135
    %v3137 = vpop.f32.mrb[0].mxu0
    %3138 = vdwg.mxu0
    %v3139 = vadd.f32 %v3085, %v3133
    %v3140 = vadd.f32 %v3086, %v3136
    %v3141 = vld [vmem:[#allocation10 + $0x28] sm:$0xf]
    %v3142 = vld [vmem:[#allocation10 + $0x2c] sm:$0xf]
    %v3145 = vunpack.c.l.b16 %v3141
    %v3146 = vunpack.c.l.b16 %v3142
    %v3147 = vpack.c.b16 %v3146, %v3145
    %v3150 = vsel %vm505, %v2872, 0
    %3152 = vmatprep.subr.bf16.mxu0 0
    %3153 = vmatpush1.bf16.msra.mxu0 %v3147
    %3154 = vmatprep.subr.bf16.mxu0 0
    %3155 = vmatpush1.bf16.msra.mxu0 0
    %3156 = vmatprep.subr.bf16.mxu0 0
    %3157 = vmatpush1.bf16.msra.mxu0 0
    %3158 = vmatprep.subr.bf16.mxu0 0
    %3159 = vmatpush1.bf16.msra.mxu0 0
    %3160 = vmatprep.subr.bf16.mxu0 0
    %3161 = vmatpush1.bf16.msra.mxu0 0
    %3162 = vmatprep.subr.bf16.mxu0 0
    %3163 = vmatpush1.bf16.msra.mxu0 0
    %3164 = vmatprep.subr.bf16.mxu0 0
    %3165 = vmatpush1.bf16.msra.mxu0 0
    %3166 = vmatprep.subr.bf16.mxu0 0
    %3167 = vmatpush1.bf16.msra.mxu0 0
    %3168 = vmatprep.subr.bf16.mxu0 0
    %3169 = vmatpush1.bf16.msra.mxu0 0
    %3170 = vmatprep.subr.bf16.mxu0 0
    %3171 = vmatpush1.bf16.msra.mxu0 0
    %3172 = vmatprep.subr.bf16.mxu0 0
    %3173 = vmatpush1.bf16.msra.mxu0 0
    %3174 = vmatprep.subr.bf16.mxu0 0
    %3175 = vmatpush1.bf16.msra.mxu0 0
    %3176 = vmatprep.subr.bf16.mxu0 0
    %3177 = vmatpush1.bf16.msra.mxu0 0
    %3178 = vmatprep.subr.bf16.mxu0 0
    %3179 = vmatpush1.bf16.msra.mxu0 0
    %3180 = vmatprep.subr.bf16.mxu0 0
    %3181 = vmatpush1.bf16.msra.mxu0 0
    %3182 = vmatprep.subr.bf16.mxu0 0
    %3183 = vmatpush1.bf16.msra.mxu0 0
    %3184 = vmatprep.mubr.bf16.mxu0 0
    %3185 = vmatmul.mubr.bf16.gmra.mrb[0].mxu0 %v3150
    %v3186 = vpop.f32.mrb[0].mxu0
    %v3187 = vadd.f32 0.0, %v3186
    %v3188 = vpop.f32.mrb[0].mxu0
    %v3189 = vpop.f32.mrb[0].mxu0
    %v3190 = vadd.f32 0.0, %v3189
    %v3191 = vpop.f32.mrb[0].mxu0
    %3192 = vdwg.mxu0
    %v3193 = vadd.f32 %v3139, %v3187
    %v3194 = vadd.f32 %v3140, %v3190
    %v3195 = vld [vmem:[#allocation10 + $0x30] sm:$0xf]
    %v3196 = vld [vmem:[#allocation10 + $0x34] sm:$0xf]
    %v3199 = vunpack.c.l.b16 %v3195
    %v3200 = vunpack.c.l.b16 %v3196
    %v3201 = vpack.c.b16 %v3200, %v3199
    %v3204 = vsel %vm505, %v2873, 0
    %3206 = vmatprep.subr.bf16.mxu0 0
    %3207 = vmatpush1.bf16.msra.mxu0 %v3201
    %3208 = vmatprep.subr.bf16.mxu0 0
    %3209 = vmatpush1.bf16.msra.mxu0 0
    %3210 = vmatprep.subr.bf16.mxu0 0
    %3211 = vmatpush1.bf16.msra.mxu0 0
    %3212 = vmatprep.subr.bf16.mxu0 0
    %3213 = vmatpush1.bf16.msra.mxu0 0
    %3214 = vmatprep.subr.bf16.mxu0 0
    %3215 = vmatpush1.bf16.msra.mxu0 0
    %3216 = vmatprep.subr.bf16.mxu0 0
    %3217 = vmatpush1.bf16.msra.mxu0 0
    %3218 = vmatprep.subr.bf16.mxu0 0
    %3219 = vmatpush1.bf16.msra.mxu0 0
    %3220 = vmatprep.subr.bf16.mxu0 0
    %3221 = vmatpush1.bf16.msra.mxu0 0
    %3222 = vmatprep.subr.bf16.mxu0 0
    %3223 = vmatpush1.bf16.msra.mxu0 0
    %3224 = vmatprep.subr.bf16.mxu0 0
    %3225 = vmatpush1.bf16.msra.mxu0 0
    %3226 = vmatprep.subr.bf16.mxu0 0
    %3227 = vmatpush1.bf16.msra.mxu0 0
    %3228 = vmatprep.subr.bf16.mxu0 0
    %3229 = vmatpush1.bf16.msra.mxu0 0
    %3230 = vmatprep.subr.bf16.mxu0 0
    %3231 = vmatpush1.bf16.msra.mxu0 0
    %3232 = vmatprep.subr.bf16.mxu0 0
    %3233 = vmatpush1.bf16.msra.mxu0 0
    %3234 = vmatprep.subr.bf16.mxu0 0
    %3235 = vmatpush1.bf16.msra.mxu0 0
    %3236 = vmatprep.subr.bf16.mxu0 0
    %3237 = vmatpush1.bf16.msra.mxu0 0
    %3238 = vmatprep.mubr.bf16.mxu0 0
    %3239 = vmatmul.mubr.bf16.gmra.mrb[0].mxu0 %v3204
    %v3240 = vpop.f32.mrb[0].mxu0
    %v3241 = vadd.f32 0.0, %v3240
    %v3242 = vpop.f32.mrb[0].mxu0
    %v3243 = vpop.f32.mrb[0].mxu0
    %v3244 = vadd.f32 0.0, %v3243
    %v3245 = vpop.f32.mrb[0].mxu0
    %3246 = vdwg.mxu0
    %v3247 = vadd.f32 %v3193, %v3241
    %v3248 = vadd.f32 %v3194, %v3244
    %v3249 = vld [vmem:[#allocation10 + $0x38] sm:$0xf]
    %v3250 = vld [vmem:[#allocation10 + $0x3c] sm:$0xf]
    %v3253 = vunpack.c.l.b16 %v3249
    %v3254 = vunpack.c.l.b16 %v3250
    %v3255 = vpack.c.b16 %v3254, %v3253
    %v3258 = vsel %vm505, %v2874, 0
    %3260 = vmatprep.subr.bf16.mxu0 0
    %3261 = vmatpush1.bf16.msra.mxu0 %v3255
    %3262 = vmatprep.subr.bf16.mxu0 0
    %3263 = vmatpush1.bf16.msra.mxu0 0
    %3264 = vmatprep.subr.bf16.mxu0 0
    %3265 = vmatpush1.bf16.msra.mxu0 0
    %3266 = vmatprep.subr.bf16.mxu0 0
    %3267 = vmatpush1.bf16.msra.mxu0 0
    %3268 = vmatprep.subr.bf16.mxu0 0
    %3269 = vmatpush1.bf16.msra.mxu0 0
    %3270 = vmatprep.subr.bf16.mxu0 0
    %3271 = vmatpush1.bf16.msra.mxu0 0
    %3272 = vmatprep.subr.bf16.mxu0 0
    %3273 = vmatpush1.bf16.msra.mxu0 0
    %3274 = vmatprep.subr.bf16.mxu0 0
    %3275 = vmatpush1.bf16.msra.mxu0 0
    %3276 = vmatprep.subr.bf16.mxu0 0
    %3277 = vmatpush1.bf16.msra.mxu0 0
    %3278 = vmatprep.subr.bf16.mxu0 0
    %3279 = vmatpush1.bf16.msra.mxu0 0
    %3280 = vmatprep.subr.bf16.mxu0 0
    %3281 = vmatpush1.bf16.msra.mxu0 0
    %3282 = vmatprep.subr.bf16.mxu0 0
    %3283 = vmatpush1.bf16.msra.mxu0 0
    %3284 = vmatprep.subr.bf16.mxu0 0
    %3285 = vmatpush1.bf16.msra.mxu0 0
    %3286 = vmatprep.subr.bf16.mxu0 0
    %3287 = vmatpush1.bf16.msra.mxu0 0
    %3288 = vmatprep.subr.bf16.mxu0 0
    %3289 = vmatpush1.bf16.msra.mxu0 0
    %3290 = vmatprep.subr.bf16.mxu0 0
    %3291 = vmatpush1.bf16.msra.mxu0 0
    %3292 = vmatprep.mubr.bf16.mxu0 0
    %3293 = vmatmul.mubr.bf16.gmra.mrb[0].mxu0 %v3258
    %v3294 = vpop.f32.mrb[0].mxu0
    %v3295 = vadd.f32 0.0, %v3294
    %v3296 = vpop.f32.mrb[0].mxu0
    %v3297 = vpop.f32.mrb[0].mxu0
    %v3298 = vadd.f32 0.0, %v3297
    %v3299 = vpop.f32.mrb[0].mxu0
    %3300 = vdwg.mxu0
    %v3301 = vadd.f32 %v3247, %v3295
    %v3302 = vadd.f32 %v3248, %v3298
    %v3303 = vld [vmem:[%s8] sm:$0x1]
    %v3305 = vlaneseq
    %v3306 = vshrl.u32 %v3305, 7
    %v3307 = vsub.s32 0, %v3306
    %v3308 = vrot.slane %v3303, %v3307
    %v3310 = vadd.f32 %v1876, %v3308
    %v3311 = vadd.f32 %v1877, %v3308
    %v3312 = vadd.f32 %v3301, %v3308
    %v3313 = vadd.f32 %v3302, %v3308
    %v3314 = vadd.f32 %v153, %v3310
    %v3315 = vadd.f32 %v154, %v3311
    %v3316 = vadd.f32 %v156, %v3312
    %v3317 = vadd.f32 %v157, %v3313
    %v3318 = vld [vmem:[%s9] sm:$0x1]
    %v3319 = vld [vmem:[%s10] sm:$0x1]
    %3320 = vadd.xlane.f32.xlu0 %v3314
    %v3321 = vpop.xlane.xlu0 %3320
    %3322 = vadd.xlane.f32.xlu0 %v3315
    %v3323 = vpop.xlane.xlu0 %3322
    %3324 = vadd.xlane.f32.xlu0 %v3316
    %v3325 = vpop.xlane.xlu0 %3324
    %3326 = vadd.xlane.f32.xlu0 %v3317
    %v3327 = vpop.xlane.xlu0 %3326
    %v3328 = vrcp.pop 128.0
    %v3329 = vmul.f32 %v3321, %v3328
    %v3330 = vmul.f32 %v3323, %v3328
    %v3331 = vmul.f32 %v3325, %v3328
    %v3332 = vmul.f32 %v3327, %v3328
    %v3333 = vsub.f32 %v3314, %v3329
    %v3334 = vsub.f32 %v3315, %v3330
    %v3335 = vsub.f32 %v3316, %v3331
    %v3336 = vsub.f32 %v3317, %v3332
    %v3337 = vmul.f32 %v3333, %v3333
    %v3338 = vmul.f32 %v3334, %v3334
    %v3339 = vmul.f32 %v3335, %v3335
    %v3340 = vmul.f32 %v3336, %v3336
    %3341 = vadd.xlane.f32.xlu0 %v3337
    %v3342 = vpop.xlane.xlu0 %3341
    %3343 = vadd.xlane.f32.xlu0 %v3338
    %v3344 = vpop.xlane.xlu0 %3343
    %3345 = vadd.xlane.f32.xlu0 %v3339
    %v3346 = vpop.xlane.xlu0 %3345
    %3347 = vadd.xlane.f32.xlu0 %v3340
    %v3348 = vpop.xlane.xlu0 %3347
    %v3349 = vrcp.pop 127.0
    %v3350 = vmul.f32 %v3342, %v3349
    %v3351 = vmul.f32 %v3344, %v3349
    %v3352 = vmul.f32 %v3346, %v3349
    %v3353 = vmul.f32 %v3348, %v3349
    %v3354 = vrsqrt.pop %v3350
    %v3355 = vmul.f32 %v3350, %v3354
    %vm3356 = vcmp.eq.f32.partialorder %v3350, inf
    %v3357 = vsel %vm3356, %v3350, %v3355
    %vm3358 = vcmp.eq.f32.partialorder %v3350, 0.0
    %v3359 = vand.u32 %v3350, 2147483648
    %v3360 = vsel %vm3358, %v3359, %v3357
    %v3361 = vrsqrt.pop %v3351
    %v3362 = vmul.f32 %v3351, %v3361
    %vm3363 = vcmp.eq.f32.partialorder %v3351, inf
    %v3364 = vsel %vm3363, %v3351, %v3362
    %vm3365 = vcmp.eq.f32.partialorder %v3351, 0.0
    %v3366 = vand.u32 %v3351, 2147483648
    %v3367 = vsel %vm3365, %v3366, %v3364
    %v3368 = vrsqrt.pop %v3352
    %v3369 = vmul.f32 %v3352, %v3368
    %vm3370 = vcmp.eq.f32.partialorder %v3352, inf
    %v3371 = vsel %vm3370, %v3352, %v3369
    %vm3372 = vcmp.eq.f32.partialorder %v3352, 0.0
    %v3373 = vand.u32 %v3352, 2147483648
    %v3374 = vsel %vm3372, %v3373, %v3371
    %v3375 = vrsqrt.pop %v3353
    %v3376 = vmul.f32 %v3353, %v3375
    %vm3377 = vcmp.eq.f32.partialorder %v3353, inf
    %v3378 = vsel %vm3377, %v3353, %v3376
    %vm3379 = vcmp.eq.f32.partialorder %v3353, 0.0
    %v3380 = vand.u32 %v3353, 2147483648
    %v3381 = vsel %vm3379, %v3380, %v3378
    %v3382 = vadd.f32 %v3360, 1e-06
    %v3383 = vadd.f32 %v3367, 1e-06
    %v3384 = vadd.f32 %v3374, 1e-06
    %v3385 = vadd.f32 %v3381, 1e-06
    %v3386 = vrcp.pop %v3382
    %v3387 = vmul.f32 1.0, %v3386
    %v3388 = vrcp.pop %v3383
    %v3389 = vmul.f32 1.0, %v3388
    %v3390 = vrcp.pop %v3384
    %v3391 = vmul.f32 1.0, %v3390
    %v3392 = vrcp.pop %v3385
    %v3393 = vmul.f32 1.0, %v3392
    %v3395 = vlaneseq
    %v3396 = vshrl.u32 %v3395, 7
    %v3397 = vsub.s32 0, %v3396
    %v3398 = vrot.slane %v3318, %v3397
    %v3400 = vmul.f32 %v3398, %v3333
    %v3401 = vmul.f32 %v3398, %v3334
    %v3402 = vmul.f32 %v3398, %v3335
    %v3403 = vmul.f32 %v3398, %v3336
    %v3404 = vmul.f32 %v3400, %v3387
    %v3405 = vmul.f32 %v3401, %v3389
    %v3406 = vmul.f32 %v3402, %v3391
    %v3407 = vmul.f32 %v3403, %v3393
    %v3409 = vlaneseq
    %v3410 = vshrl.u32 %v3409, 7
    %v3411 = vsub.s32 0, %v3410
    %v3412 = vrot.slane %v3319, %v3411
    %v3414 = vadd.f32 %v3404, %v3412
    %v3415 = vadd.f32 %v3405, %v3412
    %v3416 = vadd.f32 %v3406, %v3412
    %v3417 = vadd.f32 %v3407, %v3412
    %v3418 = vpack.c.bf16 %v3415, %v3414
    %v3419 = vpack.c.bf16 %v3417, %v3416
    %v3420 = vld [vmem:[#allocation11] sm:$0xff]
    %v3421 = vld [vmem:[#allocation11 + $0x8] sm:$0xff]
    %v3422 = vld [vmem:[#allocation11 + $0x10] sm:$0xff]
    %v3423 = vld [vmem:[#allocation11 + $0x18] sm:$0xff]
    %v3424 = vld [vmem:[#allocation11 + $0x20] sm:$0xff]
    %v3425 = vld [vmem:[#allocation11 + $0x28] sm:$0xff]
    %v3426 = vld [vmem:[#allocation11 + $0x30] sm:$0xff]
    %v3427 = vld [vmem:[#allocation11 + $0x38] sm:$0xff]
    %v3428 = vld [vmem:[#allocation11 + $0x40] sm:$0xff]
    %v3429 = vld [vmem:[#allocation11 + $0x48] sm:$0xff]
    %v3430 = vld [vmem:[#allocation11 + $0x50] sm:$0xff]
    %v3431 = vld [vmem:[#allocation11 + $0x58] sm:$0xff]
    %v3432 = vld [vmem:[#allocation11 + $0x60] sm:$0xff]
    %v3433 = vld [vmem:[#allocation11 + $0x68] sm:$0xff]
    %v3434 = vld [vmem:[#allocation11 + $0x70] sm:$0xff]
    %v3435 = vld [vmem:[#allocation11 + $0x78] sm:$0xff]
    %v3436 = vld [vmem:[#allocation11 + $0x80] sm:$0xff]
    %v3437 = vld [vmem:[#allocation11 + $0x88] sm:$0xff]
    %v3438 = vld [vmem:[#allocation11 + $0x90] sm:$0xff]
    %v3439 = vld [vmem:[#allocation11 + $0x98] sm:$0xff]
    %v3440 = vld [vmem:[#allocation11 + $0xa0] sm:$0xff]
    %v3441 = vld [vmem:[#allocation11 + $0xa8] sm:$0xff]
    %v3442 = vld [vmem:[#allocation11 + $0xb0] sm:$0xff]
    %v3443 = vld [vmem:[#allocation11 + $0xb8] sm:$0xff]
    %v3444 = vld [vmem:[#allocation11 + $0xc0] sm:$0xff]
    %v3445 = vld [vmem:[#allocation11 + $0xc8] sm:$0xff]
    %v3446 = vld [vmem:[#allocation11 + $0xd0] sm:$0xff]
    %v3447 = vld [vmem:[#allocation11 + $0xd8] sm:$0xff]
    %v3448 = vld [vmem:[#allocation11 + $0xe0] sm:$0xff]
    %v3449 = vld [vmem:[#allocation11 + $0xe8] sm:$0xff]
    %v3450 = vld [vmem:[#allocation11 + $0xf0] sm:$0xff]
    %v3451 = vld [vmem:[#allocation11 + $0xf8] sm:$0xff]
    %v3452 = vld [vmem:[%s12] sm:$0xf]
    %v3454 = vlaneseq
    %v3455 = vshrl.u32 %v3454, 7
    %v3456 = vsub.s32 0, %v3455
    %v3457 = vrot.slane %v3452, %v3456
    %v3458 = vlaneseq
    %v3459 = vshrl.u32 %v3458, 7
    %v3460 = vsub.s32 1, %v3459
    %v3461 = vrot.slane %v3452, %v3460
    %v3462 = vlaneseq
    %v3463 = vshrl.u32 %v3462, 7
    %v3464 = vsub.s32 2, %v3463
    %v3465 = vrot.slane %v3452, %v3464
    %v3466 = vlaneseq
    %v3467 = vshrl.u32 %v3466, 7
    %v3468 = vsub.s32 3, %v3467
    %v3469 = vrot.slane %v3452, %v3468
    %v3506 = vunpack.c.l.b16 %v3420
    %v3507 = vunpack.c.h.b16 %v3420
    %v3508 = vunpack.c.l.b16 %v3421
    %v3509 = vunpack.c.h.b16 %v3421
    %v3510 = vunpack.c.l.b16 %v3422
    %v3511 = vunpack.c.h.b16 %v3422
    %v3512 = vunpack.c.l.b16 %v3423
    %v3513 = vunpack.c.h.b16 %v3423
    %v3514 = vunpack.c.l.b16 %v3424
    %v3515 = vunpack.c.h.b16 %v3424
    %v3516 = vunpack.c.l.b16 %v3425
    %v3517 = vunpack.c.h.b16 %v3425
    %v3518 = vunpack.c.l.b16 %v3426
    %v3519 = vunpack.c.h.b16 %v3426
    %v3520 = vunpack.c.l.b16 %v3427
    %v3521 = vunpack.c.h.b16 %v3427
    %v3522 = vunpack.c.l.b16 %v3428
    %v3523 = vunpack.c.h.b16 %v3428
    %v3524 = vunpack.c.l.b16 %v3429
    %v3525 = vunpack.c.h.b16 %v3429
    %v3526 = vunpack.c.l.b16 %v3430
    %v3527 = vunpack.c.h.b16 %v3430
    %v3528 = vunpack.c.l.b16 %v3431
    %v3529 = vunpack.c.h.b16 %v3431
    %v3530 = vunpack.c.l.b16 %v3432
    %v3531 = vunpack.c.h.b16 %v3432
    %v3532 = vunpack.c.l.b16 %v3433
    %v3533 = vunpack.c.h.b16 %v3433
    %v3534 = vunpack.c.l.b16 %v3434
    %v3535 = vunpack.c.h.b16 %v3434
    %v3536 = vunpack.c.l.b16 %v3435
    %v3537 = vunpack.c.h.b16 %v3435
    %v3538 = vunpack.c.l.b16 %v3436
    %v3539 = vunpack.c.h.b16 %v3436
    %v3540 = vunpack.c.l.b16 %v3437
    %v3541 = vunpack.c.h.b16 %v3437
    %v3542 = vunpack.c.l.b16 %v3438
    %v3543 = vunpack.c.h.b16 %v3438
    %v3544 = vunpack.c.l.b16 %v3439
    %v3545 = vunpack.c.h.b16 %v3439
    %v3546 = vunpack.c.l.b16 %v3440
    %v3547 = vunpack.c.h.b16 %v3440
    %v3548 = vunpack.c.l.b16 %v3441
    %v3549 = vunpack.c.h.b16 %v3441
    %v3550 = vunpack.c.l.b16 %v3442
    %v3551 = vunpack.c.h.b16 %v3442
    %v3552 = vunpack.c.l.b16 %v3443
    %v3553 = vunpack.c.h.b16 %v3443
    %v3554 = vunpack.c.l.b16 %v3444
    %v3555 = vunpack.c.h.b16 %v3444
    %v3556 = vunpack.c.l.b16 %v3445
    %v3557 = vunpack.c.h.b16 %v3445
    %v3558 = vunpack.c.l.b16 %v3446
    %v3559 = vunpack.c.h.b16 %v3446
    %v3560 = vunpack.c.l.b16 %v3447
    %v3561 = vunpack.c.h.b16 %v3447
    %v3562 = vunpack.c.l.b16 %v3448
    %v3563 = vunpack.c.h.b16 %v3448
    %v3564 = vunpack.c.l.b16 %v3449
    %v3565 = vunpack.c.h.b16 %v3449
    %v3566 = vunpack.c.l.b16 %v3450
    %v3567 = vunpack.c.h.b16 %v3450
    %v3568 = vunpack.c.l.b16 %v3451
    %v3569 = vunpack.c.h.b16 %v3451
    %v3570 = vpack.c.b16 %v3510, %v3506
    %v3571 = vpack.c.b16 %v3511, %v3507
    %v3572 = vpack.c.b16 %v3512, %v3508
    %v3573 = vpack.c.b16 %v3513, %v3509
    %v3574 = vpack.c.b16 %v3518, %v3514
    %v3575 = vpack.c.b16 %v3519, %v3515
    %v3576 = vpack.c.b16 %v3520, %v3516
    %v3577 = vpack.c.b16 %v3521, %v3517
    %v3578 = vpack.c.b16 %v3526, %v3522
    %v3579 = vpack.c.b16 %v3527, %v3523
    %v3580 = vpack.c.b16 %v3528, %v3524
    %v3581 = vpack.c.b16 %v3529, %v3525
    %v3582 = vpack.c.b16 %v3534, %v3530
    %v3583 = vpack.c.b16 %v3535, %v3531
    %v3584 = vpack.c.b16 %v3536, %v3532
    %v3585 = vpack.c.b16 %v3537, %v3533
    %v3586 = vpack.c.b16 %v3542, %v3538
    %v3587 = vpack.c.b16 %v3543, %v3539
    %v3588 = vpack.c.b16 %v3544, %v3540
    %v3589 = vpack.c.b16 %v3545, %v3541
    %v3590 = vpack.c.b16 %v3550, %v3546
    %v3591 = vpack.c.b16 %v3551, %v3547
    %v3592 = vpack.c.b16 %v3552, %v3548
    %v3593 = vpack.c.b16 %v3553, %v3549
    %v3594 = vpack.c.b16 %v3558, %v3554
    %v3595 = vpack.c.b16 %v3559, %v3555
    %v3596 = vpack.c.b16 %v3560, %v3556
    %v3597 = vpack.c.b16 %v3561, %v3557
    %v3598 = vpack.c.b16 %v3566, %v3562
    %v3599 = vpack.c.b16 %v3567, %v3563
    %v3600 = vpack.c.b16 %v3568, %v3564
    %v3601 = vpack.c.b16 %v3569, %v3565
    %3634 = vmatprep.subr.bf16.mxu0 %v3571
    %3635 = vmatpush1.bf16.msra.mxu0 %v3570
    %3636 = vmatprep.subr.bf16.mxu0 %v3575
    %3637 = vmatpush1.bf16.msra.mxu0 %v3574
    %3638 = vmatprep.subr.bf16.mxu0 %v3579
    %3639 = vmatpush1.bf16.msra.mxu0 %v3578
    %3640 = vmatprep.subr.bf16.mxu0 %v3583
    %3641 = vmatpush1.bf16.msra.mxu0 %v3582
    %3642 = vmatprep.subr.bf16.mxu0 %v3587
    %3643 = vmatpush1.bf16.msra.mxu0 %v3586
    %3644 = vmatprep.subr.bf16.mxu0 %v3591
    %3645 = vmatpush1.bf16.msra.mxu0 %v3590
    %3646 = vmatprep.subr.bf16.mxu0 %v3595
    %3647 = vmatpush1.bf16.msra.mxu0 %v3594
    %3648 = vmatprep.subr.bf16.mxu0 %v3599
    %3649 = vmatpush1.bf16.msra.mxu0 %v3598
    %3650 = vmatprep.subr.bf16.mxu0 0
    %3651 = vmatpush1.bf16.msra.mxu0 0
    %3652 = vmatprep.subr.bf16.mxu0 0
    %3653 = vmatpush1.bf16.msra.mxu0 0
    %3654 = vmatprep.subr.bf16.mxu0 0
    %3655 = vmatpush1.bf16.msra.mxu0 0
    %3656 = vmatprep.subr.bf16.mxu0 0
    %3657 = vmatpush1.bf16.msra.mxu0 0
    %3658 = vmatprep.subr.bf16.mxu0 0
    %3659 = vmatpush1.bf16.msra.mxu0 0
    %3660 = vmatprep.subr.bf16.mxu0 0
    %3661 = vmatpush1.bf16.msra.mxu0 0
    %3662 = vmatprep.subr.bf16.mxu0 0
    %3663 = vmatpush1.bf16.msra.mxu0 0
    %3664 = vmatprep.subr.bf16.mxu0 0
    %3665 = vmatpush1.bf16.msra.mxu0 0
    %3666 = vmatprep.mubr.bf16.mxu0 0
    %3667 = vmatmul.mubr.bf16.gmra.mrb[0].mxu0 %v3418
    %v3668 = vpop.f32.mrb[0].mxu0
    %v3669 = vadd.f32 %v3457, %v3668
    %v3670 = vpop.f32.mrb[0].mxu0
    %v3671 = vadd.f32 %v3461, %v3670
    %v3672 = vpop.f32.mrb[0].mxu0
    %v3673 = vadd.f32 %v3457, %v3672
    %v3674 = vpop.f32.mrb[0].mxu0
    %v3675 = vadd.f32 %v3461, %v3674
    %3676 = vmatprep.mubr.bf16.mxu0 0
    %3677 = vmatmul.mubr.bf16.gmra.mrb[0].mxu0 %v3419
    %v3678 = vpop.f32.mrb[0].mxu0
    %v3679 = vadd.f32 %v3457, %v3678
    %v3680 = vpop.f32.mrb[0].mxu0
    %v3681 = vadd.f32 %v3461, %v3680
    %v3682 = vpop.f32.mrb[0].mxu0
    %v3683 = vadd.f32 %v3457, %v3682
    %v3684 = vpop.f32.mrb[0].mxu0
    %v3685 = vadd.f32 %v3461, %v3684
    %3686 = vdwg.mxu0
    %3687 = vmatprep.subr.bf16.mxu0 %v3573
    %3688 = vmatpush1.bf16.msra.mxu0 %v3572
    %3689 = vmatprep.subr.bf16.mxu0 %v3577
    %3690 = vmatpush1.bf16.msra.mxu0 %v3576
    %3691 = vmatprep.subr.bf16.mxu0 %v3581
    %3692 = vmatpush1.bf16.msra.mxu0 %v3580
    %3693 = vmatprep.subr.bf16.mxu0 %v3585
    %3694 = vmatpush1.bf16.msra.mxu0 %v3584
    %3695 = vmatprep.subr.bf16.mxu0 %v3589
    %3696 = vmatpush1.bf16.msra.mxu0 %v3588
    %3697 = vmatprep.subr.bf16.mxu0 %v3593
    %3698 = vmatpush1.bf16.msra.mxu0 %v3592
    %3699 = vmatprep.subr.bf16.mxu0 %v3597
    %3700 = vmatpush1.bf16.msra.mxu0 %v3596
    %3701 = vmatprep.subr.bf16.mxu0 %v3601
    %3702 = vmatpush1.bf16.msra.mxu0 %v3600
    %3703 = vmatprep.subr.bf16.mxu0 0
    %3704 = vmatpush1.bf16.msra.mxu0 0
    %3705 = vmatprep.subr.bf16.mxu0 0
    %3706 = vmatpush1.bf16.msra.mxu0 0
    %3707 = vmatprep.subr.bf16.mxu0 0
    %3708 = vmatpush1.bf16.msra.mxu0 0
    %3709 = vmatprep.subr.bf16.mxu0 0
    %3710 = vmatpush1.bf16.msra.mxu0 0
    %3711 = vmatprep.subr.bf16.mxu0 0
    %3712 = vmatpush1.bf16.msra.mxu0 0
    %3713 = vmatprep.subr.bf16.mxu0 0
    %3714 = vmatpush1.bf16.msra.mxu0 0
    %3715 = vmatprep.subr.bf16.mxu0 0
    %3716 = vmatpush1.bf16.msra.mxu0 0
    %3717 = vmatprep.subr.bf16.mxu0 0
    %3718 = vmatpush1.bf16.msra.mxu0 0
    %3719 = vmatprep.mubr.bf16.mxu0 0
    %3720 = vmatmul.mubr.bf16.gmra.mrb[0].mxu0 %v3418
    %v3721 = vpop.f32.mrb[0].mxu0
    %v3722 = vadd.f32 %v3465, %v3721
    %v3723 = vpop.f32.mrb[0].mxu0
    %v3724 = vadd.f32 %v3469, %v3723
    %v3725 = vpop.f32.mrb[0].mxu0
    %v3726 = vadd.f32 %v3465, %v3725
    %v3727 = vpop.f32.mrb[0].mxu0
    %v3728 = vadd.f32 %v3469, %v3727
    %3729 = vmatprep.mubr.bf16.mxu0 0
    %3730 = vmatmul.mubr.bf16.gmra.mrb[0].mxu0 %v3419
    %v3731 = vpop.f32.mrb[0].mxu0
    %v3732 = vadd.f32 %v3465, %v3731
    %v3733 = vpop.f32.mrb[0].mxu0
    %v3734 = vadd.f32 %v3469, %v3733
    %v3735 = vpop.f32.mrb[0].mxu0
    %v3736 = vadd.f32 %v3465, %v3735
    %v3737 = vpop.f32.mrb[0].mxu0
    %v3738 = vadd.f32 %v3469, %v3737
    %3739 = vdwg.mxu0
    %v3740 = vmax.f32 %v3669, 0.0
    %v3741 = vmax.f32 %v3671, 0.0
    %v3742 = vmax.f32 %v3722, 0.0
    %v3743 = vmax.f32 %v3724, 0.0
    %v3744 = vmax.f32 %v3673, 0.0
    %v3745 = vmax.f32 %v3675, 0.0
    %v3746 = vmax.f32 %v3726, 0.0
    %v3747 = vmax.f32 %v3728, 0.0
    %v3748 = vmax.f32 %v3679, 0.0
    %v3749 = vmax.f32 %v3681, 0.0
    %v3750 = vmax.f32 %v3732, 0.0
    %v3751 = vmax.f32 %v3734, 0.0
    %v3752 = vmax.f32 %v3683, 0.0
    %v3753 = vmax.f32 %v3685, 0.0
    %v3754 = vmax.f32 %v3736, 0.0
    %v3755 = vmax.f32 %v3738, 0.0
    %v3756 = vpack.c.bf16 %v3744, %v3740
    %v3757 = vpack.c.bf16 %v3745, %v3741
    %v3758 = vpack.c.bf16 %v3746, %v3742
    %v3759 = vpack.c.bf16 %v3747, %v3743
    %v3760 = vpack.c.bf16 %v3752, %v3748
    %v3761 = vpack.c.bf16 %v3753, %v3749
    %v3762 = vpack.c.bf16 %v3754, %v3750
    %v3763 = vpack.c.bf16 %v3755, %v3751
    %v3764 = vld [vmem:[#allocation13] sm:$0xf]
    %v3765 = vld [vmem:[#allocation13 + $0x4] sm:$0xf]
    %v3766 = vld [vmem:[#allocation13 + $0x8] sm:$0xf]
    %v3767 = vld [vmem:[#allocation13 + $0xc] sm:$0xf]
    %v3768 = vld [vmem:[#allocation13 + $0x10] sm:$0xf]
    %v3769 = vld [vmem:[#allocation13 + $0x14] sm:$0xf]
    %v3770 = vld [vmem:[#allocation13 + $0x18] sm:$0xf]
    %v3771 = vld [vmem:[#allocation13 + $0x1c] sm:$0xf]
    %v3772 = vld [vmem:[#allocation13 + $0x20] sm:$0xf]
    %v3773 = vld [vmem:[#allocation13 + $0x24] sm:$0xf]
    %v3774 = vld [vmem:[#allocation13 + $0x28] sm:$0xf]
    %v3775 = vld [vmem:[#allocation13 + $0x2c] sm:$0xf]
    %v3776 = vld [vmem:[#allocation13 + $0x30] sm:$0xf]
    %v3777 = vld [vmem:[#allocation13 + $0x34] sm:$0xf]
    %v3778 = vld [vmem:[#allocation13 + $0x38] sm:$0xf]
    %v3779 = vld [vmem:[#allocation13 + $0x3c] sm:$0xf]
    %v3780 = vld [vmem:[#allocation13 + $0x40] sm:$0xf]
    %v3781 = vld [vmem:[#allocation13 + $0x44] sm:$0xf]
    %v3782 = vld [vmem:[#allocation13 + $0x48] sm:$0xf]
    %v3783 = vld [vmem:[#allocation13 + $0x4c] sm:$0xf]
    %v3784 = vld [vmem:[#allocation13 + $0x50] sm:$0xf]
    %v3785 = vld [vmem:[#allocation13 + $0x54] sm:$0xf]
    %v3786 = vld [vmem:[#allocation13 + $0x58] sm:$0xf]
    %v3787 = vld [vmem:[#allocation13 + $0x5c] sm:$0xf]
    %v3788 = vld [vmem:[#allocation13 + $0x60] sm:$0xf]
    %v3789 = vld [vmem:[#allocation13 + $0x64] sm:$0xf]
    %v3790 = vld [vmem:[#allocation13 + $0x68] sm:$0xf]
    %v3791 = vld [vmem:[#allocation13 + $0x6c] sm:$0xf]
    %v3792 = vld [vmem:[#allocation13 + $0x70] sm:$0xf]
    %v3793 = vld [vmem:[#allocation13 + $0x74] sm:$0xf]
    %v3794 = vld [vmem:[#allocation13 + $0x78] sm:$0xf]
    %v3795 = vld [vmem:[#allocation13 + $0x7c] sm:$0xf]
    %v3796 = vld [vmem:[#allocation13 + $0x80] sm:$0xf]
    %v3797 = vld [vmem:[#allocation13 + $0x84] sm:$0xf]
    %v3798 = vld [vmem:[#allocation13 + $0x88] sm:$0xf]
    %v3799 = vld [vmem:[#allocation13 + $0x8c] sm:$0xf]
    %v3800 = vld [vmem:[#allocation13 + $0x90] sm:$0xf]
    %v3801 = vld [vmem:[#allocation13 + $0x94] sm:$0xf]
    %v3802 = vld [vmem:[#allocation13 + $0x98] sm:$0xf]
    %v3803 = vld [vmem:[#allocation13 + $0x9c] sm:$0xf]
    %v3804 = vld [vmem:[#allocation13 + $0xa0] sm:$0xf]
    %v3805 = vld [vmem:[#allocation13 + $0xa4] sm:$0xf]
    %v3806 = vld [vmem:[#allocation13 + $0xa8] sm:$0xf]
    %v3807 = vld [vmem:[#allocation13 + $0xac] sm:$0xf]
    %v3808 = vld [vmem:[#allocation13 + $0xb0] sm:$0xf]
    %v3809 = vld [vmem:[#allocation13 + $0xb4] sm:$0xf]
    %v3810 = vld [vmem:[#allocation13 + $0xb8] sm:$0xf]
    %v3811 = vld [vmem:[#allocation13 + $0xbc] sm:$0xf]
    %v3812 = vld [vmem:[#allocation13 + $0xc0] sm:$0xf]
    %v3813 = vld [vmem:[#allocation13 + $0xc4] sm:$0xf]
    %v3814 = vld [vmem:[#allocation13 + $0xc8] sm:$0xf]
    %v3815 = vld [vmem:[#allocation13 + $0xcc] sm:$0xf]
    %v3816 = vld [vmem:[#allocation13 + $0xd0] sm:$0xf]
    %v3817 = vld [vmem:[#allocation13 + $0xd4] sm:$0xf]
    %v3818 = vld [vmem:[#allocation13 + $0xd8] sm:$0xf]
    %v3819 = vld [vmem:[#allocation13 + $0xdc] sm:$0xf]
    %v3820 = vld [vmem:[#allocation13 + $0xe0] sm:$0xf]
    %v3821 = vld [vmem:[#allocation13 + $0xe4] sm:$0xf]
    %v3822 = vld [vmem:[#allocation13 + $0xe8] sm:$0xf]
    %v3823 = vld [vmem:[#allocation13 + $0xec] sm:$0xf]
    %v3824 = vld [vmem:[#allocation13 + $0xf0] sm:$0xf]
    %v3825 = vld [vmem:[#allocation13 + $0xf4] sm:$0xf]
    %v3826 = vld [vmem:[#allocation13 + $0xf8] sm:$0xf]
    %v3827 = vld [vmem:[#allocation13 + $0xfc] sm:$0xf]
    %v3828 = vld [vmem:[%s14] sm:$0x1]
    %v3830 = vlaneseq
    %v3831 = vshrl.u32 %v3830, 7
    %v3832 = vsub.s32 0, %v3831
    %v3833 = vrot.slane %v3828, %v3832
    %v3899 = vunpack.c.l.b16 %v3764
    %v3900 = vunpack.c.l.b16 %v3765
    %v3901 = vunpack.c.l.b16 %v3766
    %v3902 = vunpack.c.l.b16 %v3767
    %v3903 = vunpack.c.l.b16 %v3768
    %v3904 = vunpack.c.l.b16 %v3769
    %v3905 = vunpack.c.l.b16 %v3770
    %v3906 = vunpack.c.l.b16 %v3771
    %v3907 = vunpack.c.l.b16 %v3772
    %v3908 = vunpack.c.l.b16 %v3773
    %v3909 = vunpack.c.l.b16 %v3774
    %v3910 = vunpack.c.l.b16 %v3775
    %v3911 = vunpack.c.l.b16 %v3776
    %v3912 = vunpack.c.l.b16 %v3777
    %v3913 = vunpack.c.l.b16 %v3778
    %v3914 = vunpack.c.l.b16 %v3779
    %v3915 = vunpack.c.l.b16 %v3780
    %v3916 = vunpack.c.l.b16 %v3781
    %v3917 = vunpack.c.l.b16 %v3782
    %v3918 = vunpack.c.l.b16 %v3783
    %v3919 = vunpack.c.l.b16 %v3784
    %v3920 = vunpack.c.l.b16 %v3785
    %v3921 = vunpack.c.l.b16 %v3786
    %v3922 = vunpack.c.l.b16 %v3787
    %v3923 = vunpack.c.l.b16 %v3788
    %v3924 = vunpack.c.l.b16 %v3789
    %v3925 = vunpack.c.l.b16 %v3790
    %v3926 = vunpack.c.l.b16 %v3791
    %v3927 = vunpack.c.l.b16 %v3792
    %v3928 = vunpack.c.l.b16 %v3793
    %v3929 = vunpack.c.l.b16 %v3794
    %v3930 = vunpack.c.l.b16 %v3795
    %v3931 = vunpack.c.l.b16 %v3796
    %v3932 = vunpack.c.l.b16 %v3797
    %v3933 = vunpack.c.l.b16 %v3798
    %v3934 = vunpack.c.l.b16 %v3799
    %v3935 = vunpack.c.l.b16 %v3800
    %v3936 = vunpack.c.l.b16 %v3801
    %v3937 = vunpack.c.l.b16 %v3802
    %v3938 = vunpack.c.l.b16 %v3803
    %v3939 = vunpack.c.l.b16 %v3804
    %v3940 = vunpack.c.l.b16 %v3805
    %v3941 = vunpack.c.l.b16 %v3806
    %v3942 = vunpack.c.l.b16 %v3807
    %v3943 = vunpack.c.l.b16 %v3808
    %v3944 = vunpack.c.l.b16 %v3809
    %v3945 = vunpack.c.l.b16 %v3810
    %v3946 = vunpack.c.l.b16 %v3811
    %v3947 = vunpack.c.l.b16 %v3812
    %v3948 = vunpack.c.l.b16 %v3813
    %v3949 = vunpack.c.l.b16 %v3814
    %v3950 = vunpack.c.l.b16 %v3815
    %v3951 = vunpack.c.l.b16 %v3816
    %v3952 = vunpack.c.l.b16 %v3817
    %v3953 = vunpack.c.l.b16 %v3818
    %v3954 = vunpack.c.l.b16 %v3819
    %v3955 = vunpack.c.l.b16 %v3820
    %v3956 = vunpack.c.l.b16 %v3821
    %v3957 = vunpack.c.l.b16 %v3822
    %v3958 = vunpack.c.l.b16 %v3823
    %v3959 = vunpack.c.l.b16 %v3824
    %v3960 = vunpack.c.l.b16 %v3825
    %v3961 = vunpack.c.l.b16 %v3826
    %v3962 = vunpack.c.l.b16 %v3827
    %v3963 = vpack.c.b16 %v3900, %v3899
    %v3964 = vpack.c.b16 %v3902, %v3901
    %v3965 = vpack.c.b16 %v3904, %v3903
    %v3966 = vpack.c.b16 %v3906, %v3905
    %v3967 = vpack.c.b16 %v3908, %v3907
    %v3968 = vpack.c.b16 %v3910, %v3909
    %v3969 = vpack.c.b16 %v3912, %v3911
    %v3970 = vpack.c.b16 %v3914, %v3913
    %v3971 = vpack.c.b16 %v3916, %v3915
    %v3972 = vpack.c.b16 %v3918, %v3917
    %v3973 = vpack.c.b16 %v3920, %v3919
    %v3974 = vpack.c.b16 %v3922, %v3921
    %v3975 = vpack.c.b16 %v3924, %v3923
    %v3976 = vpack.c.b16 %v3926, %v3925
    %v3977 = vpack.c.b16 %v3928, %v3927
    %v3978 = vpack.c.b16 %v3930, %v3929
    %v3979 = vpack.c.b16 %v3932, %v3931
    %v3980 = vpack.c.b16 %v3934, %v3933
    %v3981 = vpack.c.b16 %v3936, %v3935
    %v3982 = vpack.c.b16 %v3938, %v3937
    %v3983 = vpack.c.b16 %v3940, %v3939
    %v3984 = vpack.c.b16 %v3942, %v3941
    %v3985 = vpack.c.b16 %v3944, %v3943
    %v3986 = vpack.c.b16 %v3946, %v3945
    %v3987 = vpack.c.b16 %v3948, %v3947
    %v3988 = vpack.c.b16 %v3950, %v3949
    %v3989 = vpack.c.b16 %v3952, %v3951
    %v3990 = vpack.c.b16 %v3954, %v3953
    %v3991 = vpack.c.b16 %v3956, %v3955
    %v3992 = vpack.c.b16 %v3958, %v3957
    %v3993 = vpack.c.b16 %v3960, %v3959
    %v3994 = vpack.c.b16 %v3962, %v3961
    %4027 = vmatprep.subr.bf16.mxu0 0
    %4028 = vmatpush1.bf16.msra.mxu0 %v3963
    %4029 = vmatprep.subr.bf16.mxu0 0
    %4030 = vmatpush1.bf16.msra.mxu0 %v3964
    %4031 = vmatprep.subr.bf16.mxu0 0
    %4032 = vmatpush1.bf16.msra.mxu0 %v3965
    %4033 = vmatprep.subr.bf16.mxu0 0
    %4034 = vmatpush1.bf16.msra.mxu0 %v3966
    %4035 = vmatprep.subr.bf16.mxu0 0
    %4036 = vmatpush1.bf16.msra.mxu0 %v3967
    %4037 = vmatprep.subr.bf16.mxu0 0
    %4038 = vmatpush1.bf16.msra.mxu0 %v3968
    %4039 = vmatprep.subr.bf16.mxu0 0
    %4040 = vmatpush1.bf16.msra.mxu0 %v3969
    %4041 = vmatprep.subr.bf16.mxu0 0
    %4042 = vmatpush1.bf16.msra.mxu0 %v3970
    %4043 = vmatprep.subr.bf16.mxu0 0
    %4044 = vmatpush1.bf16.msra.mxu0 %v3971
    %4045 = vmatprep.subr.bf16.mxu0 0
    %4046 = vmatpush1.bf16.msra.mxu0 %v3972
    %4047 = vmatprep.subr.bf16.mxu0 0
    %4048 = vmatpush1.bf16.msra.mxu0 %v3973
    %4049 = vmatprep.subr.bf16.mxu0 0
    %4050 = vmatpush1.bf16.msra.mxu0 %v3974
    %4051 = vmatprep.subr.bf16.mxu0 0
    %4052 = vmatpush1.bf16.msra.mxu0 %v3975
    %4053 = vmatprep.subr.bf16.mxu0 0
    %4054 = vmatpush1.bf16.msra.mxu0 %v3976
    %4055 = vmatprep.subr.bf16.mxu0 0
    %4056 = vmatpush1.bf16.msra.mxu0 %v3977
    %4057 = vmatprep.subr.bf16.mxu0 0
    %4058 = vmatpush1.bf16.msra.mxu0 %v3978
    %4059 = vmatprep.mubr.bf16.mxu0 %v3757
    %4060 = vmatmul.mubr.bf16.gmra.mrb[0].mxu0 %v3756
    %v4061 = vpop.f32.mrb[0].mxu0
    %v4062 = vadd.f32 %v3833, %v4061
    %v4063 = vpop.f32.mrb[0].mxu0
    %v4064 = vpop.f32.mrb[0].mxu0
    %v4065 = vadd.f32 %v3833, %v4064
    %v4066 = vpop.f32.mrb[0].mxu0
    %4067 = vmatprep.mubr.bf16.mxu0 %v3761
    %4068 = vmatmul.mubr.bf16.gmra.mrb[0].mxu0 %v3760
    %v4069 = vpop.f32.mrb[0].mxu0
    %v4070 = vadd.f32 %v3833, %v4069
    %v4071 = vpop.f32.mrb[0].mxu0
    %v4072 = vpop.f32.mrb[0].mxu0
    %v4073 = vadd.f32 %v3833, %v4072
    %v4074 = vpop.f32.mrb[0].mxu0
    %4075 = vdwg.mxu0
    %4076 = vmatprep.subr.bf16.mxu0 0
    %4077 = vmatpush1.bf16.msra.mxu0 %v3979
    %4078 = vmatprep.subr.bf16.mxu0 0
    %4079 = vmatpush1.bf16.msra.mxu0 %v3980
    %4080 = vmatprep.subr.bf16.mxu0 0
    %4081 = vmatpush1.bf16.msra.mxu0 %v3981
    %4082 = vmatprep.subr.bf16.mxu0 0
    %4083 = vmatpush1.bf16.msra.mxu0 %v3982
    %4084 = vmatprep.subr.bf16.mxu0 0
    %4085 = vmatpush1.bf16.msra.mxu0 %v3983
    %4086 = vmatprep.subr.bf16.mxu0 0
    %4087 = vmatpush1.bf16.msra.mxu0 %v3984
    %4088 = vmatprep.subr.bf16.mxu0 0
    %4089 = vmatpush1.bf16.msra.mxu0 %v3985
    %4090 = vmatprep.subr.bf16.mxu0 0
    %4091 = vmatpush1.bf16.msra.mxu0 %v3986
    %4092 = vmatprep.subr.bf16.mxu0 0
    %4093 = vmatpush1.bf16.msra.mxu0 %v3987
    %4094 = vmatprep.subr.bf16.mxu0 0
    %4095 = vmatpush1.bf16.msra.mxu0 %v3988
    %4096 = vmatprep.subr.bf16.mxu0 0
    %4097 = vmatpush1.bf16.msra.mxu0 %v3989
    %4098 = vmatprep.subr.bf16.mxu0 0
    %4099 = vmatpush1.bf16.msra.mxu0 %v3990
    %4100 = vmatprep.subr.bf16.mxu0 0
    %4101 = vmatpush1.bf16.msra.mxu0 %v3991
    %4102 = vmatprep.subr.bf16.mxu0 0
    %4103 = vmatpush1.bf16.msra.mxu0 %v3992
    %4104 = vmatprep.subr.bf16.mxu0 0
    %4105 = vmatpush1.bf16.msra.mxu0 %v3993
    %4106 = vmatprep.subr.bf16.mxu0 0
    %4107 = vmatpush1.bf16.msra.mxu0 %v3994
    %4108 = vmatprep.mubr.bf16.mxu0 %v3759
    %4109 = vmatmul.mubr.bf16.gmra.mrb[0].mxu0 %v3758
    %v4110 = vpop.f32.mrb[0].mxu0
    %v4111 = vadd.f32 %v4062, %v4110
    %v4112 = vpop.f32.mrb[0].mxu0
    %v4113 = vpop.f32.mrb[0].mxu0
    %v4114 = vadd.f32 %v4065, %v4113
    %v4115 = vpop.f32.mrb[0].mxu0
    %4116 = vmatprep.mubr.bf16.mxu0 %v3763
    %4117 = vmatmul.mubr.bf16.gmra.mrb[0].mxu0 %v3762
    %v4118 = vpop.f32.mrb[0].mxu0
    %v4119 = vadd.f32 %v4070, %v4118
    %v4120 = vpop.f32.mrb[0].mxu0
    %v4121 = vpop.f32.mrb[0].mxu0
    %v4122 = vadd.f32 %v4073, %v4121
    %v4123 = vpop.f32.mrb[0].mxu0
    %4124 = vdwg.mxu0
    %v4125 = vadd.f32 %v3414, %v4111
    %v4126 = vadd.f32 %v3415, %v4114
    %v4127 = vadd.f32 %v3416, %v4119
    %v4128 = vadd.f32 %v3417, %v4122
    %v4129 = vld [vmem:[%s15] sm:$0x1]
    %v4130 = vld [vmem:[%s16] sm:$0x1]
    %4131 = vadd.xlane.f32.xlu0 %v4125
    %v4132 = vpop.xlane.xlu0 %4131
    %4133 = vadd.xlane.f32.xlu0 %v4126
    %v4134 = vpop.xlane.xlu0 %4133
    %4135 = vadd.xlane.f32.xlu0 %v4127
    %v4136 = vpop.xlane.xlu0 %4135
    %4137 = vadd.xlane.f32.xlu0 %v4128
    %v4138 = vpop.xlane.xlu0 %4137
    %v4139 = vmul.f32 %v4132, %v3328
    %v4140 = vmul.f32 %v4134, %v3328
    %v4141 = vmul.f32 %v4136, %v3328
    %v4142 = vmul.f32 %v4138, %v3328
    %v4143 = vsub.f32 %v4125, %v4139
    %v4144 = vsub.f32 %v4126, %v4140
    %v4145 = vsub.f32 %v4127, %v4141
    %v4146 = vsub.f32 %v4128, %v4142
    %v4147 = vmul.f32 %v4143, %v4143
    %v4148 = vmul.f32 %v4144, %v4144
    %v4149 = vmul.f32 %v4145, %v4145
    %v4150 = vmul.f32 %v4146, %v4146
    %4151 = vadd.xlane.f32.xlu0 %v4147
    %v4152 = vpop.xlane.xlu0 %4151
    %4153 = vadd.xlane.f32.xlu0 %v4148
    %v4154 = vpop.xlane.xlu0 %4153
    %4155 = vadd.xlane.f32.xlu0 %v4149
    %v4156 = vpop.xlane.xlu0 %4155
    %4157 = vadd.xlane.f32.xlu0 %v4150
    %v4158 = vpop.xlane.xlu0 %4157
    %v4159 = vmul.f32 %v4152, %v3349
    %v4160 = vmul.f32 %v4154, %v3349
    %v4161 = vmul.f32 %v4156, %v3349
    %v4162 = vmul.f32 %v4158, %v3349
    %v4163 = vrsqrt.pop %v4159
    %v4164 = vmul.f32 %v4159, %v4163
    %vm4165 = vcmp.eq.f32.partialorder %v4159, inf
    %v4166 = vsel %vm4165, %v4159, %v4164
    %vm4167 = vcmp.eq.f32.partialorder %v4159, 0.0
    %v4168 = vand.u32 %v4159, 2147483648
    %v4169 = vsel %vm4167, %v4168, %v4166
    %v4170 = vrsqrt.pop %v4160
    %v4171 = vmul.f32 %v4160, %v4170
    %vm4172 = vcmp.eq.f32.partialorder %v4160, inf
    %v4173 = vsel %vm4172, %v4160, %v4171
    %vm4174 = vcmp.eq.f32.partialorder %v4160, 0.0
    %v4175 = vand.u32 %v4160, 2147483648
    %v4176 = vsel %vm4174, %v4175, %v4173
    %v4177 = vrsqrt.pop %v4161
    %v4178 = vmul.f32 %v4161, %v4177
    %vm4179 = vcmp.eq.f32.partialorder %v4161, inf
    %v4180 = vsel %vm4179, %v4161, %v4178
    %vm4181 = vcmp.eq.f32.partialorder %v4161, 0.0
    %v4182 = vand.u32 %v4161, 2147483648
    %v4183 = vsel %vm4181, %v4182, %v4180
    %v4184 = vrsqrt.pop %v4162
    %v4185 = vmul.f32 %v4162, %v4184
    %vm4186 = vcmp.eq.f32.partialorder %v4162, inf
    %v4187 = vsel %vm4186, %v4162, %v4185
    %vm4188 = vcmp.eq.f32.partialorder %v4162, 0.0
    %v4189 = vand.u32 %v4162, 2147483648
    %v4190 = vsel %vm4188, %v4189, %v4187
    %v4191 = vadd.f32 %v4169, 1e-06
    %v4192 = vadd.f32 %v4176, 1e-06
    %v4193 = vadd.f32 %v4183, 1e-06
    %v4194 = vadd.f32 %v4190, 1e-06
    %v4195 = vrcp.pop %v4191
    %v4196 = vmul.f32 1.0, %v4195
    %v4197 = vrcp.pop %v4192
    %v4198 = vmul.f32 1.0, %v4197
    %v4199 = vrcp.pop %v4193
    %v4200 = vmul.f32 1.0, %v4199
    %v4201 = vrcp.pop %v4194
    %v4202 = vmul.f32 1.0, %v4201
    %v4204 = vlaneseq
    %v4205 = vshrl.u32 %v4204, 7
    %v4206 = vsub.s32 0, %v4205
    %v4207 = vrot.slane %v4129, %v4206
    %v4209 = vmul.f32 %v4207, %v4143
    %v4210 = vmul.f32 %v4207, %v4144
    %v4211 = vmul.f32 %v4207, %v4145
    %v4212 = vmul.f32 %v4207, %v4146
    %v4213 = vmul.f32 %v4209, %v4196
    %v4214 = vmul.f32 %v4210, %v4198
    %v4215 = vmul.f32 %v4211, %v4200
    %v4216 = vmul.f32 %v4212, %v4202
    %v4218 = vlaneseq
    %v4219 = vshrl.u32 %v4218, 7
    %v4220 = vsub.s32 0, %v4219
    %v4221 = vrot.slane %v4130, %v4220
    %v4223 = vadd.f32 %v4213, %v4221
    %v4224 = vadd.f32 %v4214, %v4221
    %v4225 = vadd.f32 %v4215, %v4221
    %v4226 = vadd.f32 %v4216, %v4221
    %4227 = vst [vmem:[#allocation14] sm:$0xff] %v4223
    %4228 = vst [vmem:[#allocation14 + $0x8] sm:$0xff] %v4224
    %s4229 = scalar_lea.vmem [#allocation14], 16
    %4230 = vst [vmem:[%s4229] sm:$0xff] %v4225
    %4231 = vst [vmem:[%s4229 + $0x8] sm:$0xff] %v4226
    // Predicated region
    $region98: #{tpu_custom_call.1} parent=1 // pred_check
      _
    $region99: #{tpu_custom_call.1} parent=1 // pred_check_branch
      %4233 = sbr.rel (0) target = $region101
    $region100: #{tpu_custom_call.1} parent=1 // pred_region
      %s4235 = ssub.s32 512, 512
      %4236 = vsyncadd [#allocation4], %s4235
      %s4237 = sshll.u32 [#allocation14], 4
      %s4238 = int_to_ptr.vmem [resolvable:$true] %s4237
      %4243 = dma.vmem_to_hbm [thread:$0]  %s4238, 512, %s17, [#allocation4], 128, 128, 8
    $region101: #{tpu_custom_call.1} parent=1 // pred_fallthru
      _
    // Predicated region
    $region102: #{tpu_custom_call.1} parent=1 // pred_check
      _
    $region103: #{tpu_custom_call.1} parent=1 // pred_check_branch
      %4245 = sbr.rel (0) target = $region105
    $region104: #{tpu_custom_call.1} parent=1 // pred_region
      %4246 = dma.done [#allocation4], 512
    $region105: #{tpu_custom_call.1} parent=1 // pred_fallthru
      _
    %4247 = vsyncpa [#allocation3], 1
    %4248 = vsyncpa [#allocation6], 1
    %4249 = vsyncpa [#allocation9], 1
    %4250 = vsyncpa [#allocation12], 1
    %4251 = vsyncpa [#allocation4], 1

</llo_original>
